<compile_context>
chip_gen: v5e
topology: v5e:2x2
jax: 0.10.0
libtpu: 0.0.40
codegen_flags: <defaults>
</compile_context>

<pallas_src>
import functools

import jax
import jax.numpy as jnp
from jax.experimental import pallas as pl
from jax.experimental.pallas import tpu as pltpu


# ----------------------------- model config ---------------------------------
DENSE_DIM = 8
ONE_HOT_FEA_LIST = [10, 10]          # vocab sizes of one-hot features
ONE_HOT_EMB_DIM = 8
MULTI_HOT_FEA_LIST = [12]            # vocab sizes of multi-hot features
MULTI_HOT_EMB_DIM = 8
MULTI_HOT_WIDTH = 3                  # indices per multi-hot feature

IN_DIM = (DENSE_DIM
          + len(ONE_HOT_FEA_LIST) * ONE_HOT_EMB_DIM
          + len(MULTI_HOT_FEA_LIST) * MULTI_HOT_EMB_DIM)        # 32
STACK_VOCAB = sum(ONE_HOT_FEA_LIST) + sum(MULTI_HOT_FEA_LIST)   # 32
CROSS_ORDER = 3
HIDDEN_DIMS = [64, 32]
STACKED = False


# ------------------------------ Pallas kernel --------------------------------
def dcn2_kernel(dense_ref, ind_ref,                  # batch-tiled, lane-folded
                p_ref,                               # stacked emb projection
                wc_ref, bc_ref,                      # cross net (block-diag)
                wd0_ref, bd0_ref, wd1_ref, bd1_ref,  # deep net  (block-diag)
                whc_ref, whd_ref, bh_ref,            # head selectors (N=128)
                out_ref,
                *, cross_order):
    # ---- x0 (folded): exact f32 dense slab + fused bf16 embedding matmul.
    # ind holds exact 0/1 one-hot values and 0..3 multi-hot counts (exact in
    # bf16); p_ref is the bf16 block-diagonal stacked table projection.
    x0 = dense_ref[...] + jnp.dot(ind_ref[...], p_ref[...],
                                  preferred_element_type=jnp.float32)
    x0_bf = x0.astype(jnp.bfloat16)                  # hoisted, reused twice

    # ---- CrossNet: xi_{l+1} = x0 * (xi_l @ Wc_l + bc_l) + xi_l
    # bf16 MXU operands, f32 accumulation; element-wise update stays f32.
    xi = x0
    for l in range(cross_order):
        xb = x0_bf if l == 0 else xi.astype(jnp.bfloat16)
        lin = jnp.dot(xb, wc_ref[l],
                      preferred_element_type=jnp.float32) + bc_ref[l]
        xi = x0 * lin + xi

    # ---- DeepNet: two Linear + ReLU layers on x0 (unstacked variant) ----
    h = jnp.maximum(
        jnp.dot(x0_bf, wd0_ref[...],
                preferred_element_type=jnp.float32) + bd0_ref[...], 0.0)
    h = jnp.maximum(
        jnp.dot(h.astype(jnp.bfloat16), wd1_ref[...],
                preferred_element_type=jnp.float32) + bd1_ref[...], 0.0)

    # ---- head: Linear over concat([xi, h]) + Sigmoid.  Whc/Whd put group g's
    # weights into output lane g (zeros elsewhere), so the logits of the fold
    # land in lanes 0:fold of a 128-wide, lane-dense output slab.
    logit = (jnp.dot(xi.astype(jnp.bfloat16), whc_ref[...],
                     preferred_element_type=jnp.float32)
             + jnp.dot(h.astype(jnp.bfloat16), whd_ref[...],
                       preferred_element_type=jnp.float32)
             + bh_ref[...])                                       # (tbg, 128)
    out_ref[...] = jax.nn.sigmoid(logit)


# --------------------------- parameter creation ------------------------------
def init_params(key):
    ks = jax.random.split(key, 16)
    s = 0.1
    p = {}
    # CrossNet: cross_order linears (D, D), pre-transposed (in, out).
    p["wc"] = s * jax.random.normal(ks[0], (CROSS_ORDER, IN_DIM, IN_DIM),
                                    jnp.float32)
    p["bc"] = s * jax.random.normal(ks[1], (CROSS_ORDER, 1, IN_DIM), jnp.float32)
    # DeepNet linears (pre-transposed (in, out)).
    p["wd0"] = s * jax.random.normal(ks[2], (IN_DIM, HIDDEN_DIMS[0]), jnp.float32)
    p["bd0"] = s * jax.random.normal(ks[3], (1, HIDDEN_DIMS[0]), jnp.float32)
    p["wd1"] = s * jax.random.normal(ks[4], (HIDDEN_DIMS[0], HIDDEN_DIMS[1]),
                                     jnp.float32)
    p["bd1"] = s * jax.random.normal(ks[5], (1, HIDDEN_DIMS[1]), jnp.float32)
    # Final head Linear(IN_DIM + HIDDEN_DIMS[-1], 1), split over the concat.
    p["wfc"] = s * jax.random.normal(ks[6], (1, IN_DIM), jnp.float32)
    p["wfd"] = s * jax.random.normal(ks[7], (1, HIDDEN_DIMS[1]), jnp.float32)
    p["bf"] = s * jax.random.normal(ks[8], (1, 1), jnp.float32)
    # Embedding tables (f32; bf16-cast when folded for the kernel).
    p["one_hot_tables"] = [
        s * jax.random.normal(ks[9 + i], (v, ONE_HOT_EMB_DIM), jnp.float32)
        for i, v in enumerate(ONE_HOT_FEA_LIST)
    ]
    p["multi_hot_tables"] = [
        s * jax.random.normal(ks[12 + i], (v, MULTI_HOT_EMB_DIM), jnp.float32)
        for i, v in enumerate(MULTI_HOT_FEA_LIST)
    ]
    return p


def _block_diag(w, fold):
    """(din, dout) -> block-diagonal (fold*din, fold*dout)."""
    return jnp.kron(jnp.eye(fold, dtype=w.dtype), w)


def build_folded_weights(params, fold):
    """Fold every weight for the lane-folded layout (done once, outside the
    kernel; could be cached across calls)."""
    # Stacked embedding projection (STACK_VOCAB, IN_DIM): each table's rows are
    # placed at its vocab offset and its IN_DIM column range.
    proj = jnp.zeros((STACK_VOCAB, IN_DIM), jnp.float32)
    row, col = 0, DENSE_DIM
    for v, tbl in zip(ONE_HOT_FEA_LIST, params["one_hot_tables"]):
        proj = proj.at[row:row + v, col:col + ONE_HOT_EMB_DIM].set(tbl)
        row += v
        col += ONE_HOT_EMB_DIM
    for v, tbl in zip(MULTI_HOT_FEA_LIST, params["multi_hot_tables"]):
        proj = proj.at[row:row + v, col:col + MULTI_HOT_EMB_DIM].set(tbl)
        row += v
        col += MULTI_HOT_EMB_DIM

    w = {}
    w["p"] = _block_diag(proj, fold).astype(jnp.bfloat16)
    w["wc"] = jnp.stack([_block_diag(params["wc"][l], fold)
                         for l in range(CROSS_ORDER)]).astype(jnp.bfloat16)
    w["bc"] = jnp.tile(params["bc"], (1, 1, fold))               # (L,1,fold*D)
    w["wd0"] = _block_diag(params["wd0"], fold).astype(jnp.bfloat16)
    w["bd0"] = jnp.tile(params["bd0"], (1, fold))
    w["wd1"] = _block_diag(params["wd1"], fold).astype(jnp.bfloat16)
    w["bd1"] = jnp.tile(params["bd1"], (1, fold))
    # Head selectors: column g holds the final-linear weights of fold group g;
    # remaining 128-fold lanes are zero so the output store is a full vreg.
    whc = jnp.zeros((fold * IN_DIM, 128), jnp.float32)
    whd = jnp.zeros((fold * HIDDEN_DIMS[-1], 128), jnp.float32)
    for g in range(fold):
        whc = whc.at[g * IN_DIM:(g + 1) * IN_DIM, g].set(params["wfc"][0])
        whd = whd.at[g * HIDDEN_DIMS[-1]:(g + 1) * HIDDEN_DIMS[-1], g].set(
            params["wfd"][0])
    w["whc"] = whc.astype(jnp.bfloat16)
    w["whd"] = whd.astype(jnp.bfloat16)
    w["bh"] = jnp.zeros((1, 128), jnp.float32).at[0, :fold].set(
        params["bf"][0, 0])
    return w


def build_indicator(one_hot_x, multi_hot_x):
    """Stacked one-hot / sum-pooled-count indicator, width STACK_VOCAB.
    Values are exact 0/1 and small integer counts (exact in bf16)."""
    parts = []
    for i, v in enumerate(ONE_HOT_FEA_LIST):
        parts.append(jax.nn.one_hot(one_hot_x[:, i], v, dtype=jnp.float32))
    for i, v in enumerate(MULTI_HOT_FEA_LIST):
        oh = jax.nn.one_hot(multi_hot_x[:, i, :], v, dtype=jnp.float32)
        parts.append(jnp.sum(oh, axis=1))        # sum-pooled multi-hot counts
    return jnp.concatenate(parts, axis=1)        # (B, STACK_VOCAB)


# ------------------------------ forward wrapper -------------------------------
# TODO(synk): EmbeddingLayer source not provided; assumed semantics are
# per-feature lookup for one-hot ids and sum-pooled lookup for multi-hot ids,
# concatenated along the feature axis (cat_emb=True).
def dcn2_forward(dense_x, one_hot_x, multi_hot_x, params, *,
                 fold=8, block_batch=2048):
    """fold=8 matches the 256-wide v6e/v7x MXU (2 full tiles on v5e); use
    fold=4 on v5e to fill its 128-wide MXU exactly."""
    b = dense_x.shape[0]
    gran = 16 * fold                           # bf16 sublane alignment * fold
    tb = max(gran, (block_batch // gran) * gran)
    num_blocks = pl.cdiv(b, tb)
    padded = num_blocks * tb
    tbg = tb // fold                           # folded rows per grid step

    if padded != b:
        pad = padded - b
        dense_x = jnp.pad(dense_x, ((0, pad), (0, 0)))
        one_hot_x = jnp.pad(one_hot_x, ((0, pad), (0, 0)))
        multi_hot_x = jnp.pad(multi_hot_x, ((0, pad), (0, 0), (0, 0)))

    # Lane-fold the batch-tiled activations.  Row-major (B, C) -> (B/fold,
    # fold*C) is a free reshape: fold group g of folded row q == batch row
    # q*fold + g, occupying lanes [g*C, (g+1)*C).
    dense_f = jnp.pad(dense_x, ((0, 0), (0, IN_DIM - DENSE_DIM))).reshape(
        padded // fold, fold * IN_DIM)                              # f32
    ind_f = build_indicator(one_hot_x, multi_hot_x).astype(jnp.bfloat16
        ).reshape(padded // fold, fold * STACK_VOCAB)               # bf16

    w = build_folded_weights(params, fold)

    kernel = functools.partial(dcn2_kernel, cross_order=CROSS_ORDER)
    bmap = lambda i: (i, 0)        # batch-tiled, folded activations
    wmap2 = lambda i: (0, 0)       # VMEM-resident weights (2-D)
    wmap3 = lambda i: (0, 0, 0)    # VMEM-resident weights (3-D)

    in_specs = [
        pl.BlockSpec((tbg, fold * IN_DIM), bmap),
        pl.BlockSpec((tbg, fold * STACK_VOCAB), bmap),
        pl.BlockSpec(w["p"].shape, wmap2),
        pl.BlockSpec(w["wc"].shape, wmap3),
        pl.BlockSpec(w["bc"].shape, wmap3),
        pl.BlockSpec(w["wd0"].shape, wmap2),
        pl.BlockSpec(w["bd0"].shape, wmap2),
        pl.BlockSpec(w["wd1"].shape, wmap2),
        pl.BlockSpec(w["bd1"].shape, wmap2),
        pl.BlockSpec(w["whc"].shape, wmap2),
        pl.BlockSpec(w["whd"].shape, wmap2),
        pl.BlockSpec(w["bh"].shape, wmap2),
    ]

    out = pl.pallas_call(
        kernel,
        # Lane-dense output slab: lanes 0:fold hold the fold logits of each
        # folded row; the (B, 1) view exists only at the wrapper level.
        out_shape=jax.ShapeDtypeStruct((padded // fold, 128), jnp.float32),
        grid=(num_blocks,),
        in_specs=in_specs,
        out_specs=pl.BlockSpec((tbg, 128), bmap),
        compiler_params=pltpu.CompilerParams(
            # batch axis is embarrassingly parallel -> use v7x's 2nd TC.
            dimension_semantics=("parallel",)),
    )(dense_f, ind_f, w["p"], w["wc"], w["bc"],
      w["wd0"], w["bd0"], w["wd1"], w["bd1"],
      w["whc"], w["whd"], w["bh"])

    return out[:, :fold].reshape(padded, 1)[:b]


# ------------------------------- reference -----------------------------------
def dcn2_reference(dense_x, one_hot_x, multi_hot_x, params, *,
                   matmul_dtype=jnp.float32):
    cast = lambda a: a.astype(matmul_dtype)

    embs = []
    for i, tbl in enumerate(params["one_hot_tables"]):
        t = cast(tbl).astype(jnp.float32)
        embs.append(jnp.take(t, one_hot_x[:, i], axis=0))              # (B, E)
    for i, tbl in enumerate(params["multi_hot_tables"]):
        t = cast(tbl).astype(jnp.float32)
        embs.append(jnp.sum(jnp.take(t, multi_hot_x[:, i, :], axis=0),
                            axis=1))                                    # (B, E)
    x0 = jnp.concatenate([dense_x] + embs, axis=1)

    def mm(a, wt):
        return jnp.dot(cast(a), cast(wt), preferred_element_type=jnp.float32)

    xi = x0
    for l in range(CROSS_ORDER):
        xi = x0 * (mm(xi, params["wc"][l]) + params["bc"][l]) + xi
    h = jax.nn.relu(mm(x0, params["wd0"]) + params["bd0"])
    h = jax.nn.relu(mm(h, params["wd1"]) + params["bd1"])
    logit = (mm(xi, params["wfc"].T) + mm(h, params["wfd"].T) + params["bf"])
    return jax.nn.sigmoid(logit)


# --------------------------------- main ---------------------------------------
if __name__ == "__main__":
    key = jax.random.PRNGKey(0)
    kp, kd, k1, k2 = jax.random.split(key, 4)

    BATCH = 1024
    FOLD = 8            # 256-wide folded lanes (use 4 on v5e)
    BLOCK_BATCH = 256   # 4 grid steps at BATCH=1024 (>=2 per TC on v7x)

    params = init_params(kp)
    dense_x = jax.random.normal(kd, (BATCH, DENSE_DIM), jnp.float32)
    one_hot_x = jax.random.randint(
        k1, (BATCH, len(ONE_HOT_FEA_LIST)), 0, min(ONE_HOT_FEA_LIST)
    ).astype(jnp.int32)
    multi_hot_x = jax.random.randint(
        k2, (BATCH, len(MULTI_HOT_FEA_LIST), MULTI_HOT_WIDTH),
        0, min(MULTI_HOT_FEA_LIST)
    ).astype(jnp.int32)

    out = dcn2_forward(dense_x, one_hot_x, multi_hot_x, params,
                       fold=FOLD, block_batch=BLOCK_BATCH)
    out = jax.block_until_ready(out)

    # matched-precision reference (bf16 matmul operands, f32 accumulation)
    ref_bf16 = dcn2_reference(dense_x, one_hot_x, multi_hot_x, params,
                              matmul_dtype=jnp.bfloat16)
    # pure-f32-matmul reference (loose check; documents bf16 MXU error)
    ref_f32 = dcn2_reference(dense_x, one_hot_x, multi_hot_x, params,
                             matmul_dtype=jnp.float32)

    assert out.shape == (BATCH, 1)
    assert jnp.allclose(out, ref_bf16, atol=2e-3, rtol=2e-3), float(
        jnp.max(jnp.abs(out - ref_bf16)))
    assert jnp.allclose(out, ref_f32, atol=5e-2, rtol=5e-2)

    print("KERNEL_OK")
</pallas_src>

<mosaic_0001>
module attributes {stable_mosaic.version = 11 : i64} {
  func.func @dcn2_kernel(%arg0: i32, %arg1: memref<32x256xf32, #tpu.memory_space<vmem>>, %arg2: memref<32x256xbf16, #tpu.memory_space<vmem>>, %arg3: memref<256x256xbf16, #tpu.memory_space<vmem>>, %arg4: memref<3x256x256xbf16, #tpu.memory_space<vmem>>, %arg5: memref<3x1x256xf32, #tpu.memory_space<vmem>>, %arg6: memref<256x512xbf16, #tpu.memory_space<vmem>>, %arg7: memref<1x512xf32, #tpu.memory_space<vmem>>, %arg8: memref<512x256xbf16, #tpu.memory_space<vmem>>, %arg9: memref<1x256xf32, #tpu.memory_space<vmem>>, %arg10: memref<256x128xbf16, #tpu.memory_space<vmem>>, %arg11: memref<256x128xbf16, #tpu.memory_space<vmem>>, %arg12: memref<1x128xf32, #tpu.memory_space<vmem>>, %arg13: memref<32x128xf32, #tpu.memory_space<vmem>>) attributes {dimension_semantics = [#tpu.dimension_semantics<parallel>], iteration_bounds = array<i64: 4>, scalar_prefetch = 0 : i64, scratch_operands = 0 : i64, tpu.core_type = #tpu.core_type<tc>, window_params = [{transform_indices = @transform_0, window_bounds = array<i64: 32, 256>}, {transform_indices = @transform_1, window_bounds = array<i64: 32, 256>}, {pipeline_mode = #tpu.pipeline_mode<synchronous>, transform_indices = @transform_2, window_bounds = array<i64: 256, 256>}, {pipeline_mode = #tpu.pipeline_mode<synchronous>, transform_indices = @transform_3, window_bounds = array<i64: 3, 256, 256>}, {pipeline_mode = #tpu.pipeline_mode<synchronous>, transform_indices = @transform_4, window_bounds = array<i64: 3, 1, 256>}, {pipeline_mode = #tpu.pipeline_mode<synchronous>, transform_indices = @transform_5, window_bounds = array<i64: 256, 512>}, {pipeline_mode = #tpu.pipeline_mode<synchronous>, transform_indices = @transform_6, window_bounds = array<i64: 1, 512>}, {pipeline_mode = #tpu.pipeline_mode<synchronous>, transform_indices = @transform_7, window_bounds = array<i64: 512, 256>}, {pipeline_mode = #tpu.pipeline_mode<synchronous>, transform_indices = @transform_8, window_bounds = array<i64: 1, 256>}, {pipeline_mode = #tpu.pipeline_mode<synchronous>, transform_indices = @transform_9, window_bounds = array<i64: 256, 128>}, {pipeline_mode = #tpu.pipeline_mode<synchronous>, transform_indices = @transform_10, window_bounds = array<i64: 256, 128>}, {pipeline_mode = #tpu.pipeline_mode<synchronous>, transform_indices = @transform_11, window_bounds = array<i64: 1, 128>}, {transform_indices = @transform_12, window_bounds = array<i64: 32, 128>}]} {
    %c0 = arith.constant 0 : index
    %c0_0 = arith.constant 0 : index
    %0 = vector.load %arg1[%c0, %c0_0] : memref<32x256xf32, #tpu.memory_space<vmem>>, vector<32x256xf32>
    %c0_1 = arith.constant 0 : index
    %c0_2 = arith.constant 0 : index
    %1 = vector.load %arg2[%c0_1, %c0_2] : memref<32x256xbf16, #tpu.memory_space<vmem>>, vector<32x256xbf16>
    %c0_3 = arith.constant 0 : index
    %c0_4 = arith.constant 0 : index
    %2 = vector.load %arg3[%c0_3, %c0_4] : memref<256x256xbf16, #tpu.memory_space<vmem>>, vector<256x256xbf16>
    %cst = arith.constant dense<0.000000e+00> : vector<32x256xf32>
    %3 = tpu.matmul %1, %2, %cst {dimension_numbers = #tpu.dot_dimension_numbers<[1], [0], [0], [1], [0, 0, 1, 1], [], []>} : vector<32x256xbf16>, vector<256x256xbf16>, vector<32x256xf32> -> vector<32x256xf32>
    %4 = arith.addf %0, %3 : vector<32x256xf32>
    %5 = arith.truncf %4 : vector<32x256xf32> to vector<32x256xbf16>
    %c0_5 = arith.constant 0 : index
    %c0_6 = arith.constant 0 : index
    %c0_7 = arith.constant 0 : index
    %6 = vector.load %arg4[%c0_5, %c0_6, %c0_7] : memref<3x256x256xbf16, #tpu.memory_space<vmem>>, vector<1x256x256xbf16>
    %7 = vector.shape_cast %6 : vector<1x256x256xbf16> to vector<256x256xbf16>
    %cst_8 = arith.constant dense<0.000000e+00> : vector<32x256xf32>
    %8 = tpu.matmul %5, %7, %cst_8 {dimension_numbers = #tpu.dot_dimension_numbers<[1], [0], [0], [1], [0, 0, 1, 1], [], []>} : vector<32x256xbf16>, vector<256x256xbf16>, vector<32x256xf32> -> vector<32x256xf32>
    %c0_9 = arith.constant 0 : index
    %c0_10 = arith.constant 0 : index
    %c0_11 = arith.constant 0 : index
    %9 = vector.load %arg5[%c0_9, %c0_10, %c0_11] : memref<3x1x256xf32, #tpu.memory_space<vmem>>, vector<1x1x256xf32>
    %10 = vector.shape_cast %9 : vector<1x1x256xf32> to vector<1x256xf32>
    %11 = vector.broadcast %10 : vector<1x256xf32> to vector<32x256xf32>
    %12 = arith.addf %8, %11 : vector<32x256xf32>
    %13 = arith.mulf %4, %12 : vector<32x256xf32>
    %14 = arith.addf %13, %4 : vector<32x256xf32>
    %15 = arith.truncf %14 : vector<32x256xf32> to vector<32x256xbf16>
    %c1 = arith.constant 1 : index
    %c0_12 = arith.constant 0 : index
    %c0_13 = arith.constant 0 : index
    %16 = vector.load %arg4[%c1, %c0_12, %c0_13] : memref<3x256x256xbf16, #tpu.memory_space<vmem>>, vector<1x256x256xbf16>
    %17 = vector.shape_cast %16 : vector<1x256x256xbf16> to vector<256x256xbf16>
    %cst_14 = arith.constant dense<0.000000e+00> : vector<32x256xf32>
    %18 = tpu.matmul %15, %17, %cst_14 {dimension_numbers = #tpu.dot_dimension_numbers<[1], [0], [0], [1], [0, 0, 1, 1], [], []>} : vector<32x256xbf16>, vector<256x256xbf16>, vector<32x256xf32> -> vector<32x256xf32>
    %c1_15 = arith.constant 1 : index
    %c0_16 = arith.constant 0 : index
    %c0_17 = arith.constant 0 : index
    %19 = vector.load %arg5[%c1_15, %c0_16, %c0_17] : memref<3x1x256xf32, #tpu.memory_space<vmem>>, vector<1x1x256xf32>
    %20 = vector.shape_cast %19 : vector<1x1x256xf32> to vector<1x256xf32>
    %21 = vector.broadcast %20 : vector<1x256xf32> to vector<32x256xf32>
    %22 = arith.addf %18, %21 : vector<32x256xf32>
    %23 = arith.mulf %4, %22 : vector<32x256xf32>
    %24 = arith.addf %23, %14 : vector<32x256xf32>
    %25 = arith.truncf %24 : vector<32x256xf32> to vector<32x256xbf16>
    %c2 = arith.constant 2 : index
    %c0_18 = arith.constant 0 : index
    %c0_19 = arith.constant 0 : index
    %26 = vector.load %arg4[%c2, %c0_18, %c0_19] : memref<3x256x256xbf16, #tpu.memory_space<vmem>>, vector<1x256x256xbf16>
    %27 = vector.shape_cast %26 : vector<1x256x256xbf16> to vector<256x256xbf16>
    %cst_20 = arith.constant dense<0.000000e+00> : vector<32x256xf32>
    %28 = tpu.matmul %25, %27, %cst_20 {dimension_numbers = #tpu.dot_dimension_numbers<[1], [0], [0], [1], [0, 0, 1, 1], [], []>} : vector<32x256xbf16>, vector<256x256xbf16>, vector<32x256xf32> -> vector<32x256xf32>
    %c2_21 = arith.constant 2 : index
    %c0_22 = arith.constant 0 : index
    %c0_23 = arith.constant 0 : index
    %29 = vector.load %arg5[%c2_21, %c0_22, %c0_23] : memref<3x1x256xf32, #tpu.memory_space<vmem>>, vector<1x1x256xf32>
    %30 = vector.shape_cast %29 : vector<1x1x256xf32> to vector<1x256xf32>
    %31 = vector.broadcast %30 : vector<1x256xf32> to vector<32x256xf32>
    %32 = arith.addf %28, %31 : vector<32x256xf32>
    %33 = arith.mulf %4, %32 : vector<32x256xf32>
    %34 = arith.addf %33, %24 : vector<32x256xf32>
    %c0_24 = arith.constant 0 : index
    %c0_25 = arith.constant 0 : index
    %35 = vector.load %arg6[%c0_24, %c0_25] : memref<256x512xbf16, #tpu.memory_space<vmem>>, vector<256x512xbf16>
    %cst_26 = arith.constant dense<0.000000e+00> : vector<32x512xf32>
    %36 = tpu.matmul %5, %35, %cst_26 {dimension_numbers = #tpu.dot_dimension_numbers<[1], [0], [0], [1], [0, 0, 1, 1], [], []>} : vector<32x256xbf16>, vector<256x512xbf16>, vector<32x512xf32> -> vector<32x512xf32>
    %c0_27 = arith.constant 0 : index
    %c0_28 = arith.constant 0 : index
    %37 = vector.load %arg7[%c0_27, %c0_28] : memref<1x512xf32, #tpu.memory_space<vmem>>, vector<1x512xf32>
    %38 = vector.broadcast %37 : vector<1x512xf32> to vector<32x512xf32>
    %39 = arith.addf %36, %38 : vector<32x512xf32>
    %cst_29 = arith.constant 0.000000e+00 : f32
    %40 = vector.broadcast %cst_29 : f32 to vector<32x512xf32>
    %41 = arith.maximumf %39, %40 : vector<32x512xf32>
    %42 = arith.truncf %41 : vector<32x512xf32> to vector<32x512xbf16>
    %c0_30 = arith.constant 0 : index
    %c0_31 = arith.constant 0 : index
    %43 = vector.load %arg8[%c0_30, %c0_31] : memref<512x256xbf16, #tpu.memory_space<vmem>>, vector<512x256xbf16>
    %cst_32 = arith.constant dense<0.000000e+00> : vector<32x256xf32>
    %44 = tpu.matmul %42, %43, %cst_32 {dimension_numbers = #tpu.dot_dimension_numbers<[1], [0], [0], [1], [0, 0, 1, 1], [], []>} : vector<32x512xbf16>, vector<512x256xbf16>, vector<32x256xf32> -> vector<32x256xf32>
    %c0_33 = arith.constant 0 : index
    %c0_34 = arith.constant 0 : index
    %45 = vector.load %arg9[%c0_33, %c0_34] : memref<1x256xf32, #tpu.memory_space<vmem>>, vector<1x256xf32>
    %46 = vector.broadcast %45 : vector<1x256xf32> to vector<32x256xf32>
    %47 = arith.addf %44, %46 : vector<32x256xf32>
    %cst_35 = arith.constant 0.000000e+00 : f32
    %48 = vector.broadcast %cst_35 : f32 to vector<32x256xf32>
    %49 = arith.maximumf %47, %48 : vector<32x256xf32>
    %50 = arith.truncf %34 : vector<32x256xf32> to vector<32x256xbf16>
    %c0_36 = arith.constant 0 : index
    %c0_37 = arith.constant 0 : index
    %51 = vector.load %arg10[%c0_36, %c0_37] : memref<256x128xbf16, #tpu.memory_space<vmem>>, vector<256x128xbf16>
    %cst_38 = arith.constant dense<0.000000e+00> : vector<32x128xf32>
    %52 = tpu.matmul %50, %51, %cst_38 {dimension_numbers = #tpu.dot_dimension_numbers<[1], [0], [0], [1], [0, 0, 1, 1], [], []>} : vector<32x256xbf16>, vector<256x128xbf16>, vector<32x128xf32> -> vector<32x128xf32>
    %53 = arith.truncf %49 : vector<32x256xf32> to vector<32x256xbf16>
    %c0_39 = arith.constant 0 : index
    %c0_40 = arith.constant 0 : index
    %54 = vector.load %arg11[%c0_39, %c0_40] : memref<256x128xbf16, #tpu.memory_space<vmem>>, vector<256x128xbf16>
    %cst_41 = arith.constant dense<0.000000e+00> : vector<32x128xf32>
    %55 = tpu.matmul %53, %54, %cst_41 {dimension_numbers = #tpu.dot_dimension_numbers<[1], [0], [0], [1], [0, 0, 1, 1], [], []>} : vector<32x256xbf16>, vector<256x128xbf16>, vector<32x128xf32> -> vector<32x128xf32>
    %56 = arith.addf %52, %55 : vector<32x128xf32>
    %c0_42 = arith.constant 0 : index
    %c0_43 = arith.constant 0 : index
    %57 = vector.load %arg12[%c0_42, %c0_43] : memref<1x128xf32, #tpu.memory_space<vmem>>, vector<1x128xf32>
    %58 = vector.broadcast %57 : vector<1x128xf32> to vector<32x128xf32>
    %59 = arith.addf %56, %58 : vector<32x128xf32>
    %60 = arith.negf %59 : vector<32x128xf32>
    %61 = math.exp %60 : vector<32x128xf32>
    %cst_44 = arith.constant 1.000000e+00 : f32
    %62 = vector.broadcast %cst_44 : f32 to vector<32x128xf32>
    %63 = arith.addf %62, %61 : vector<32x128xf32>
    %64 = arith.divf %62, %63 : vector<32x128xf32>
    %c0_45 = arith.constant 0 : index
    %c0_46 = arith.constant 0 : index
    %65 = vector.load %arg13[%c0_45, %c0_46] : memref<32x128xf32, #tpu.memory_space<vmem>>, vector<32x128xf32>
    tpu.vector_store %arg13[%c0_45, %c0_46], %64 {strides = array<i32>} : memref<32x128xf32, #tpu.memory_space<vmem>>, vector<32x128xf32>,
    return
  }
  func.func @transform_0(%arg0: i32) -> (i32, i32) {
    %c0_i32 = arith.constant 0 : i32
    %c0_i32_0 = arith.constant 0 : i32
    return %arg0, %c0_i32 : i32, i32
  }
  func.func @transform_1(%arg0: i32) -> (i32, i32) {
    %c0_i32 = arith.constant 0 : i32
    %c0_i32_0 = arith.constant 0 : i32
    return %arg0, %c0_i32 : i32, i32
  }
  func.func @transform_2(%arg0: i32) -> (i32, i32) {
    %c0_i32 = arith.constant 0 : i32
    %c0_i32_0 = arith.constant 0 : i32
    %c0_i32_1 = arith.constant 0 : i32
    return %c0_i32, %c0_i32_0 : i32, i32
  }
  func.func @transform_3(%arg0: i32) -> (i32, i32, i32) {
    %c0_i32 = arith.constant 0 : i32
    %c0_i32_0 = arith.constant 0 : i32
    %c0_i32_1 = arith.constant 0 : i32
    %c0_i32_2 = arith.constant 0 : i32
    return %c0_i32, %c0_i32_0, %c0_i32_1 : i32, i32, i32
  }
  func.func @transform_4(%arg0: i32) -> (i32, i32, i32) {
    %c0_i32 = arith.constant 0 : i32
    %c0_i32_0 = arith.constant 0 : i32
    %c0_i32_1 = arith.constant 0 : i32
    %c0_i32_2 = arith.constant 0 : i32
    return %c0_i32, %c0_i32_0, %c0_i32_1 : i32, i32, i32
  }
  func.func @transform_5(%arg0: i32) -> (i32, i32) {
    %c0_i32 = arith.constant 0 : i32
    %c0_i32_0 = arith.constant 0 : i32
    %c0_i32_1 = arith.constant 0 : i32
    return %c0_i32, %c0_i32_0 : i32, i32
  }
  func.func @transform_6(%arg0: i32) -> (i32, i32) {
    %c0_i32 = arith.constant 0 : i32
    %c0_i32_0 = arith.constant 0 : i32
    %c0_i32_1 = arith.constant 0 : i32
    return %c0_i32, %c0_i32_0 : i32, i32
  }
  func.func @transform_7(%arg0: i32) -> (i32, i32) {
    %c0_i32 = arith.constant 0 : i32
    %c0_i32_0 = arith.constant 0 : i32
    %c0_i32_1 = arith.constant 0 : i32
    return %c0_i32, %c0_i32_0 : i32, i32
  }
  func.func @transform_8(%arg0: i32) -> (i32, i32) {
    %c0_i32 = arith.constant 0 : i32
    %c0_i32_0 = arith.constant 0 : i32
    %c0_i32_1 = arith.constant 0 : i32
    return %c0_i32, %c0_i32_0 : i32, i32
  }
  func.func @transform_9(%arg0: i32) -> (i32, i32) {
    %c0_i32 = arith.constant 0 : i32
    %c0_i32_0 = arith.constant 0 : i32
    %c0_i32_1 = arith.constant 0 : i32
    return %c0_i32, %c0_i32_0 : i32, i32
  }
  func.func @transform_10(%arg0: i32) -> (i32, i32) {
    %c0_i32 = arith.constant 0 : i32
    %c0_i32_0 = arith.constant 0 : i32
    %c0_i32_1 = arith.constant 0 : i32
    return %c0_i32, %c0_i32_0 : i32, i32
  }
  func.func @transform_11(%arg0: i32) -> (i32, i32) {
    %c0_i32 = arith.constant 0 : i32
    %c0_i32_0 = arith.constant 0 : i32
    %c0_i32_1 = arith.constant 0 : i32
    return %c0_i32, %c0_i32_0 : i32, i32
  }
  func.func @transform_12(%arg0: i32) -> (i32, i32) {
    %c0_i32 = arith.constant 0 : i32
    %c0_i32_0 = arith.constant 0 : i32
    return %arg0, %c0_i32 : i32, i32
  }
}

</mosaic_0001>

<llo_original>
// kernel: tpu_custom_call.1
$region0: #{tpu_custom_call.1}
  #allocation0 [shape = 'u32[]', space=smem, size = 0x4, offset = 0x4, fixed_abs, tag = 'smem constant byte address 0x4 - core index']
  #allocation1 [shape = 'u32[72,128]{1,0:T(1,128)}', space=vmem, size = 0x9000, scoped, tag = 'internal scratch']
  %s0 = inlined_call_operand.hbm [shape: f32[128,256], index: 0, kind: input, shape index: {}]
  %s1 = inlined_call_operand.hbm [shape: bf16[128,256], index: 1, kind: input, shape index: {}]
  %s2 = inlined_call_operand.hbm [shape: bf16[256,256], index: 2, kind: input, shape index: {}]
  %s3 = inlined_call_operand.hbm [shape: bf16[3,256,256], index: 3, kind: input, shape index: {}]
  %s4 = inlined_call_operand.hbm [shape: f32[3,1,256], index: 4, kind: input, shape index: {}]
  %s5 = inlined_call_operand.hbm [shape: bf16[256,512], index: 5, kind: input, shape index: {}]
  %s6 = inlined_call_operand.vmem [shape: f32[1,512], index: 6, kind: input, shape index: {}]
  %s7 = inlined_call_operand.hbm [shape: bf16[512,256], index: 7, kind: input, shape index: {}]
  %s8 = inlined_call_operand.vmem [shape: f32[1,256], index: 8, kind: input, shape index: {}]
  %s9 = inlined_call_operand.hbm [shape: bf16[256,128], index: 9, kind: input, shape index: {}]
  %s10 = inlined_call_operand.hbm [shape: bf16[256,128], index: 10, kind: input, shape index: {}]
  %s11 = inlined_call_operand.vmem [shape: f32[1,128], index: 11, kind: input, shape index: {}]
  %s12 = inlined_call_operand.hbm [shape: f32[128,128], index: 12, kind: output, shape index: {}]
  %s13 = sld [smem:[#allocation0]]
  $region117: #{tpu_custom_call.1} parent=0
    _
  %s15 = ssub.s32 1, %s13
  %s16 = scalar_select 0, %s15, %s13
  $region1: #{tpu_custom_call.1} parent=0
    #allocation2 [shape = 'u8[65536]{0}', space=vmem, size = 0x10000, scoped, tag = 'input window, operand 0']
    #allocation3 [shape = 's32[2]{0}', space=sflag, size = 0x8, scoped, tag = 'scoped memory for tpu_custom_call.1']
    #allocation4 [shape = 's32[2]{0}', space=sflag, size = 0x8, scoped, tag = 'scoped memory for tpu_custom_call.1']
    #allocation5 [shape = 'u8[32768]{0}', space=vmem, size = 0x8000, scoped, tag = 'input window, operand 1']
    #allocation6 [shape = 's32[2]{0}', space=sflag, size = 0x8, scoped, tag = 'scoped memory for tpu_custom_call.1']
    #allocation7 [shape = 'u8[131072]{0}', space=vmem, size = 0x20000, scoped, tag = 'input window, operand 2, single buffered']
    #allocation8 [shape = 'u8[393216]{0}', space=vmem, size = 0x60000, scoped, tag = 'input window, operand 3, single buffered']
    #allocation9 [shape = 's32[1]{0}', space=sflag, size = 0x4, scoped, tag = 'scoped memory for tpu_custom_call.1']
    #allocation10 [shape = 'u8[3072]{0}', space=vmem, size = 0xc00, scoped, tag = 'input window, operand 4, single buffered']
    #allocation11 [shape = 'u8[262144]{0}', space=vmem, size = 0x40000, scoped, tag = 'input window, operand 5, single buffered']
    #allocation12 [shape = 's32[1]{0}', space=sflag, size = 0x4, scoped, tag = 'scoped memory for tpu_custom_call.1']
    #allocation13 [shape = 'u8[262144]{0}', space=vmem, size = 0x40000, scoped, tag = 'input window, operand 7, single buffered']
    #allocation14 [shape = 'u8[65536]{0}', space=vmem, size = 0x10000, scoped, tag = 'input window, operand 9, single buffered']
    #allocation15 [shape = 's32[1]{0}', space=sflag, size = 0x4, scoped, tag = 'scoped memory for tpu_custom_call.1']
    #allocation16 [shape = 'u8[65536]{0}', space=vmem, size = 0x10000, scoped, tag = 'input window, operand 10, single buffered']
    #allocation17 [shape = 'u8[32768]{0}', space=vmem, size = 0x8000, scoped, tag = 'output window, operand 0']
    %17 = vsyncpa [#allocation3], 0
    %s18 = scalar_lea.sflag [#allocation3], 1
    %19 = vsyncpa %s18, 0
    %20 = vsyncpa [#allocation6], 0
    %s21 = scalar_lea.sflag [#allocation6], 1
    %22 = vsyncpa %s21, 0
    %23 = vsyncpa [#allocation9], 0
    %24 = vsyncpa [#allocation12], 0
    %25 = vsyncpa [#allocation15], 0
    %26 = vsyncpa [#allocation4], 0
    %s27 = scalar_lea.sflag [#allocation4], 1
    %28 = vsyncpa %s27, 0
    loop: start=0, step=1, limit=6
    $region2: #{tpu_custom_call.1} parent=1 // loop_pre_header
      _
    $region3: #{tpu_custom_call.1} parent=1 // loop_header
      %s30 = sphi 0, %s34
      %p31 = scmp.ge.s32.totalorder %s30, 6
      %s40 = sphi 0, %s42
      %s43 = sphi 0, %s40
      %s44 = sphi 0, %s43
      %s60 = sphi 0, %s44
      %s66 = sphi 0, %s68
      %s69 = sphi 0, %s66
      %s70 = sphi 0, %s69
      %s86 = sphi 0, %s70
      %s90 = sphi 0, %s90
      %s92 = sphi 0, %s90
      %s93 = sphi 0, %s92
      %s107 = sphi 0, %s93
      %s111 = sphi 0, %s111
      %s113 = sphi 0, %s111
      %s114 = sphi 0, %s113
      %s128 = sphi 0, %s114
      %s132 = sphi 0, %s132
      %s134 = sphi 0, %s132
      %s135 = sphi 0, %s134
      %s149 = sphi 0, %s135
      %s153 = sphi 0, %s153
      %s155 = sphi 0, %s153
      %s156 = sphi 0, %s155
      %s170 = sphi 0, %s156
      %s174 = sphi 0, %s174
      %s176 = sphi 0, %s174
      %s177 = sphi 0, %s176
      %s191 = sphi 0, %s177
      %s195 = sphi 0, %s195
      %s197 = sphi 0, %s195
      %s198 = sphi 0, %s197
      %s212 = sphi 0, %s198
      %s216 = sphi 0, %s216
      %s218 = sphi 0, %s216
      %s219 = sphi 0, %s218
      %s233 = sphi 0, %s219
      %s237 = sphi 0, %s237
      %s239 = sphi 0, %s237
      %s240 = sphi 0, %s239
      %s254 = sphi 0, %s240
      %s258 = sphi 0, %s258
      %s260 = sphi 0, %s258
      %s261 = sphi 0, %s260
      %s275 = sphi 0, %s261
      %s279 = sphi 0, %s279
      %s281 = sphi 0, %s279
      %s282 = sphi 0, %s281
      %s296 = sphi 0, %s282
      %s302 = sphi 0, %s304
      %s305 = sphi 0, %s302
      %s306 = sphi 0, %s305
      %s322 = sphi 0, %s306
    $region4: #{tpu_custom_call.1} parent=1 // loop_header_branch
      %33 = sbr.rel (%p31) target = $region8
    $region5: #{tpu_custom_call.1} parent=1 // loop_body
      %s35 = ssub.s32 %s30, 1
      %s36 = ssub.s32 %s30, 2
      %s37 = sadd.s32 %s30, 1
      %s38 = ssub.s32 %s30, %s37
      %p39 = scmp.eq.s32.totalorder %s38, 0
      %s41 = sadd.s32 %s40, 1
      %s42 = scalar_select %p39, %s40, %s41
      %p45 = pneg %p39
      %p46 = scmp.eq.s32.totalorder %s30, 3
      %p47 = por %p45, %p46
      %p48 = scmp.ne.s32.totalorder %s40, %s43
      %p49 = scmp.eq.s32.totalorder %s30, 0
      %p50 = por %p48, %p49
      %p51 = scmp.ne.s32.totalorder %s40, %s43
      %p52 = scmp.eq.s32.totalorder %s35, 3
      %p53 = por %p51, %p52
      %p54 = scmp.ne.s32.totalorder %s43, %s44
      %p55 = scmp.eq.s32.totalorder %s35, 0
      %p56 = por %p54, %p55
      %p57 = scmp.ne.s32.totalorder %s43, %s44
      %p58 = scmp.eq.s32.totalorder %s36, 3
      %p59 = por %p57, %p58
      %p61 = scmp.ne.s32.totalorder %s44, %s60
      %p62 = scmp.eq.s32.totalorder %s36, 0
      %p63 = por %p61, %p62
      %s64 = ssub.s32 %s30, %s37
      %p65 = scmp.eq.s32.totalorder %s64, 0
      %s67 = sadd.s32 %s66, 1
      %s68 = scalar_select %p65, %s66, %s67
      %p71 = pneg %p65
      %p72 = scmp.eq.s32.totalorder %s30, 3
      %p73 = por %p71, %p72
      %p74 = scmp.ne.s32.totalorder %s66, %s69
      %p75 = scmp.eq.s32.totalorder %s30, 0
      %p76 = por %p74, %p75
      %p77 = scmp.ne.s32.totalorder %s66, %s69
      %p78 = scmp.eq.s32.totalorder %s35, 3
      %p79 = por %p77, %p78
      %p80 = scmp.ne.s32.totalorder %s69, %s70
      %p81 = scmp.eq.s32.totalorder %s35, 0
      %p82 = por %p80, %p81
      %p83 = scmp.ne.s32.totalorder %s69, %s70
      %p84 = scmp.eq.s32.totalorder %s36, 3
      %p85 = por %p83, %p84
      %p87 = scmp.ne.s32.totalorder %s70, %s86
      %p88 = scmp.eq.s32.totalorder %s36, 0
      %p89 = por %p87, %p88
      %s91 = sadd.s32 %s90, 1
      %p94 = scmp.eq.s32.totalorder %s30, 3
      %p95 = scmp.ne.s32.totalorder %s90, %s92
      %p96 = scmp.eq.s32.totalorder %s30, 0
      %p97 = por %p95, %p96
      %p98 = scmp.ne.s32.totalorder %s90, %s92
      %p99 = scmp.eq.s32.totalorder %s35, 3
      %p100 = por %p98, %p99
      %p101 = scmp.ne.s32.totalorder %s92, %s93
      %p102 = scmp.eq.s32.totalorder %s35, 0
      %p103 = por %p101, %p102
      %p104 = scmp.ne.s32.totalorder %s92, %s93
      %p105 = scmp.eq.s32.totalorder %s36, 3
      %p106 = por %p104, %p105
      %p108 = scmp.ne.s32.totalorder %s93, %s107
      %p109 = scmp.eq.s32.totalorder %s36, 0
      %p110 = por %p108, %p109
      %s112 = sadd.s32 %s111, 1
      %p115 = scmp.eq.s32.totalorder %s30, 3
      %p116 = scmp.ne.s32.totalorder %s111, %s113
      %p117 = scmp.eq.s32.totalorder %s30, 0
      %p118 = por %p116, %p117
      %p119 = scmp.ne.s32.totalorder %s111, %s113
      %p120 = scmp.eq.s32.totalorder %s35, 3
      %p121 = por %p119, %p120
      %p122 = scmp.ne.s32.totalorder %s113, %s114
      %p123 = scmp.eq.s32.totalorder %s35, 0
      %p124 = por %p122, %p123
      %p125 = scmp.ne.s32.totalorder %s113, %s114
      %p126 = scmp.eq.s32.totalorder %s36, 3
      %p127 = por %p125, %p126
      %p129 = scmp.ne.s32.totalorder %s114, %s128
      %p130 = scmp.eq.s32.totalorder %s36, 0
      %p131 = por %p129, %p130
      %s133 = sadd.s32 %s132, 1
      %p136 = scmp.eq.s32.totalorder %s30, 3
      %p137 = scmp.ne.s32.totalorder %s132, %s134
      %p138 = scmp.eq.s32.totalorder %s30, 0
      %p139 = por %p137, %p138
      %p140 = scmp.ne.s32.totalorder %s132, %s134
      %p141 = scmp.eq.s32.totalorder %s35, 3
      %p142 = por %p140, %p141
      %p143 = scmp.ne.s32.totalorder %s134, %s135
      %p144 = scmp.eq.s32.totalorder %s35, 0
      %p145 = por %p143, %p144
      %p146 = scmp.ne.s32.totalorder %s134, %s135
      %p147 = scmp.eq.s32.totalorder %s36, 3
      %p148 = por %p146, %p147
      %p150 = scmp.ne.s32.totalorder %s135, %s149
      %p151 = scmp.eq.s32.totalorder %s36, 0
      %p152 = por %p150, %p151
      %s154 = sadd.s32 %s153, 1
      %p157 = scmp.eq.s32.totalorder %s30, 3
      %p158 = scmp.ne.s32.totalorder %s153, %s155
      %p159 = scmp.eq.s32.totalorder %s30, 0
      %p160 = por %p158, %p159
      %p161 = scmp.ne.s32.totalorder %s153, %s155
      %p162 = scmp.eq.s32.totalorder %s35, 3
      %p163 = por %p161, %p162
      %p164 = scmp.ne.s32.totalorder %s155, %s156
      %p165 = scmp.eq.s32.totalorder %s35, 0
      %p166 = por %p164, %p165
      %p167 = scmp.ne.s32.totalorder %s155, %s156
      %p168 = scmp.eq.s32.totalorder %s36, 3
      %p169 = por %p167, %p168
      %p171 = scmp.ne.s32.totalorder %s156, %s170
      %p172 = scmp.eq.s32.totalorder %s36, 0
      %p173 = por %p171, %p172
      %s175 = sadd.s32 %s174, 1
      %p178 = scmp.eq.s32.totalorder %s30, 3
      %p179 = scmp.ne.s32.totalorder %s174, %s176
      %p180 = scmp.eq.s32.totalorder %s30, 0
      %p181 = por %p179, %p180
      %p182 = scmp.ne.s32.totalorder %s174, %s176
      %p183 = scmp.eq.s32.totalorder %s35, 3
      %p184 = por %p182, %p183
      %p185 = scmp.ne.s32.totalorder %s176, %s177
      %p186 = scmp.eq.s32.totalorder %s35, 0
      %p187 = por %p185, %p186
      %p188 = scmp.ne.s32.totalorder %s176, %s177
      %p189 = scmp.eq.s32.totalorder %s36, 3
      %p190 = por %p188, %p189
      %p192 = scmp.ne.s32.totalorder %s177, %s191
      %p193 = scmp.eq.s32.totalorder %s36, 0
      %p194 = por %p192, %p193
      %s196 = sadd.s32 %s195, 1
      %p199 = scmp.eq.s32.totalorder %s30, 3
      %p200 = scmp.ne.s32.totalorder %s195, %s197
      %p201 = scmp.eq.s32.totalorder %s30, 0
      %p202 = por %p200, %p201
      %p203 = scmp.ne.s32.totalorder %s195, %s197
      %p204 = scmp.eq.s32.totalorder %s35, 3
      %p205 = por %p203, %p204
      %p206 = scmp.ne.s32.totalorder %s197, %s198
      %p207 = scmp.eq.s32.totalorder %s35, 0
      %p208 = por %p206, %p207
      %p209 = scmp.ne.s32.totalorder %s197, %s198
      %p210 = scmp.eq.s32.totalorder %s36, 3
      %p211 = por %p209, %p210
      %p213 = scmp.ne.s32.totalorder %s198, %s212
      %p214 = scmp.eq.s32.totalorder %s36, 0
      %p215 = por %p213, %p214
      %s217 = sadd.s32 %s216, 1
      %p220 = scmp.eq.s32.totalorder %s30, 3
      %p221 = scmp.ne.s32.totalorder %s216, %s218
      %p222 = scmp.eq.s32.totalorder %s30, 0
      %p223 = por %p221, %p222
      %p224 = scmp.ne.s32.totalorder %s216, %s218
      %p225 = scmp.eq.s32.totalorder %s35, 3
      %p226 = por %p224, %p225
      %p227 = scmp.ne.s32.totalorder %s218, %s219
      %p228 = scmp.eq.s32.totalorder %s35, 0
      %p229 = por %p227, %p228
      %p230 = scmp.ne.s32.totalorder %s218, %s219
      %p231 = scmp.eq.s32.totalorder %s36, 3
      %p232 = por %p230, %p231
      %p234 = scmp.ne.s32.totalorder %s219, %s233
      %p235 = scmp.eq.s32.totalorder %s36, 0
      %p236 = por %p234, %p235
      %s238 = sadd.s32 %s237, 1
      %p241 = scmp.eq.s32.totalorder %s30, 3
      %p242 = scmp.ne.s32.totalorder %s237, %s239
      %p243 = scmp.eq.s32.totalorder %s30, 0
      %p244 = por %p242, %p243
      %p245 = scmp.ne.s32.totalorder %s237, %s239
      %p246 = scmp.eq.s32.totalorder %s35, 3
      %p247 = por %p245, %p246
      %p248 = scmp.ne.s32.totalorder %s239, %s240
      %p249 = scmp.eq.s32.totalorder %s35, 0
      %p250 = por %p248, %p249
      %p251 = scmp.ne.s32.totalorder %s239, %s240
      %p252 = scmp.eq.s32.totalorder %s36, 3
      %p253 = por %p251, %p252
      %p255 = scmp.ne.s32.totalorder %s240, %s254
      %p256 = scmp.eq.s32.totalorder %s36, 0
      %p257 = por %p255, %p256
      %s259 = sadd.s32 %s258, 1
      %p262 = scmp.eq.s32.totalorder %s30, 3
      %p263 = scmp.ne.s32.totalorder %s258, %s260
      %p264 = scmp.eq.s32.totalorder %s30, 0
      %p265 = por %p263, %p264
      %p266 = scmp.ne.s32.totalorder %s258, %s260
      %p267 = scmp.eq.s32.totalorder %s35, 3
      %p268 = por %p266, %p267
      %p269 = scmp.ne.s32.totalorder %s260, %s261
      %p270 = scmp.eq.s32.totalorder %s35, 0
      %p271 = por %p269, %p270
      %p272 = scmp.ne.s32.totalorder %s260, %s261
      %p273 = scmp.eq.s32.totalorder %s36, 3
      %p274 = por %p272, %p273
      %p276 = scmp.ne.s32.totalorder %s261, %s275
      %p277 = scmp.eq.s32.totalorder %s36, 0
      %p278 = por %p276, %p277
      %s280 = sadd.s32 %s279, 1
      %p283 = scmp.eq.s32.totalorder %s30, 3
      %p284 = scmp.ne.s32.totalorder %s279, %s281
      %p285 = scmp.eq.s32.totalorder %s30, 0
      %p286 = por %p284, %p285
      %p287 = scmp.ne.s32.totalorder %s279, %s281
      %p288 = scmp.eq.s32.totalorder %s35, 3
      %p289 = por %p287, %p288
      %p290 = scmp.ne.s32.totalorder %s281, %s282
      %p291 = scmp.eq.s32.totalorder %s35, 0
      %p292 = por %p290, %p291
      %p293 = scmp.ne.s32.totalorder %s281, %s282
      %p294 = scmp.eq.s32.totalorder %s36, 3
      %p295 = por %p293, %p294
      %p297 = scmp.ne.s32.totalorder %s282, %s296
      %p298 = scmp.eq.s32.totalorder %s36, 0
      %p299 = por %p297, %p298
      %s300 = ssub.s32 %s30, %s37
      %p301 = scmp.eq.s32.totalorder %s300, 0
      %s303 = sadd.s32 %s302, 1
      %s304 = scalar_select %p301, %s302, %s303
      %p307 = pneg %p301
      %p308 = scmp.eq.s32.totalorder %s30, 3
      %p309 = por %p307, %p308
      %p310 = scmp.ne.s32.totalorder %s302, %s305
      %p311 = scmp.eq.s32.totalorder %s30, 0
      %p312 = por %p310, %p311
      %p313 = scmp.ne.s32.totalorder %s302, %s305
      %p314 = scmp.eq.s32.totalorder %s35, 3
      %p315 = por %p313, %p314
      %p316 = scmp.ne.s32.totalorder %s305, %s306
      %p317 = scmp.eq.s32.totalorder %s35, 0
      %p318 = por %p316, %p317
      %p319 = scmp.ne.s32.totalorder %s305, %s306
      %p320 = scmp.eq.s32.totalorder %s36, 3
      %p321 = por %p319, %p320
      %p323 = scmp.ne.s32.totalorder %s306, %s322
      %p324 = scmp.eq.s32.totalorder %s36, 0
      %p325 = por %p323, %p324
      %p326 = scmp.le.s32.totalorder 1, %s30
      %p327 = scmp.lt.s32.totalorder %s30, 5
      %p328 = pnand %p326, %p327
      %p329 = pneg %p328
      // Predicated region
      $region9: #{tpu_custom_call.1} parent=5 // pred_check
        _
      $region10: #{tpu_custom_call.1} parent=5 // pred_check_branch
        %331 = sbr.rel (%p328) target = $region12
      $region11: #{tpu_custom_call.1} parent=5 // pred_region
        %s332 = ssub.s32 %s30, 1
        // Predicated region
        $region13: #{tpu_custom_call.1} parent=11 // pred_check
          %p333 = pneg %p103
        $region14: #{tpu_custom_call.1} parent=11 // pred_check_branch
          %335 = sbr.rel (%p333) target = $region16
        $region15: #{tpu_custom_call.1} parent=11 // pred_region
          %337 = vsyncadd [#allocation6], 0
          %s338 = sshll.u32 %s2, 4
          %s339 = int_to_ptr.hbm [resolvable:$true] %s338
          %s340 = sshll.u32 [#allocation7], 4
          %s341 = int_to_ptr.vmem [resolvable:$true] %s340
          %346 = dma.hbm_to_vmem [thread:$0]  %s339, 4096, %s341, [#allocation6], 128, 128, 8
        $region16: #{tpu_custom_call.1} parent=11 // pred_fallthru
          _
        // Predicated region
        $region17: #{tpu_custom_call.1} parent=11 // pred_check
          %p347 = pneg %p124
        $region18: #{tpu_custom_call.1} parent=11 // pred_check_branch
          %349 = sbr.rel (%p347) target = $region20
        $region19: #{tpu_custom_call.1} parent=11 // pred_region
          %351 = vsyncadd [#allocation9], 0
          %s352 = sshll.u32 %s3, 4
          %s353 = int_to_ptr.hbm [resolvable:$true] %s352
          %s354 = sshll.u32 [#allocation8], 4
          %s355 = int_to_ptr.vmem [resolvable:$true] %s354
          %360 = dma.hbm_to_vmem [thread:$0]  %s353, 12288, %s355, [#allocation9], 128, 128, 8
        $region20: #{tpu_custom_call.1} parent=11 // pred_fallthru
          _
        // Predicated region
        $region21: #{tpu_custom_call.1} parent=11 // pred_check
          %p361 = pneg %p145
        $region22: #{tpu_custom_call.1} parent=11 // pred_check_branch
          %363 = sbr.rel (%p361) target = $region24
        $region23: #{tpu_custom_call.1} parent=11 // pred_region
          %365 = vsyncadd [#allocation9], 0
          %s366 = sshll.u32 %s4, 4
          %s367 = int_to_ptr.hbm [resolvable:$true] %s366
          %s368 = sshll.u32 [#allocation10], 4
          %s369 = int_to_ptr.vmem [resolvable:$true] %s368
          %374 = dma.hbm_to_vmem [thread:$0]  %s367, 96, %s369, [#allocation9], 32, 32, 2
        $region24: #{tpu_custom_call.1} parent=11 // pred_fallthru
          _
        // Predicated region
        $region25: #{tpu_custom_call.1} parent=11 // pred_check
          %p375 = pneg %p166
        $region26: #{tpu_custom_call.1} parent=11 // pred_check_branch
          %377 = sbr.rel (%p375) target = $region28
        $region27: #{tpu_custom_call.1} parent=11 // pred_region
          %379 = vsyncadd [#allocation12], 0
          %s380 = sshll.u32 %s5, 4
          %s381 = int_to_ptr.hbm [resolvable:$true] %s380
          %s382 = sshll.u32 [#allocation11], 4
          %s383 = int_to_ptr.vmem [resolvable:$true] %s382
          %388 = dma.hbm_to_vmem [thread:$0]  %s381, 8192, %s383, [#allocation12], 256, 256, 16
        $region28: #{tpu_custom_call.1} parent=11 // pred_fallthru
          _
        // Predicated region
        $region29: #{tpu_custom_call.1} parent=11 // pred_check
          %p389 = pneg %p187
        $region30: #{tpu_custom_call.1} parent=11 // pred_check_branch
          %391 = sbr.rel (%p389) target = $region32
        $region31: #{tpu_custom_call.1} parent=11 // pred_region
          _
        $region32: #{tpu_custom_call.1} parent=11 // pred_fallthru
          _
        // Predicated region
        $region33: #{tpu_custom_call.1} parent=11 // pred_check
          %p392 = pneg %p208
        $region34: #{tpu_custom_call.1} parent=11 // pred_check_branch
          %394 = sbr.rel (%p392) target = $region36
        $region35: #{tpu_custom_call.1} parent=11 // pred_region
          %396 = vsyncadd [#allocation12], 0
          %s397 = sshll.u32 %s7, 4
          %s398 = int_to_ptr.hbm [resolvable:$true] %s397
          %s399 = sshll.u32 [#allocation13], 4
          %s400 = int_to_ptr.vmem [resolvable:$true] %s399
          %405 = dma.hbm_to_vmem [thread:$0]  %s398, 8192, %s400, [#allocation12], 128, 128, 8
        $region36: #{tpu_custom_call.1} parent=11 // pred_fallthru
          _
        // Predicated region
        $region37: #{tpu_custom_call.1} parent=11 // pred_check
          %p406 = pneg %p229
        $region38: #{tpu_custom_call.1} parent=11 // pred_check_branch
          %408 = sbr.rel (%p406) target = $region40
        $region39: #{tpu_custom_call.1} parent=11 // pred_region
          _
        $region40: #{tpu_custom_call.1} parent=11 // pred_fallthru
          _
        // Predicated region
        $region41: #{tpu_custom_call.1} parent=11 // pred_check
          %p409 = pneg %p250
        $region42: #{tpu_custom_call.1} parent=11 // pred_check_branch
          %411 = sbr.rel (%p409) target = $region44
        $region43: #{tpu_custom_call.1} parent=11 // pred_region
          %413 = vsyncadd [#allocation15], 0
          %s414 = sshll.u32 %s9, 4
          %s415 = int_to_ptr.hbm [resolvable:$true] %s414
          %s416 = sshll.u32 [#allocation14], 4
          %s417 = int_to_ptr.vmem [resolvable:$true] %s416
          %422 = dma.hbm_to_vmem [thread:$0]  %s415, 2048, %s417, [#allocation15], 64, 64, 4
        $region44: #{tpu_custom_call.1} parent=11 // pred_fallthru
          _
        // Predicated region
        $region45: #{tpu_custom_call.1} parent=11 // pred_check
          %p423 = pneg %p271
        $region46: #{tpu_custom_call.1} parent=11 // pred_check_branch
          %425 = sbr.rel (%p423) target = $region48
        $region47: #{tpu_custom_call.1} parent=11 // pred_region
          %427 = vsyncadd [#allocation15], 0
          %s428 = sshll.u32 %s10, 4
          %s429 = int_to_ptr.hbm [resolvable:$true] %s428
          %s430 = sshll.u32 [#allocation16], 4
          %s431 = int_to_ptr.vmem [resolvable:$true] %s430
          %436 = dma.hbm_to_vmem [thread:$0]  %s429, 2048, %s431, [#allocation15], 64, 64, 4
        $region48: #{tpu_custom_call.1} parent=11 // pred_fallthru
          _
        // Predicated region
        $region49: #{tpu_custom_call.1} parent=11 // pred_check
          %p437 = pneg %p292
        $region50: #{tpu_custom_call.1} parent=11 // pred_check_branch
          %439 = sbr.rel (%p437) target = $region52
        $region51: #{tpu_custom_call.1} parent=11 // pred_region
          _
        $region52: #{tpu_custom_call.1} parent=11 // pred_fallthru
          _
      $region12: #{tpu_custom_call.1} parent=5 // pred_fallthru
        _
      %p440 = scmp.lt.s32.totalorder %s30, 4
      // Predicated region
      $region53: #{tpu_custom_call.1} parent=5 // pred_check
        %p441 = pneg %p440
      $region54: #{tpu_custom_call.1} parent=5 // pred_check_branch
        %443 = sbr.rel (%p441) target = $region56
      $region55: #{tpu_custom_call.1} parent=5 // pred_region
        // Predicated region
        $region57: #{tpu_custom_call.1} parent=55 // pred_check
          %p444 = pneg %p50
        $region58: #{tpu_custom_call.1} parent=55 // pred_check_branch
          %446 = sbr.rel (%p444) target = $region60
        $region59: #{tpu_custom_call.1} parent=55 // pred_region
          %s447 = sand.u32 %s40, 1
          %s448 = scalar_lea.sflag [#allocation3], %s447
          %s449 = sand.u32 %s40, 1
          %s450 = smul.addr %s449, 64
          %s451 = scalar_lea.vmem [#allocation2], %s450
          %s452 = smul.u32 4, %s30
          %454 = vsyncadd %s448, 0
          %s455 = smul.addr %s452, 2
          %s456 = smul.addr %s455, 8
          %s457 = scalar_lea.hbm %s0, %s456
          %s458 = sshll.u32 %s457, 4
          %s459 = int_to_ptr.hbm [resolvable:$true] %s458
          %s460 = sshll.u32 %s451, 4
          %s461 = int_to_ptr.vmem [resolvable:$true] %s460
          %466 = dma.hbm_to_vmem [thread:$0]  %s459, 1024, %s461, %s448, 256, 256, 16
        $region60: #{tpu_custom_call.1} parent=55 // pred_fallthru
          _
        // Predicated region
        $region61: #{tpu_custom_call.1} parent=55 // pred_check
          %p467 = pneg %p76
        $region62: #{tpu_custom_call.1} parent=55 // pred_check_branch
          %469 = sbr.rel (%p467) target = $region64
        $region63: #{tpu_custom_call.1} parent=55 // pred_region
          %s470 = sand.u32 %s30, 1
          %s471 = scalar_lea.sflag [#allocation6], %s470
          %s472 = sand.u32 %s66, 1
          %s473 = smul.addr %s472, 32
          %s474 = scalar_lea.vmem [#allocation5], %s473
          %s475 = smul.u32 4, %s30
          %477 = vsyncadd %s471, 0
          %s478 = smul.addr %s475, 2
          %s479 = smul.addr %s478, 4
          %s480 = scalar_lea.hbm %s1, %s479
          %s481 = sshll.u32 %s480, 4
          %s482 = int_to_ptr.hbm [resolvable:$true] %s481
          %s483 = sshll.u32 %s474, 4
          %s484 = int_to_ptr.vmem [resolvable:$true] %s483
          %489 = dma.hbm_to_vmem [thread:$0]  %s482, 512, %s484, %s471, 128, 128, 8
        $region64: #{tpu_custom_call.1} parent=55 // pred_fallthru
          _
      $region56: #{tpu_custom_call.1} parent=5 // pred_fallthru
        _
      %p490 = scmp.le.s32.totalorder 1, %s30
      %p491 = scmp.lt.s32.totalorder %s30, 5
      %p492 = pnand %p490, %p491
      %p493 = pneg %p492
      // Predicated region
      $region65: #{tpu_custom_call.1} parent=5 // pred_check
        _
      $region66: #{tpu_custom_call.1} parent=5 // pred_check_branch
        %495 = sbr.rel (%p492) target = $region68
      $region67: #{tpu_custom_call.1} parent=5 // pred_region
        %s496 = ssub.s32 %s30, 1
        %s497 = sand.u32 %s43, 1
        %s498 = scalar_lea.sflag [#allocation3], %s497
        %s499 = sand.u32 %s43, 1
        %s500 = smul.addr %s499, 64
        %s501 = scalar_lea.vmem [#allocation2], %s500
        // Predicated region
        $region69: #{tpu_custom_call.1} parent=67 // pred_check
          %p502 = pneg %p56
        $region70: #{tpu_custom_call.1} parent=67 // pred_check_branch
          %504 = sbr.rel (%p502) target = $region72
        $region71: #{tpu_custom_call.1} parent=67 // pred_region
          %506 = dma.done %s498, 1024
        $region72: #{tpu_custom_call.1} parent=67 // pred_fallthru
          _
        %s507 = sand.u32 %s35, 1
        %s508 = scalar_lea.sflag [#allocation6], %s507
        %s509 = sand.u32 %s69, 1
        %s510 = smul.addr %s509, 32
        %s511 = scalar_lea.vmem [#allocation5], %s510
        // Predicated region
        $region73: #{tpu_custom_call.1} parent=67 // pred_check
          %p512 = pneg %p82
        $region74: #{tpu_custom_call.1} parent=67 // pred_check_branch
          %514 = sbr.rel (%p512) target = $region76
        $region75: #{tpu_custom_call.1} parent=67 // pred_region
          %516 = dma.done %s508, 512
        $region76: #{tpu_custom_call.1} parent=67 // pred_fallthru
          _
        // Predicated region
        $region77: #{tpu_custom_call.1} parent=67 // pred_check
          %p517 = pneg %p103
        $region78: #{tpu_custom_call.1} parent=67 // pred_check_branch
          %519 = sbr.rel (%p517) target = $region80
        $region79: #{tpu_custom_call.1} parent=67 // pred_region
          %521 = dma.done [#allocation6], 4096
        $region80: #{tpu_custom_call.1} parent=67 // pred_fallthru
          _
        // Predicated region
        $region81: #{tpu_custom_call.1} parent=67 // pred_check
          %p522 = pneg %p124
        $region82: #{tpu_custom_call.1} parent=67 // pred_check_branch
          %524 = sbr.rel (%p522) target = $region84
        $region83: #{tpu_custom_call.1} parent=67 // pred_region
          %526 = dma.done [#allocation9], 12288
        $region84: #{tpu_custom_call.1} parent=67 // pred_fallthru
          _
        // Predicated region
        $region85: #{tpu_custom_call.1} parent=67 // pred_check
          %p527 = pneg %p145
        $region86: #{tpu_custom_call.1} parent=67 // pred_check_branch
          %529 = sbr.rel (%p527) target = $region88
        $region87: #{tpu_custom_call.1} parent=67 // pred_region
          %531 = dma.done [#allocation9], 96
        $region88: #{tpu_custom_call.1} parent=67 // pred_fallthru
          _
        // Predicated region
        $region89: #{tpu_custom_call.1} parent=67 // pred_check
          %p532 = pneg %p166
        $region90: #{tpu_custom_call.1} parent=67 // pred_check_branch
          %534 = sbr.rel (%p532) target = $region92
        $region91: #{tpu_custom_call.1} parent=67 // pred_region
          %536 = dma.done [#allocation12], 8192
        $region92: #{tpu_custom_call.1} parent=67 // pred_fallthru
          _
        // Predicated region
        $region93: #{tpu_custom_call.1} parent=67 // pred_check
          %p537 = pneg %p208
        $region94: #{tpu_custom_call.1} parent=67 // pred_check_branch
          %539 = sbr.rel (%p537) target = $region96
        $region95: #{tpu_custom_call.1} parent=67 // pred_region
          %541 = dma.done [#allocation12], 8192
        $region96: #{tpu_custom_call.1} parent=67 // pred_fallthru
          _
        // Predicated region
        $region97: #{tpu_custom_call.1} parent=67 // pred_check
          %p542 = pneg %p250
        $region98: #{tpu_custom_call.1} parent=67 // pred_check_branch
          %544 = sbr.rel (%p542) target = $region100
        $region99: #{tpu_custom_call.1} parent=67 // pred_region
          %546 = dma.done [#allocation15], 2048
        $region100: #{tpu_custom_call.1} parent=67 // pred_fallthru
          _
        // Predicated region
        $region101: #{tpu_custom_call.1} parent=67 // pred_check
          %p547 = pneg %p271
        $region102: #{tpu_custom_call.1} parent=67 // pred_check_branch
          %549 = sbr.rel (%p547) target = $region104
        $region103: #{tpu_custom_call.1} parent=67 // pred_region
          %551 = dma.done [#allocation15], 2048
        $region104: #{tpu_custom_call.1} parent=67 // pred_fallthru
          _
        %s552 = sand.u32 %s43, 1
        %s553 = scalar_lea.sflag [#allocation3], %s552
        %s554 = sand.u32 %s43, 1
        %s555 = smul.addr %s554, 64
        %s556 = scalar_lea.vmem [#allocation2], %s555
        %p557 = pneg %p56
        %p558 = pneg %p53
        %s559 = sand.u32 %s35, 1
        %s560 = scalar_lea.sflag [#allocation6], %s559
        %s561 = sand.u32 %s69, 1
        %s562 = smul.addr %s561, 32
        %s563 = scalar_lea.vmem [#allocation5], %s562
        %p564 = pneg %p82
        %p565 = pneg %p79
        %p566 = pneg %p103
        %p567 = pneg %p100
        %p568 = pneg %p124
        %p569 = pneg %p121
        %p570 = pneg %p145
        %p571 = pneg %p142
        %p572 = pneg %p166
        %p573 = pneg %p163
        %p574 = pneg %p187
        %p575 = pneg %p184
        %p576 = pneg %p208
        %p577 = pneg %p205
        %p578 = pneg %p229
        %p579 = pneg %p226
        %p580 = pneg %p250
        %p581 = pneg %p247
        %p582 = pneg %p271
        %p583 = pneg %p268
        %p584 = pneg %p292
        %p585 = pneg %p289
        %p586 = pneg %p318
        %p587 = pneg %p315
        %s588 = sand.u32 %s305, 1
        %s589 = scalar_lea.sflag [#allocation4], %s588
        %s590 = sand.u32 %s305, 1
        %s591 = smul.addr %s590, 32
        %s592 = scalar_lea.vmem [#allocation17], %s591
        %s593 = smul.u32 4, %s35
        %s594 = smul.u32 4, %s35
        %s595 = smul.u32 4, %s35
        %v596 = vld [vmem:[%s501] sm:$0xff]
        %v597 = vld [vmem:[%s501 + $0x8] sm:$0xff]
        %v598 = vld [vmem:[%s501 + $0x10] sm:$0xff]
        %v599 = vld [vmem:[%s501 + $0x18] sm:$0xff]
        %v600 = vld [vmem:[%s501 + $0x20] sm:$0xff]
        %v601 = vld [vmem:[%s501 + $0x28] sm:$0xff]
        %v602 = vld [vmem:[%s501 + $0x30] sm:$0xff]
        %v603 = vld [vmem:[%s501 + $0x38] sm:$0xff]
        %v604 = vld [vmem:[%s511] sm:$0xff]
        %v605 = vld [vmem:[%s511 + $0x8] sm:$0xff]
        %v606 = vld [vmem:[%s511 + $0x10] sm:$0xff]
        %v607 = vld [vmem:[%s511 + $0x18] sm:$0xff]
        %v608 = vld [vmem:[#allocation7] sm:$0xff]
        %v609 = vld [vmem:[#allocation7 + $0x8] sm:$0xff]
        %v610 = vld [vmem:[#allocation7 + $0x10] sm:$0xff]
        %v611 = vld [vmem:[#allocation7 + $0x18] sm:$0xff]
        %v612 = vld [vmem:[#allocation7 + $0x20] sm:$0xff]
        %v613 = vld [vmem:[#allocation7 + $0x28] sm:$0xff]
        %v614 = vld [vmem:[#allocation7 + $0x30] sm:$0xff]
        %v615 = vld [vmem:[#allocation7 + $0x38] sm:$0xff]
        %v616 = vld [vmem:[#allocation7 + $0x40] sm:$0xff]
        %v617 = vld [vmem:[#allocation7 + $0x48] sm:$0xff]
        %v618 = vld [vmem:[#allocation7 + $0x50] sm:$0xff]
        %v619 = vld [vmem:[#allocation7 + $0x58] sm:$0xff]
        %v620 = vld [vmem:[#allocation7 + $0x60] sm:$0xff]
        %v621 = vld [vmem:[#allocation7 + $0x68] sm:$0xff]
        %v622 = vld [vmem:[#allocation7 + $0x70] sm:$0xff]
        %v623 = vld [vmem:[#allocation7 + $0x78] sm:$0xff]
        %v624 = vld [vmem:[#allocation7 + $0x80] sm:$0xff]
        %v625 = vld [vmem:[#allocation7 + $0x88] sm:$0xff]
        %v626 = vld [vmem:[#allocation7 + $0x90] sm:$0xff]
        %v627 = vld [vmem:[#allocation7 + $0x98] sm:$0xff]
        %v628 = vld [vmem:[#allocation7 + $0xa0] sm:$0xff]
        %v629 = vld [vmem:[#allocation7 + $0xa8] sm:$0xff]
        %v630 = vld [vmem:[#allocation7 + $0xb0] sm:$0xff]
        %v631 = vld [vmem:[#allocation7 + $0xb8] sm:$0xff]
        %v632 = vld [vmem:[#allocation7 + $0xc0] sm:$0xff]
        %v633 = vld [vmem:[#allocation7 + $0xc8] sm:$0xff]
        %v634 = vld [vmem:[#allocation7 + $0xd0] sm:$0xff]
        %v635 = vld [vmem:[#allocation7 + $0xd8] sm:$0xff]
        %v636 = vld [vmem:[#allocation7 + $0xe0] sm:$0xff]
        %v637 = vld [vmem:[#allocation7 + $0xe8] sm:$0xff]
        %v638 = vld [vmem:[#allocation7 + $0xf0] sm:$0xff]
        %v639 = vld [vmem:[#allocation7 + $0xf8] sm:$0xff]
        %v644 = vunpack.c.l.b16 %v604
        %v645 = vunpack.c.h.b16 %v604
        %v646 = vunpack.c.l.b16 %v605
        %v647 = vunpack.c.h.b16 %v605
        %v648 = vunpack.c.l.b16 %v606
        %v649 = vunpack.c.h.b16 %v606
        %v650 = vunpack.c.l.b16 %v607
        %v651 = vunpack.c.h.b16 %v607
        %v652 = vpack.c.b16 %v646, %v644
        %v653 = vpack.c.b16 %v647, %v645
        %v654 = vpack.c.b16 %v650, %v648
        %v655 = vpack.c.b16 %v651, %v649
        %v692 = vunpack.c.l.b16 %v608
        %v693 = vunpack.c.h.b16 %v608
        %v694 = vunpack.c.l.b16 %v609
        %v695 = vunpack.c.h.b16 %v609
        %v696 = vunpack.c.l.b16 %v610
        %v697 = vunpack.c.h.b16 %v610
        %v698 = vunpack.c.l.b16 %v611
        %v699 = vunpack.c.h.b16 %v611
        %v700 = vunpack.c.l.b16 %v612
        %v701 = vunpack.c.h.b16 %v612
        %v702 = vunpack.c.l.b16 %v613
        %v703 = vunpack.c.h.b16 %v613
        %v704 = vunpack.c.l.b16 %v614
        %v705 = vunpack.c.h.b16 %v614
        %v706 = vunpack.c.l.b16 %v615
        %v707 = vunpack.c.h.b16 %v615
        %v708 = vunpack.c.l.b16 %v616
        %v709 = vunpack.c.h.b16 %v616
        %v710 = vunpack.c.l.b16 %v617
        %v711 = vunpack.c.h.b16 %v617
        %v712 = vunpack.c.l.b16 %v618
        %v713 = vunpack.c.h.b16 %v618
        %v714 = vunpack.c.l.b16 %v619
        %v715 = vunpack.c.h.b16 %v619
        %v716 = vunpack.c.l.b16 %v620
        %v717 = vunpack.c.h.b16 %v620
        %v718 = vunpack.c.l.b16 %v621
        %v719 = vunpack.c.h.b16 %v621
        %v720 = vunpack.c.l.b16 %v622
        %v721 = vunpack.c.h.b16 %v622
        %v722 = vunpack.c.l.b16 %v623
        %v723 = vunpack.c.h.b16 %v623
        %v724 = vunpack.c.l.b16 %v624
        %v725 = vunpack.c.h.b16 %v624
        %v726 = vunpack.c.l.b16 %v625
        %v727 = vunpack.c.h.b16 %v625
        %v728 = vunpack.c.l.b16 %v626
        %v729 = vunpack.c.h.b16 %v626
        %v730 = vunpack.c.l.b16 %v627
        %v731 = vunpack.c.h.b16 %v627
        %v732 = vunpack.c.l.b16 %v628
        %v733 = vunpack.c.h.b16 %v628
        %v734 = vunpack.c.l.b16 %v629
        %v735 = vunpack.c.h.b16 %v629
        %v736 = vunpack.c.l.b16 %v630
        %v737 = vunpack.c.h.b16 %v630
        %v738 = vunpack.c.l.b16 %v631
        %v739 = vunpack.c.h.b16 %v631
        %v740 = vunpack.c.l.b16 %v632
        %v741 = vunpack.c.h.b16 %v632
        %v742 = vunpack.c.l.b16 %v633
        %v743 = vunpack.c.h.b16 %v633
        %v744 = vunpack.c.l.b16 %v634
        %v745 = vunpack.c.h.b16 %v634
        %v746 = vunpack.c.l.b16 %v635
        %v747 = vunpack.c.h.b16 %v635
        %v748 = vunpack.c.l.b16 %v636
        %v749 = vunpack.c.h.b16 %v636
        %v750 = vunpack.c.l.b16 %v637
        %v751 = vunpack.c.h.b16 %v637
        %v752 = vunpack.c.l.b16 %v638
        %v753 = vunpack.c.h.b16 %v638
        %v754 = vunpack.c.l.b16 %v639
        %v755 = vunpack.c.h.b16 %v639
        %v756 = vpack.c.b16 %v694, %v692
        %v757 = vpack.c.b16 %v695, %v693
        %v758 = vpack.c.b16 %v698, %v696
        %v759 = vpack.c.b16 %v699, %v697
        %v760 = vpack.c.b16 %v702, %v700
        %v761 = vpack.c.b16 %v703, %v701
        %v762 = vpack.c.b16 %v706, %v704
        %v763 = vpack.c.b16 %v707, %v705
        %v764 = vpack.c.b16 %v710, %v708
        %v765 = vpack.c.b16 %v711, %v709
        %v766 = vpack.c.b16 %v714, %v712
        %v767 = vpack.c.b16 %v715, %v713
        %v768 = vpack.c.b16 %v718, %v716
        %v769 = vpack.c.b16 %v719, %v717
        %v770 = vpack.c.b16 %v722, %v720
        %v771 = vpack.c.b16 %v723, %v721
        %v772 = vpack.c.b16 %v726, %v724
        %v773 = vpack.c.b16 %v727, %v725
        %v774 = vpack.c.b16 %v730, %v728
        %v775 = vpack.c.b16 %v731, %v729
        %v776 = vpack.c.b16 %v734, %v732
        %v777 = vpack.c.b16 %v735, %v733
        %v778 = vpack.c.b16 %v738, %v736
        %v779 = vpack.c.b16 %v739, %v737
        %v780 = vpack.c.b16 %v742, %v740
        %v781 = vpack.c.b16 %v743, %v741
        %v782 = vpack.c.b16 %v746, %v744
        %v783 = vpack.c.b16 %v747, %v745
        %v784 = vpack.c.b16 %v750, %v748
        %v785 = vpack.c.b16 %v751, %v749
        %v786 = vpack.c.b16 %v754, %v752
        %v787 = vpack.c.b16 %v755, %v753
        %820 = vmatpush.bf16.msra.mxu0 %v770
        %821 = vmatpush.bf16.msra.mxu0 %v768
        %822 = vmatpush.bf16.msra.mxu0 %v766
        %823 = vmatpush.bf16.msra.mxu0 %v764
        %824 = vmatpush.bf16.msra.mxu0 %v762
        %825 = vmatpush.bf16.msra.mxu0 %v760
        %826 = vmatpush.bf16.msra.mxu0 %v758
        %827 = vmatpush.bf16.msra.mxu0 %v756
        %828 = vmatmul.bf16.gmra.mxu0 %v652
        %v829 = vpop.f32.mrf.mxu0
        %v830 = vadd.f32 0.0, %v829
        %v831 = vpop.f32.mrf.mxu0
        %v832 = vadd.f32 0.0, %v831
        %833 = vmatmul.bf16.gmra.mxu0 %v654
        %v834 = vpop.f32.mrf.mxu0
        %v835 = vadd.f32 0.0, %v834
        %v836 = vpop.f32.mrf.mxu0
        %v837 = vadd.f32 0.0, %v836
        %838 = vdwg.mxu0
        %839 = vmatpush.bf16.msra.mxu0 %v786
        %840 = vmatpush.bf16.msra.mxu0 %v784
        %841 = vmatpush.bf16.msra.mxu0 %v782
        %842 = vmatpush.bf16.msra.mxu0 %v780
        %843 = vmatpush.bf16.msra.mxu0 %v778
        %844 = vmatpush.bf16.msra.mxu0 %v776
        %845 = vmatpush.bf16.msra.mxu0 %v774
        %846 = vmatpush.bf16.msra.mxu0 %v772
        %847 = vmatmul.bf16.gmra.mxu0 %v653
        %v848 = vpop.f32.mrf.mxu0
        %v849 = vadd.f32 %v830, %v848
        %v850 = vpop.f32.mrf.mxu0
        %v851 = vadd.f32 %v832, %v850
        %852 = vmatmul.bf16.gmra.mxu0 %v655
        %v853 = vpop.f32.mrf.mxu0
        %v854 = vadd.f32 %v835, %v853
        %v855 = vpop.f32.mrf.mxu0
        %v856 = vadd.f32 %v837, %v855
        %857 = vdwg.mxu0
        %858 = vmatpush.bf16.msra.mxu0 %v771
        %859 = vmatpush.bf16.msra.mxu0 %v769
        %860 = vmatpush.bf16.msra.mxu0 %v767
        %861 = vmatpush.bf16.msra.mxu0 %v765
        %862 = vmatpush.bf16.msra.mxu0 %v763
        %863 = vmatpush.bf16.msra.mxu0 %v761
        %864 = vmatpush.bf16.msra.mxu0 %v759
        %865 = vmatpush.bf16.msra.mxu0 %v757
        %866 = vmatmul.bf16.gmra.mxu0 %v652
        %v867 = vpop.f32.mrf.mxu0
        %v868 = vadd.f32 0.0, %v867
        %v869 = vpop.f32.mrf.mxu0
        %v870 = vadd.f32 0.0, %v869
        %871 = vmatmul.bf16.gmra.mxu0 %v654
        %v872 = vpop.f32.mrf.mxu0
        %v873 = vadd.f32 0.0, %v872
        %v874 = vpop.f32.mrf.mxu0
        %v875 = vadd.f32 0.0, %v874
        %876 = vdwg.mxu0
        %877 = vmatpush.bf16.msra.mxu0 %v787
        %878 = vmatpush.bf16.msra.mxu0 %v785
        %879 = vmatpush.bf16.msra.mxu0 %v783
        %880 = vmatpush.bf16.msra.mxu0 %v781
        %881 = vmatpush.bf16.msra.mxu0 %v779
        %882 = vmatpush.bf16.msra.mxu0 %v777
        %883 = vmatpush.bf16.msra.mxu0 %v775
        %884 = vmatpush.bf16.msra.mxu0 %v773
        %885 = vmatmul.bf16.gmra.mxu0 %v653
        %v886 = vpop.f32.mrf.mxu0
        %v887 = vadd.f32 %v868, %v886
        %v888 = vpop.f32.mrf.mxu0
        %v889 = vadd.f32 %v870, %v888
        %890 = vmatmul.bf16.gmra.mxu0 %v655
        %v891 = vpop.f32.mrf.mxu0
        %v892 = vadd.f32 %v873, %v891
        %v893 = vpop.f32.mrf.mxu0
        %v894 = vadd.f32 %v875, %v893
        %895 = vdwg.mxu0
        %v896 = vadd.f32 %v596, %v849
        %v897 = vadd.f32 %v597, %v887
        %v898 = vadd.f32 %v598, %v851
        %v899 = vadd.f32 %v599, %v889
        %v900 = vadd.f32 %v600, %v854
        %v901 = vadd.f32 %v601, %v892
        %v902 = vadd.f32 %v602, %v856
        %v903 = vadd.f32 %v603, %v894
        %v904 = vpack.c.bf16 %v898, %v896
        %v905 = vpack.c.bf16 %v899, %v897
        %v906 = vpack.c.bf16 %v902, %v900
        %v907 = vpack.c.bf16 %v903, %v901
        %v908 = vld [vmem:[#allocation8] sm:$0xff]
        %v909 = vld [vmem:[#allocation8 + $0x8] sm:$0xff]
        %v910 = vld [vmem:[#allocation8 + $0x10] sm:$0xff]
        %v911 = vld [vmem:[#allocation8 + $0x18] sm:$0xff]
        %v912 = vld [vmem:[#allocation8 + $0x20] sm:$0xff]
        %v913 = vld [vmem:[#allocation8 + $0x28] sm:$0xff]
        %v914 = vld [vmem:[#allocation8 + $0x30] sm:$0xff]
        %v915 = vld [vmem:[#allocation8 + $0x38] sm:$0xff]
        %v916 = vld [vmem:[#allocation8 + $0x40] sm:$0xff]
        %v917 = vld [vmem:[#allocation8 + $0x48] sm:$0xff]
        %v918 = vld [vmem:[#allocation8 + $0x50] sm:$0xff]
        %v919 = vld [vmem:[#allocation8 + $0x58] sm:$0xff]
        %v920 = vld [vmem:[#allocation8 + $0x60] sm:$0xff]
        %v921 = vld [vmem:[#allocation8 + $0x68] sm:$0xff]
        %v922 = vld [vmem:[#allocation8 + $0x70] sm:$0xff]
        %v923 = vld [vmem:[#allocation8 + $0x78] sm:$0xff]
        %v924 = vld [vmem:[#allocation8 + $0x80] sm:$0xff]
        %v925 = vld [vmem:[#allocation8 + $0x88] sm:$0xff]
        %v926 = vld [vmem:[#allocation8 + $0x90] sm:$0xff]
        %v927 = vld [vmem:[#allocation8 + $0x98] sm:$0xff]
        %v928 = vld [vmem:[#allocation8 + $0xa0] sm:$0xff]
        %v929 = vld [vmem:[#allocation8 + $0xa8] sm:$0xff]
        %v930 = vld [vmem:[#allocation8 + $0xb0] sm:$0xff]
        %v931 = vld [vmem:[#allocation8 + $0xb8] sm:$0xff]
        %v932 = vld [vmem:[#allocation8 + $0xc0] sm:$0xff]
        %v933 = vld [vmem:[#allocation8 + $0xc8] sm:$0xff]
        %v934 = vld [vmem:[#allocation8 + $0xd0] sm:$0xff]
        %v935 = vld [vmem:[#allocation8 + $0xd8] sm:$0xff]
        %v936 = vld [vmem:[#allocation8 + $0xe0] sm:$0xff]
        %v937 = vld [vmem:[#allocation8 + $0xe8] sm:$0xff]
        %v938 = vld [vmem:[#allocation8 + $0xf0] sm:$0xff]
        %v939 = vld [vmem:[#allocation8 + $0xf8] sm:$0xff]
        %v940 = vld [vmem:[#allocation10] sm:$0x3]
        %v942 = vperm.slane %v940, 0
        %v943 = vperm.slane %v940, 1
        %v978 = vunpack.c.l.b16 %v908
        %v979 = vunpack.c.h.b16 %v908
        %v980 = vunpack.c.l.b16 %v909
        %v981 = vunpack.c.h.b16 %v909
        %v982 = vunpack.c.l.b16 %v910
        %v983 = vunpack.c.h.b16 %v910
        %v984 = vunpack.c.l.b16 %v911
        %v985 = vunpack.c.h.b16 %v911
        %v986 = vunpack.c.l.b16 %v912
        %v987 = vunpack.c.h.b16 %v912
        %v988 = vunpack.c.l.b16 %v913
        %v989 = vunpack.c.h.b16 %v913
        %v990 = vunpack.c.l.b16 %v914
        %v991 = vunpack.c.h.b16 %v914
        %v992 = vunpack.c.l.b16 %v915
        %v993 = vunpack.c.h.b16 %v915
        %v994 = vunpack.c.l.b16 %v916
        %v995 = vunpack.c.h.b16 %v916
        %v996 = vunpack.c.l.b16 %v917
        %v997 = vunpack.c.h.b16 %v917
        %v998 = vunpack.c.l.b16 %v918
        %v999 = vunpack.c.h.b16 %v918
        %v1000 = vunpack.c.l.b16 %v919
        %v1001 = vunpack.c.h.b16 %v919
        %v1002 = vunpack.c.l.b16 %v920
        %v1003 = vunpack.c.h.b16 %v920
        %v1004 = vunpack.c.l.b16 %v921
        %v1005 = vunpack.c.h.b16 %v921
        %v1006 = vunpack.c.l.b16 %v922
        %v1007 = vunpack.c.h.b16 %v922
        %v1008 = vunpack.c.l.b16 %v923
        %v1009 = vunpack.c.h.b16 %v923
        %v1010 = vunpack.c.l.b16 %v924
        %v1011 = vunpack.c.h.b16 %v924
        %v1012 = vunpack.c.l.b16 %v925
        %v1013 = vunpack.c.h.b16 %v925
        %v1014 = vunpack.c.l.b16 %v926
        %v1015 = vunpack.c.h.b16 %v926
        %v1016 = vunpack.c.l.b16 %v927
        %v1017 = vunpack.c.h.b16 %v927
        %v1018 = vunpack.c.l.b16 %v928
        %v1019 = vunpack.c.h.b16 %v928
        %v1020 = vunpack.c.l.b16 %v929
        %v1021 = vunpack.c.h.b16 %v929
        %v1022 = vunpack.c.l.b16 %v930
        %v1023 = vunpack.c.h.b16 %v930
        %v1024 = vunpack.c.l.b16 %v931
        %v1025 = vunpack.c.h.b16 %v931
        %v1026 = vunpack.c.l.b16 %v932
        %v1027 = vunpack.c.h.b16 %v932
        %v1028 = vunpack.c.l.b16 %v933
        %v1029 = vunpack.c.h.b16 %v933
        %v1030 = vunpack.c.l.b16 %v934
        %v1031 = vunpack.c.h.b16 %v934
        %v1032 = vunpack.c.l.b16 %v935
        %v1033 = vunpack.c.h.b16 %v935
        %v1034 = vunpack.c.l.b16 %v936
        %v1035 = vunpack.c.h.b16 %v936
        %v1036 = vunpack.c.l.b16 %v937
        %v1037 = vunpack.c.h.b16 %v937
        %v1038 = vunpack.c.l.b16 %v938
        %v1039 = vunpack.c.h.b16 %v938
        %v1040 = vunpack.c.l.b16 %v939
        %v1041 = vunpack.c.h.b16 %v939
        %v1042 = vpack.c.b16 %v980, %v978
        %v1043 = vpack.c.b16 %v981, %v979
        %v1044 = vpack.c.b16 %v984, %v982
        %v1045 = vpack.c.b16 %v985, %v983
        %v1046 = vpack.c.b16 %v988, %v986
        %v1047 = vpack.c.b16 %v989, %v987
        %v1048 = vpack.c.b16 %v992, %v990
        %v1049 = vpack.c.b16 %v993, %v991
        %v1050 = vpack.c.b16 %v996, %v994
        %v1051 = vpack.c.b16 %v997, %v995
        %v1052 = vpack.c.b16 %v1000, %v998
        %v1053 = vpack.c.b16 %v1001, %v999
        %v1054 = vpack.c.b16 %v1004, %v1002
        %v1055 = vpack.c.b16 %v1005, %v1003
        %v1056 = vpack.c.b16 %v1008, %v1006
        %v1057 = vpack.c.b16 %v1009, %v1007
        %v1058 = vpack.c.b16 %v1012, %v1010
        %v1059 = vpack.c.b16 %v1013, %v1011
        %v1060 = vpack.c.b16 %v1016, %v1014
        %v1061 = vpack.c.b16 %v1017, %v1015
        %v1062 = vpack.c.b16 %v1020, %v1018
        %v1063 = vpack.c.b16 %v1021, %v1019
        %v1064 = vpack.c.b16 %v1024, %v1022
        %v1065 = vpack.c.b16 %v1025, %v1023
        %v1066 = vpack.c.b16 %v1028, %v1026
        %v1067 = vpack.c.b16 %v1029, %v1027
        %v1068 = vpack.c.b16 %v1032, %v1030
        %v1069 = vpack.c.b16 %v1033, %v1031
        %v1070 = vpack.c.b16 %v1036, %v1034
        %v1071 = vpack.c.b16 %v1037, %v1035
        %v1072 = vpack.c.b16 %v1040, %v1038
        %v1073 = vpack.c.b16 %v1041, %v1039
        %1106 = vmatpush.bf16.msra.mxu0 %v1056
        %1107 = vmatpush.bf16.msra.mxu0 %v1054
        %1108 = vmatpush.bf16.msra.mxu0 %v1052
        %1109 = vmatpush.bf16.msra.mxu0 %v1050
        %1110 = vmatpush.bf16.msra.mxu0 %v1048
        %1111 = vmatpush.bf16.msra.mxu0 %v1046
        %1112 = vmatpush.bf16.msra.mxu0 %v1044
        %1113 = vmatpush.bf16.msra.mxu0 %v1042
        %1114 = vmatmul.bf16.gmra.mxu0 %v904
        %v1115 = vpop.f32.mrf.mxu0
        %v1116 = vadd.f32 %v942, %v1115
        %v1117 = vpop.f32.mrf.mxu0
        %v1118 = vadd.f32 %v942, %v1117
        %1119 = vmatmul.bf16.gmra.mxu0 %v906
        %v1120 = vpop.f32.mrf.mxu0
        %v1121 = vadd.f32 %v942, %v1120
        %v1122 = vpop.f32.mrf.mxu0
        %v1123 = vadd.f32 %v942, %v1122
        %1124 = vdwg.mxu0
        %1125 = vmatpush.bf16.msra.mxu0 %v1072
        %1126 = vmatpush.bf16.msra.mxu0 %v1070
        %1127 = vmatpush.bf16.msra.mxu0 %v1068
        %1128 = vmatpush.bf16.msra.mxu0 %v1066
        %1129 = vmatpush.bf16.msra.mxu0 %v1064
        %1130 = vmatpush.bf16.msra.mxu0 %v1062
        %1131 = vmatpush.bf16.msra.mxu0 %v1060
        %1132 = vmatpush.bf16.msra.mxu0 %v1058
        %1133 = vmatmul.bf16.gmra.mxu0 %v905
        %v1134 = vpop.f32.mrf.mxu0
        %v1135 = vadd.f32 %v1116, %v1134
        %v1136 = vpop.f32.mrf.mxu0
        %v1137 = vadd.f32 %v1118, %v1136
        %1138 = vmatmul.bf16.gmra.mxu0 %v907
        %v1139 = vpop.f32.mrf.mxu0
        %v1140 = vadd.f32 %v1121, %v1139
        %v1141 = vpop.f32.mrf.mxu0
        %v1142 = vadd.f32 %v1123, %v1141
        %1143 = vdwg.mxu0
        %1144 = vmatpush.bf16.msra.mxu0 %v1057
        %1145 = vmatpush.bf16.msra.mxu0 %v1055
        %1146 = vmatpush.bf16.msra.mxu0 %v1053
        %1147 = vmatpush.bf16.msra.mxu0 %v1051
        %1148 = vmatpush.bf16.msra.mxu0 %v1049
        %1149 = vmatpush.bf16.msra.mxu0 %v1047
        %1150 = vmatpush.bf16.msra.mxu0 %v1045
        %1151 = vmatpush.bf16.msra.mxu0 %v1043
        %1152 = vmatmul.bf16.gmra.mxu0 %v904
        %v1153 = vpop.f32.mrf.mxu0
        %v1154 = vadd.f32 %v943, %v1153
        %v1155 = vpop.f32.mrf.mxu0
        %v1156 = vadd.f32 %v943, %v1155
        %1157 = vmatmul.bf16.gmra.mxu0 %v906
        %v1158 = vpop.f32.mrf.mxu0
        %v1159 = vadd.f32 %v943, %v1158
        %v1160 = vpop.f32.mrf.mxu0
        %v1161 = vadd.f32 %v943, %v1160
        %1162 = vdwg.mxu0
        %1163 = vmatpush.bf16.msra.mxu0 %v1073
        %1164 = vmatpush.bf16.msra.mxu0 %v1071
        %1165 = vmatpush.bf16.msra.mxu0 %v1069
        %1166 = vmatpush.bf16.msra.mxu0 %v1067
        %1167 = vmatpush.bf16.msra.mxu0 %v1065
        %1168 = vmatpush.bf16.msra.mxu0 %v1063
        %1169 = vmatpush.bf16.msra.mxu0 %v1061
        %1170 = vmatpush.bf16.msra.mxu0 %v1059
        %1171 = vmatmul.bf16.gmra.mxu0 %v905
        %v1172 = vpop.f32.mrf.mxu0
        %v1173 = vadd.f32 %v1154, %v1172
        %v1174 = vpop.f32.mrf.mxu0
        %v1175 = vadd.f32 %v1156, %v1174
        %1176 = vmatmul.bf16.gmra.mxu0 %v907
        %v1177 = vpop.f32.mrf.mxu0
        %v1178 = vadd.f32 %v1159, %v1177
        %v1179 = vpop.f32.mrf.mxu0
        %v1180 = vadd.f32 %v1161, %v1179
        %1181 = vdwg.mxu0
        %v1182 = vmul.f32 %v896, %v1135
        %v1183 = vmul.f32 %v897, %v1173
        %v1184 = vmul.f32 %v898, %v1137
        %v1185 = vmul.f32 %v899, %v1175
        %v1186 = vmul.f32 %v900, %v1140
        %v1187 = vmul.f32 %v901, %v1178
        %v1188 = vmul.f32 %v902, %v1142
        %v1189 = vmul.f32 %v903, %v1180
        %v1190 = vadd.f32 %v1182, %v896
        %v1191 = vadd.f32 %v1183, %v897
        %v1192 = vadd.f32 %v1184, %v898
        %v1193 = vadd.f32 %v1185, %v899
        %v1194 = vadd.f32 %v1186, %v900
        %v1195 = vadd.f32 %v1187, %v901
        %v1196 = vadd.f32 %v1188, %v902
        %v1197 = vadd.f32 %v1189, %v903
        %v1198 = vpack.c.bf16 %v1192, %v1190
        %v1199 = vpack.c.bf16 %v1193, %v1191
        %v1200 = vpack.c.bf16 %v1196, %v1194
        %v1201 = vpack.c.bf16 %v1197, %v1195
        %s1202 = scalar_lea.vmem [#allocation8], 256
        %v1203 = vld [vmem:[%s1202] sm:$0xff]
        %v1204 = vld [vmem:[%s1202 + $0x8] sm:$0xff]
        %v1205 = vld [vmem:[%s1202 + $0x10] sm:$0xff]
        %v1206 = vld [vmem:[%s1202 + $0x18] sm:$0xff]
        %v1207 = vld [vmem:[%s1202 + $0x20] sm:$0xff]
        %v1208 = vld [vmem:[%s1202 + $0x28] sm:$0xff]
        %v1209 = vld [vmem:[%s1202 + $0x30] sm:$0xff]
        %v1210 = vld [vmem:[%s1202 + $0x38] sm:$0xff]
        %v1211 = vld [vmem:[%s1202 + $0x40] sm:$0xff]
        %v1212 = vld [vmem:[%s1202 + $0x48] sm:$0xff]
        %v1213 = vld [vmem:[%s1202 + $0x50] sm:$0xff]
        %v1214 = vld [vmem:[%s1202 + $0x58] sm:$0xff]
        %v1215 = vld [vmem:[%s1202 + $0x60] sm:$0xff]
        %v1216 = vld [vmem:[%s1202 + $0x68] sm:$0xff]
        %v1217 = vld [vmem:[%s1202 + $0x70] sm:$0xff]
        %v1218 = vld [vmem:[%s1202 + $0x78] sm:$0xff]
        %v1219 = vld [vmem:[%s1202 + $0x80] sm:$0xff]
        %v1220 = vld [vmem:[%s1202 + $0x88] sm:$0xff]
        %v1221 = vld [vmem:[%s1202 + $0x90] sm:$0xff]
        %v1222 = vld [vmem:[%s1202 + $0x98] sm:$0xff]
        %v1223 = vld [vmem:[%s1202 + $0xa0] sm:$0xff]
        %v1224 = vld [vmem:[%s1202 + $0xa8] sm:$0xff]
        %v1225 = vld [vmem:[%s1202 + $0xb0] sm:$0xff]
        %v1226 = vld [vmem:[%s1202 + $0xb8] sm:$0xff]
        %v1227 = vld [vmem:[%s1202 + $0xc0] sm:$0xff]
        %v1228 = vld [vmem:[%s1202 + $0xc8] sm:$0xff]
        %v1229 = vld [vmem:[%s1202 + $0xd0] sm:$0xff]
        %v1230 = vld [vmem:[%s1202 + $0xd8] sm:$0xff]
        %v1231 = vld [vmem:[%s1202 + $0xe0] sm:$0xff]
        %v1232 = vld [vmem:[%s1202 + $0xe8] sm:$0xff]
        %v1233 = vld [vmem:[%s1202 + $0xf0] sm:$0xff]
        %v1234 = vld [vmem:[%s1202 + $0xf8] sm:$0xff]
        %s1235 = scalar_lea.vmem [#allocation10], 2
        %v1236 = vld [vmem:[%s1235] sm:$0x3]
        %v1238 = vperm.slane %v1236, 0
        %v1239 = vperm.slane %v1236, 1
        %v1274 = vunpack.c.l.b16 %v1203
        %v1275 = vunpack.c.h.b16 %v1203
        %v1276 = vunpack.c.l.b16 %v1204
        %v1277 = vunpack.c.h.b16 %v1204
        %v1278 = vunpack.c.l.b16 %v1205
        %v1279 = vunpack.c.h.b16 %v1205
        %v1280 = vunpack.c.l.b16 %v1206
        %v1281 = vunpack.c.h.b16 %v1206
        %v1282 = vunpack.c.l.b16 %v1207
        %v1283 = vunpack.c.h.b16 %v1207
        %v1284 = vunpack.c.l.b16 %v1208
        %v1285 = vunpack.c.h.b16 %v1208
        %v1286 = vunpack.c.l.b16 %v1209
        %v1287 = vunpack.c.h.b16 %v1209
        %v1288 = vunpack.c.l.b16 %v1210
        %v1289 = vunpack.c.h.b16 %v1210
        %v1290 = vunpack.c.l.b16 %v1211
        %v1291 = vunpack.c.h.b16 %v1211
        %v1292 = vunpack.c.l.b16 %v1212
        %v1293 = vunpack.c.h.b16 %v1212
        %v1294 = vunpack.c.l.b16 %v1213
        %v1295 = vunpack.c.h.b16 %v1213
        %v1296 = vunpack.c.l.b16 %v1214
        %v1297 = vunpack.c.h.b16 %v1214
        %v1298 = vunpack.c.l.b16 %v1215
        %v1299 = vunpack.c.h.b16 %v1215
        %v1300 = vunpack.c.l.b16 %v1216
        %v1301 = vunpack.c.h.b16 %v1216
        %v1302 = vunpack.c.l.b16 %v1217
        %v1303 = vunpack.c.h.b16 %v1217
        %v1304 = vunpack.c.l.b16 %v1218
        %v1305 = vunpack.c.h.b16 %v1218
        %v1306 = vunpack.c.l.b16 %v1219
        %v1307 = vunpack.c.h.b16 %v1219
        %v1308 = vunpack.c.l.b16 %v1220
        %v1309 = vunpack.c.h.b16 %v1220
        %v1310 = vunpack.c.l.b16 %v1221
        %v1311 = vunpack.c.h.b16 %v1221
        %v1312 = vunpack.c.l.b16 %v1222
        %v1313 = vunpack.c.h.b16 %v1222
        %v1314 = vunpack.c.l.b16 %v1223
        %v1315 = vunpack.c.h.b16 %v1223
        %v1316 = vunpack.c.l.b16 %v1224
        %v1317 = vunpack.c.h.b16 %v1224
        %v1318 = vunpack.c.l.b16 %v1225
        %v1319 = vunpack.c.h.b16 %v1225
        %v1320 = vunpack.c.l.b16 %v1226
        %v1321 = vunpack.c.h.b16 %v1226
        %v1322 = vunpack.c.l.b16 %v1227
        %v1323 = vunpack.c.h.b16 %v1227
        %v1324 = vunpack.c.l.b16 %v1228
        %v1325 = vunpack.c.h.b16 %v1228
        %v1326 = vunpack.c.l.b16 %v1229
        %v1327 = vunpack.c.h.b16 %v1229
        %v1328 = vunpack.c.l.b16 %v1230
        %v1329 = vunpack.c.h.b16 %v1230
        %v1330 = vunpack.c.l.b16 %v1231
        %v1331 = vunpack.c.h.b16 %v1231
        %v1332 = vunpack.c.l.b16 %v1232
        %v1333 = vunpack.c.h.b16 %v1232
        %v1334 = vunpack.c.l.b16 %v1233
        %v1335 = vunpack.c.h.b16 %v1233
        %v1336 = vunpack.c.l.b16 %v1234
        %v1337 = vunpack.c.h.b16 %v1234
        %v1338 = vpack.c.b16 %v1276, %v1274
        %v1339 = vpack.c.b16 %v1277, %v1275
        %v1340 = vpack.c.b16 %v1280, %v1278
        %v1341 = vpack.c.b16 %v1281, %v1279
        %v1342 = vpack.c.b16 %v1284, %v1282
        %v1343 = vpack.c.b16 %v1285, %v1283
        %v1344 = vpack.c.b16 %v1288, %v1286
        %v1345 = vpack.c.b16 %v1289, %v1287
        %v1346 = vpack.c.b16 %v1292, %v1290
        %v1347 = vpack.c.b16 %v1293, %v1291
        %v1348 = vpack.c.b16 %v1296, %v1294
        %v1349 = vpack.c.b16 %v1297, %v1295
        %v1350 = vpack.c.b16 %v1300, %v1298
        %v1351 = vpack.c.b16 %v1301, %v1299
        %v1352 = vpack.c.b16 %v1304, %v1302
        %v1353 = vpack.c.b16 %v1305, %v1303
        %v1354 = vpack.c.b16 %v1308, %v1306
        %v1355 = vpack.c.b16 %v1309, %v1307
        %v1356 = vpack.c.b16 %v1312, %v1310
        %v1357 = vpack.c.b16 %v1313, %v1311
        %v1358 = vpack.c.b16 %v1316, %v1314
        %v1359 = vpack.c.b16 %v1317, %v1315
        %v1360 = vpack.c.b16 %v1320, %v1318
        %v1361 = vpack.c.b16 %v1321, %v1319
        %v1362 = vpack.c.b16 %v1324, %v1322
        %v1363 = vpack.c.b16 %v1325, %v1323
        %v1364 = vpack.c.b16 %v1328, %v1326
        %v1365 = vpack.c.b16 %v1329, %v1327
        %v1366 = vpack.c.b16 %v1332, %v1330
        %v1367 = vpack.c.b16 %v1333, %v1331
        %v1368 = vpack.c.b16 %v1336, %v1334
        %v1369 = vpack.c.b16 %v1337, %v1335
        %1402 = vmatpush.bf16.msra.mxu0 %v1352
        %1403 = vmatpush.bf16.msra.mxu0 %v1350
        %1404 = vmatpush.bf16.msra.mxu0 %v1348
        %1405 = vmatpush.bf16.msra.mxu0 %v1346
        %1406 = vmatpush.bf16.msra.mxu0 %v1344
        %1407 = vmatpush.bf16.msra.mxu0 %v1342
        %1408 = vmatpush.bf16.msra.mxu0 %v1340
        %1409 = vmatpush.bf16.msra.mxu0 %v1338
        %1410 = vmatmul.bf16.gmra.mxu0 %v1198
        %v1411 = vpop.f32.mrf.mxu0
        %v1412 = vadd.f32 %v1238, %v1411
        %v1413 = vpop.f32.mrf.mxu0
        %v1414 = vadd.f32 %v1238, %v1413
        %1415 = vmatmul.bf16.gmra.mxu0 %v1200
        %v1416 = vpop.f32.mrf.mxu0
        %v1417 = vadd.f32 %v1238, %v1416
        %v1418 = vpop.f32.mrf.mxu0
        %v1419 = vadd.f32 %v1238, %v1418
        %1420 = vdwg.mxu0
        %1421 = vmatpush.bf16.msra.mxu0 %v1368
        %1422 = vmatpush.bf16.msra.mxu0 %v1366
        %1423 = vmatpush.bf16.msra.mxu0 %v1364
        %1424 = vmatpush.bf16.msra.mxu0 %v1362
        %1425 = vmatpush.bf16.msra.mxu0 %v1360
        %1426 = vmatpush.bf16.msra.mxu0 %v1358
        %1427 = vmatpush.bf16.msra.mxu0 %v1356
        %1428 = vmatpush.bf16.msra.mxu0 %v1354
        %1429 = vmatmul.bf16.gmra.mxu0 %v1199
        %v1430 = vpop.f32.mrf.mxu0
        %v1431 = vadd.f32 %v1412, %v1430
        %v1432 = vpop.f32.mrf.mxu0
        %v1433 = vadd.f32 %v1414, %v1432
        %1434 = vmatmul.bf16.gmra.mxu0 %v1201
        %v1435 = vpop.f32.mrf.mxu0
        %v1436 = vadd.f32 %v1417, %v1435
        %v1437 = vpop.f32.mrf.mxu0
        %v1438 = vadd.f32 %v1419, %v1437
        %1439 = vdwg.mxu0
        %1440 = vmatpush.bf16.msra.mxu0 %v1353
        %1441 = vmatpush.bf16.msra.mxu0 %v1351
        %1442 = vmatpush.bf16.msra.mxu0 %v1349
        %1443 = vmatpush.bf16.msra.mxu0 %v1347
        %1444 = vmatpush.bf16.msra.mxu0 %v1345
        %1445 = vmatpush.bf16.msra.mxu0 %v1343
        %1446 = vmatpush.bf16.msra.mxu0 %v1341
        %1447 = vmatpush.bf16.msra.mxu0 %v1339
        %1448 = vmatmul.bf16.gmra.mxu0 %v1198
        %v1449 = vpop.f32.mrf.mxu0
        %v1450 = vadd.f32 %v1239, %v1449
        %v1451 = vpop.f32.mrf.mxu0
        %v1452 = vadd.f32 %v1239, %v1451
        %1453 = vmatmul.bf16.gmra.mxu0 %v1200
        %v1454 = vpop.f32.mrf.mxu0
        %v1455 = vadd.f32 %v1239, %v1454
        %v1456 = vpop.f32.mrf.mxu0
        %v1457 = vadd.f32 %v1239, %v1456
        %1458 = vdwg.mxu0
        %1459 = vmatpush.bf16.msra.mxu0 %v1369
        %1460 = vmatpush.bf16.msra.mxu0 %v1367
        %1461 = vmatpush.bf16.msra.mxu0 %v1365
        %1462 = vmatpush.bf16.msra.mxu0 %v1363
        %1463 = vmatpush.bf16.msra.mxu0 %v1361
        %1464 = vmatpush.bf16.msra.mxu0 %v1359
        %1465 = vmatpush.bf16.msra.mxu0 %v1357
        %1466 = vmatpush.bf16.msra.mxu0 %v1355
        %1467 = vmatmul.bf16.gmra.mxu0 %v1199
        %v1468 = vpop.f32.mrf.mxu0
        %v1469 = vadd.f32 %v1450, %v1468
        %v1470 = vpop.f32.mrf.mxu0
        %v1471 = vadd.f32 %v1452, %v1470
        %1472 = vmatmul.bf16.gmra.mxu0 %v1201
        %v1473 = vpop.f32.mrf.mxu0
        %v1474 = vadd.f32 %v1455, %v1473
        %v1475 = vpop.f32.mrf.mxu0
        %v1476 = vadd.f32 %v1457, %v1475
        %1477 = vdwg.mxu0
        %v1478 = vmul.f32 %v896, %v1431
        %v1479 = vmul.f32 %v897, %v1469
        %v1480 = vmul.f32 %v898, %v1433
        %v1481 = vmul.f32 %v899, %v1471
        %v1482 = vmul.f32 %v900, %v1436
        %v1483 = vmul.f32 %v901, %v1474
        %v1484 = vmul.f32 %v902, %v1438
        %v1485 = vmul.f32 %v903, %v1476
        %v1486 = vadd.f32 %v1478, %v1190
        %v1487 = vadd.f32 %v1479, %v1191
        %v1488 = vadd.f32 %v1480, %v1192
        %v1489 = vadd.f32 %v1481, %v1193
        %v1490 = vadd.f32 %v1482, %v1194
        %v1491 = vadd.f32 %v1483, %v1195
        %v1492 = vadd.f32 %v1484, %v1196
        %v1493 = vadd.f32 %v1485, %v1197
        %v1494 = vpack.c.bf16 %v1488, %v1486
        %v1495 = vpack.c.bf16 %v1489, %v1487
        %v1496 = vpack.c.bf16 %v1492, %v1490
        %v1497 = vpack.c.bf16 %v1493, %v1491
        %s1498 = scalar_lea.vmem [#allocation8], 512
        %v1499 = vld [vmem:[%s1498] sm:$0xff]
        %v1500 = vld [vmem:[%s1498 + $0x8] sm:$0xff]
        %v1501 = vld [vmem:[%s1498 + $0x10] sm:$0xff]
        %v1502 = vld [vmem:[%s1498 + $0x18] sm:$0xff]
        %v1503 = vld [vmem:[%s1498 + $0x20] sm:$0xff]
        %v1504 = vld [vmem:[%s1498 + $0x28] sm:$0xff]
        %v1505 = vld [vmem:[%s1498 + $0x30] sm:$0xff]
        %v1506 = vld [vmem:[%s1498 + $0x38] sm:$0xff]
        %v1507 = vld [vmem:[%s1498 + $0x40] sm:$0xff]
        %v1508 = vld [vmem:[%s1498 + $0x48] sm:$0xff]
        %v1509 = vld [vmem:[%s1498 + $0x50] sm:$0xff]
        %v1510 = vld [vmem:[%s1498 + $0x58] sm:$0xff]
        %v1511 = vld [vmem:[%s1498 + $0x60] sm:$0xff]
        %v1512 = vld [vmem:[%s1498 + $0x68] sm:$0xff]
        %v1513 = vld [vmem:[%s1498 + $0x70] sm:$0xff]
        %v1514 = vld [vmem:[%s1498 + $0x78] sm:$0xff]
        %v1515 = vld [vmem:[%s1498 + $0x80] sm:$0xff]
        %v1516 = vld [vmem:[%s1498 + $0x88] sm:$0xff]
        %v1517 = vld [vmem:[%s1498 + $0x90] sm:$0xff]
        %v1518 = vld [vmem:[%s1498 + $0x98] sm:$0xff]
        %v1519 = vld [vmem:[%s1498 + $0xa0] sm:$0xff]
        %v1520 = vld [vmem:[%s1498 + $0xa8] sm:$0xff]
        %v1521 = vld [vmem:[%s1498 + $0xb0] sm:$0xff]
        %v1522 = vld [vmem:[%s1498 + $0xb8] sm:$0xff]
        %v1523 = vld [vmem:[%s1498 + $0xc0] sm:$0xff]
        %v1524 = vld [vmem:[%s1498 + $0xc8] sm:$0xff]
        %v1525 = vld [vmem:[%s1498 + $0xd0] sm:$0xff]
        %v1526 = vld [vmem:[%s1498 + $0xd8] sm:$0xff]
        %v1527 = vld [vmem:[%s1498 + $0xe0] sm:$0xff]
        %v1528 = vld [vmem:[%s1498 + $0xe8] sm:$0xff]
        %v1529 = vld [vmem:[%s1498 + $0xf0] sm:$0xff]
        %v1530 = vld [vmem:[%s1498 + $0xf8] sm:$0xff]
        %s1531 = scalar_lea.vmem [#allocation10], 4
        %v1532 = vld [vmem:[%s1531] sm:$0x3]
        %v1534 = vperm.slane %v1532, 0
        %v1535 = vperm.slane %v1532, 1
        %v1570 = vunpack.c.l.b16 %v1499
        %v1571 = vunpack.c.h.b16 %v1499
        %v1572 = vunpack.c.l.b16 %v1500
        %v1573 = vunpack.c.h.b16 %v1500
        %v1574 = vunpack.c.l.b16 %v1501
        %v1575 = vunpack.c.h.b16 %v1501
        %v1576 = vunpack.c.l.b16 %v1502
        %v1577 = vunpack.c.h.b16 %v1502
        %v1578 = vunpack.c.l.b16 %v1503
        %v1579 = vunpack.c.h.b16 %v1503
        %v1580 = vunpack.c.l.b16 %v1504
        %v1581 = vunpack.c.h.b16 %v1504
        %v1582 = vunpack.c.l.b16 %v1505
        %v1583 = vunpack.c.h.b16 %v1505
        %v1584 = vunpack.c.l.b16 %v1506
        %v1585 = vunpack.c.h.b16 %v1506
        %v1586 = vunpack.c.l.b16 %v1507
        %v1587 = vunpack.c.h.b16 %v1507
        %v1588 = vunpack.c.l.b16 %v1508
        %v1589 = vunpack.c.h.b16 %v1508
        %v1590 = vunpack.c.l.b16 %v1509
        %v1591 = vunpack.c.h.b16 %v1509
        %v1592 = vunpack.c.l.b16 %v1510
        %v1593 = vunpack.c.h.b16 %v1510
        %v1594 = vunpack.c.l.b16 %v1511
        %v1595 = vunpack.c.h.b16 %v1511
        %v1596 = vunpack.c.l.b16 %v1512
        %v1597 = vunpack.c.h.b16 %v1512
        %v1598 = vunpack.c.l.b16 %v1513
        %v1599 = vunpack.c.h.b16 %v1513
        %v1600 = vunpack.c.l.b16 %v1514
        %v1601 = vunpack.c.h.b16 %v1514
        %v1602 = vunpack.c.l.b16 %v1515
        %v1603 = vunpack.c.h.b16 %v1515
        %v1604 = vunpack.c.l.b16 %v1516
        %v1605 = vunpack.c.h.b16 %v1516
        %v1606 = vunpack.c.l.b16 %v1517
        %v1607 = vunpack.c.h.b16 %v1517
        %v1608 = vunpack.c.l.b16 %v1518
        %v1609 = vunpack.c.h.b16 %v1518
        %v1610 = vunpack.c.l.b16 %v1519
        %v1611 = vunpack.c.h.b16 %v1519
        %v1612 = vunpack.c.l.b16 %v1520
        %v1613 = vunpack.c.h.b16 %v1520
        %v1614 = vunpack.c.l.b16 %v1521
        %v1615 = vunpack.c.h.b16 %v1521
        %v1616 = vunpack.c.l.b16 %v1522
        %v1617 = vunpack.c.h.b16 %v1522
        %v1618 = vunpack.c.l.b16 %v1523
        %v1619 = vunpack.c.h.b16 %v1523
        %v1620 = vunpack.c.l.b16 %v1524
        %v1621 = vunpack.c.h.b16 %v1524
        %v1622 = vunpack.c.l.b16 %v1525
        %v1623 = vunpack.c.h.b16 %v1525
        %v1624 = vunpack.c.l.b16 %v1526
        %v1625 = vunpack.c.h.b16 %v1526
        %v1626 = vunpack.c.l.b16 %v1527
        %v1627 = vunpack.c.h.b16 %v1527
        %v1628 = vunpack.c.l.b16 %v1528
        %v1629 = vunpack.c.h.b16 %v1528
        %v1630 = vunpack.c.l.b16 %v1529
        %v1631 = vunpack.c.h.b16 %v1529
        %v1632 = vunpack.c.l.b16 %v1530
        %v1633 = vunpack.c.h.b16 %v1530
        %v1634 = vpack.c.b16 %v1572, %v1570
        %v1635 = vpack.c.b16 %v1573, %v1571
        %v1636 = vpack.c.b16 %v1576, %v1574
        %v1637 = vpack.c.b16 %v1577, %v1575
        %v1638 = vpack.c.b16 %v1580, %v1578
        %v1639 = vpack.c.b16 %v1581, %v1579
        %v1640 = vpack.c.b16 %v1584, %v1582
        %v1641 = vpack.c.b16 %v1585, %v1583
        %v1642 = vpack.c.b16 %v1588, %v1586
        %v1643 = vpack.c.b16 %v1589, %v1587
        %v1644 = vpack.c.b16 %v1592, %v1590
        %v1645 = vpack.c.b16 %v1593, %v1591
        %v1646 = vpack.c.b16 %v1596, %v1594
        %v1647 = vpack.c.b16 %v1597, %v1595
        %v1648 = vpack.c.b16 %v1600, %v1598
        %v1649 = vpack.c.b16 %v1601, %v1599
        %v1650 = vpack.c.b16 %v1604, %v1602
        %v1651 = vpack.c.b16 %v1605, %v1603
        %v1652 = vpack.c.b16 %v1608, %v1606
        %v1653 = vpack.c.b16 %v1609, %v1607
        %v1654 = vpack.c.b16 %v1612, %v1610
        %v1655 = vpack.c.b16 %v1613, %v1611
        %v1656 = vpack.c.b16 %v1616, %v1614
        %v1657 = vpack.c.b16 %v1617, %v1615
        %v1658 = vpack.c.b16 %v1620, %v1618
        %v1659 = vpack.c.b16 %v1621, %v1619
        %v1660 = vpack.c.b16 %v1624, %v1622
        %v1661 = vpack.c.b16 %v1625, %v1623
        %v1662 = vpack.c.b16 %v1628, %v1626
        %v1663 = vpack.c.b16 %v1629, %v1627
        %v1664 = vpack.c.b16 %v1632, %v1630
        %v1665 = vpack.c.b16 %v1633, %v1631
        %1698 = vmatpush.bf16.msra.mxu0 %v1648
        %1699 = vmatpush.bf16.msra.mxu0 %v1646
        %1700 = vmatpush.bf16.msra.mxu0 %v1644
        %1701 = vmatpush.bf16.msra.mxu0 %v1642
        %1702 = vmatpush.bf16.msra.mxu0 %v1640
        %1703 = vmatpush.bf16.msra.mxu0 %v1638
        %1704 = vmatpush.bf16.msra.mxu0 %v1636
        %1705 = vmatpush.bf16.msra.mxu0 %v1634
        %1706 = vmatmul.bf16.gmra.mxu0 %v1494
        %v1707 = vpop.f32.mrf.mxu0
        %v1708 = vadd.f32 %v1534, %v1707
        %v1709 = vpop.f32.mrf.mxu0
        %v1710 = vadd.f32 %v1534, %v1709
        %1711 = vmatmul.bf16.gmra.mxu0 %v1496
        %v1712 = vpop.f32.mrf.mxu0
        %v1713 = vadd.f32 %v1534, %v1712
        %v1714 = vpop.f32.mrf.mxu0
        %v1715 = vadd.f32 %v1534, %v1714
        %1716 = vdwg.mxu0
        %1717 = vmatpush.bf16.msra.mxu0 %v1664
        %1718 = vmatpush.bf16.msra.mxu0 %v1662
        %1719 = vmatpush.bf16.msra.mxu0 %v1660
        %1720 = vmatpush.bf16.msra.mxu0 %v1658
        %1721 = vmatpush.bf16.msra.mxu0 %v1656
        %1722 = vmatpush.bf16.msra.mxu0 %v1654
        %1723 = vmatpush.bf16.msra.mxu0 %v1652
        %1724 = vmatpush.bf16.msra.mxu0 %v1650
        %1725 = vmatmul.bf16.gmra.mxu0 %v1495
        %v1726 = vpop.f32.mrf.mxu0
        %v1727 = vadd.f32 %v1708, %v1726
        %v1728 = vpop.f32.mrf.mxu0
        %v1729 = vadd.f32 %v1710, %v1728
        %1730 = vmatmul.bf16.gmra.mxu0 %v1497
        %v1731 = vpop.f32.mrf.mxu0
        %v1732 = vadd.f32 %v1713, %v1731
        %v1733 = vpop.f32.mrf.mxu0
        %v1734 = vadd.f32 %v1715, %v1733
        %1735 = vdwg.mxu0
        %1736 = vmatpush.bf16.msra.mxu0 %v1649
        %1737 = vmatpush.bf16.msra.mxu0 %v1647
        %1738 = vmatpush.bf16.msra.mxu0 %v1645
        %1739 = vmatpush.bf16.msra.mxu0 %v1643
        %1740 = vmatpush.bf16.msra.mxu0 %v1641
        %1741 = vmatpush.bf16.msra.mxu0 %v1639
        %1742 = vmatpush.bf16.msra.mxu0 %v1637
        %1743 = vmatpush.bf16.msra.mxu0 %v1635
        %1744 = vmatmul.bf16.gmra.mxu0 %v1494
        %v1745 = vpop.f32.mrf.mxu0
        %v1746 = vadd.f32 %v1535, %v1745
        %v1747 = vpop.f32.mrf.mxu0
        %v1748 = vadd.f32 %v1535, %v1747
        %1749 = vmatmul.bf16.gmra.mxu0 %v1496
        %v1750 = vpop.f32.mrf.mxu0
        %v1751 = vadd.f32 %v1535, %v1750
        %v1752 = vpop.f32.mrf.mxu0
        %v1753 = vadd.f32 %v1535, %v1752
        %1754 = vdwg.mxu0
        %1755 = vmatpush.bf16.msra.mxu0 %v1665
        %1756 = vmatpush.bf16.msra.mxu0 %v1663
        %1757 = vmatpush.bf16.msra.mxu0 %v1661
        %1758 = vmatpush.bf16.msra.mxu0 %v1659
        %1759 = vmatpush.bf16.msra.mxu0 %v1657
        %1760 = vmatpush.bf16.msra.mxu0 %v1655
        %1761 = vmatpush.bf16.msra.mxu0 %v1653
        %1762 = vmatpush.bf16.msra.mxu0 %v1651
        %1763 = vmatmul.bf16.gmra.mxu0 %v1495
        %v1764 = vpop.f32.mrf.mxu0
        %v1765 = vadd.f32 %v1746, %v1764
        %v1766 = vpop.f32.mrf.mxu0
        %v1767 = vadd.f32 %v1748, %v1766
        %1768 = vmatmul.bf16.gmra.mxu0 %v1497
        %v1769 = vpop.f32.mrf.mxu0
        %v1770 = vadd.f32 %v1751, %v1769
        %v1771 = vpop.f32.mrf.mxu0
        %v1772 = vadd.f32 %v1753, %v1771
        %1773 = vdwg.mxu0
        %v1774 = vmul.f32 %v896, %v1727
        %v1775 = vmul.f32 %v897, %v1765
        %v1776 = vmul.f32 %v898, %v1729
        %v1777 = vmul.f32 %v899, %v1767
        %v1778 = vmul.f32 %v900, %v1732
        %v1779 = vmul.f32 %v901, %v1770
        %v1780 = vmul.f32 %v902, %v1734
        %v1781 = vmul.f32 %v903, %v1772
        %v1782 = vadd.f32 %v1774, %v1486
        %v1783 = vadd.f32 %v1775, %v1487
        %v1784 = vadd.f32 %v1776, %v1488
        %v1785 = vadd.f32 %v1777, %v1489
        %v1786 = vadd.f32 %v1778, %v1490
        %v1787 = vadd.f32 %v1779, %v1491
        %v1788 = vadd.f32 %v1780, %v1492
        %v1789 = vadd.f32 %v1781, %v1493
        %v1790 = vld [vmem:[#allocation11] sm:$0xff]
        %v1791 = vld [vmem:[#allocation11 + $0x8] sm:$0xff]
        %v1792 = vld [vmem:[#allocation11 + $0x10] sm:$0xff]
        %v1793 = vld [vmem:[#allocation11 + $0x18] sm:$0xff]
        %v1794 = vld [vmem:[#allocation11 + $0x20] sm:$0xff]
        %v1795 = vld [vmem:[#allocation11 + $0x28] sm:$0xff]
        %v1796 = vld [vmem:[#allocation11 + $0x30] sm:$0xff]
        %v1797 = vld [vmem:[#allocation11 + $0x38] sm:$0xff]
        %v1798 = vld [vmem:[#allocation11 + $0x40] sm:$0xff]
        %v1799 = vld [vmem:[#allocation11 + $0x48] sm:$0xff]
        %v1800 = vld [vmem:[#allocation11 + $0x50] sm:$0xff]
        %v1801 = vld [vmem:[#allocation11 + $0x58] sm:$0xff]
        %v1802 = vld [vmem:[#allocation11 + $0x60] sm:$0xff]
        %v1803 = vld [vmem:[#allocation11 + $0x68] sm:$0xff]
        %v1804 = vld [vmem:[#allocation11 + $0x70] sm:$0xff]
        %v1805 = vld [vmem:[#allocation11 + $0x78] sm:$0xff]
        %v1806 = vld [vmem:[#allocation11 + $0x80] sm:$0xff]
        %v1807 = vld [vmem:[#allocation11 + $0x88] sm:$0xff]
        %v1808 = vld [vmem:[#allocation11 + $0x90] sm:$0xff]
        %v1809 = vld [vmem:[#allocation11 + $0x98] sm:$0xff]
        %v1810 = vld [vmem:[#allocation11 + $0xa0] sm:$0xff]
        %v1811 = vld [vmem:[#allocation11 + $0xa8] sm:$0xff]
        %v1812 = vld [vmem:[#allocation11 + $0xb0] sm:$0xff]
        %v1813 = vld [vmem:[#allocation11 + $0xb8] sm:$0xff]
        %v1814 = vld [vmem:[#allocation11 + $0xc0] sm:$0xff]
        %v1815 = vld [vmem:[#allocation11 + $0xc8] sm:$0xff]
        %v1816 = vld [vmem:[#allocation11 + $0xd0] sm:$0xff]
        %v1817 = vld [vmem:[#allocation11 + $0xd8] sm:$0xff]
        %v1818 = vld [vmem:[#allocation11 + $0xe0] sm:$0xff]
        %v1819 = vld [vmem:[#allocation11 + $0xe8] sm:$0xff]
        %v1820 = vld [vmem:[#allocation11 + $0xf0] sm:$0xff]
        %v1821 = vld [vmem:[#allocation11 + $0xf8] sm:$0xff]
        %v1822 = vld [vmem:[#allocation11 + $0x100] sm:$0xff]
        %v1823 = vld [vmem:[#allocation11 + $0x108] sm:$0xff]
        %v1824 = vld [vmem:[#allocation11 + $0x110] sm:$0xff]
        %v1825 = vld [vmem:[#allocation11 + $0x118] sm:$0xff]
        %v1826 = vld [vmem:[#allocation11 + $0x120] sm:$0xff]
        %v1827 = vld [vmem:[#allocation11 + $0x128] sm:$0xff]
        %v1828 = vld [vmem:[#allocation11 + $0x130] sm:$0xff]
        %v1829 = vld [vmem:[#allocation11 + $0x138] sm:$0xff]
        %v1830 = vld [vmem:[#allocation11 + $0x140] sm:$0xff]
        %v1831 = vld [vmem:[#allocation11 + $0x148] sm:$0xff]
        %v1832 = vld [vmem:[#allocation11 + $0x150] sm:$0xff]
        %v1833 = vld [vmem:[#allocation11 + $0x158] sm:$0xff]
        %v1834 = vld [vmem:[#allocation11 + $0x160] sm:$0xff]
        %v1835 = vld [vmem:[#allocation11 + $0x168] sm:$0xff]
        %v1836 = vld [vmem:[#allocation11 + $0x170] sm:$0xff]
        %v1837 = vld [vmem:[#allocation11 + $0x178] sm:$0xff]
        %v1838 = vld [vmem:[#allocation11 + $0x180] sm:$0xff]
        %v1839 = vld [vmem:[#allocation11 + $0x188] sm:$0xff]
        %v1840 = vld [vmem:[#allocation11 + $0x190] sm:$0xff]
        %v1841 = vld [vmem:[#allocation11 + $0x198] sm:$0xff]
        %v1842 = vld [vmem:[#allocation11 + $0x1a0] sm:$0xff]
        %v1843 = vld [vmem:[#allocation11 + $0x1a8] sm:$0xff]
        %v1844 = vld [vmem:[#allocation11 + $0x1b0] sm:$0xff]
        %v1845 = vld [vmem:[#allocation11 + $0x1b8] sm:$0xff]
        %v1846 = vld [vmem:[#allocation11 + $0x1c0] sm:$0xff]
        %v1847 = vld [vmem:[#allocation11 + $0x1c8] sm:$0xff]
        %v1848 = vld [vmem:[#allocation11 + $0x1d0] sm:$0xff]
        %v1849 = vld [vmem:[#allocation11 + $0x1d8] sm:$0xff]
        %v1850 = vld [vmem:[#allocation11 + $0x1e0] sm:$0xff]
        %v1851 = vld [vmem:[#allocation11 + $0x1e8] sm:$0xff]
        %v1852 = vld [vmem:[#allocation11 + $0x1f0] sm:$0xff]
        %v1853 = vld [vmem:[#allocation11 + $0x1f8] sm:$0xff]
        %v1854 = vld [vmem:[%s6] sm:$0xf]
        %v1856 = vperm.slane %v1854, 0
        %v1857 = vperm.slane %v1854, 1
        %v1858 = vperm.slane %v1854, 2
        %v1859 = vperm.slane %v1854, 3
        %v1928 = vunpack.c.l.b16 %v1790
        %v1929 = vunpack.c.h.b16 %v1790
        %v1930 = vunpack.c.l.b16 %v1791
        %v1931 = vunpack.c.h.b16 %v1791
        %v1932 = vunpack.c.l.b16 %v1792
        %v1933 = vunpack.c.h.b16 %v1792
        %v1934 = vunpack.c.l.b16 %v1793
        %v1935 = vunpack.c.h.b16 %v1793
        %v1936 = vunpack.c.l.b16 %v1794
        %v1937 = vunpack.c.h.b16 %v1794
        %v1938 = vunpack.c.l.b16 %v1795
        %v1939 = vunpack.c.h.b16 %v1795
        %v1940 = vunpack.c.l.b16 %v1796
        %v1941 = vunpack.c.h.b16 %v1796
        %v1942 = vunpack.c.l.b16 %v1797
        %v1943 = vunpack.c.h.b16 %v1797
        %v1944 = vunpack.c.l.b16 %v1798
        %v1945 = vunpack.c.h.b16 %v1798
        %v1946 = vunpack.c.l.b16 %v1799
        %v1947 = vunpack.c.h.b16 %v1799
        %v1948 = vunpack.c.l.b16 %v1800
        %v1949 = vunpack.c.h.b16 %v1800
        %v1950 = vunpack.c.l.b16 %v1801
        %v1951 = vunpack.c.h.b16 %v1801
        %v1952 = vunpack.c.l.b16 %v1802
        %v1953 = vunpack.c.h.b16 %v1802
        %v1954 = vunpack.c.l.b16 %v1803
        %v1955 = vunpack.c.h.b16 %v1803
        %v1956 = vunpack.c.l.b16 %v1804
        %v1957 = vunpack.c.h.b16 %v1804
        %v1958 = vunpack.c.l.b16 %v1805
        %v1959 = vunpack.c.h.b16 %v1805
        %v1960 = vunpack.c.l.b16 %v1806
        %v1961 = vunpack.c.h.b16 %v1806
        %v1962 = vunpack.c.l.b16 %v1807
        %v1963 = vunpack.c.h.b16 %v1807
        %v1964 = vunpack.c.l.b16 %v1808
        %v1965 = vunpack.c.h.b16 %v1808
        %v1966 = vunpack.c.l.b16 %v1809
        %v1967 = vunpack.c.h.b16 %v1809
        %v1968 = vunpack.c.l.b16 %v1810
        %v1969 = vunpack.c.h.b16 %v1810
        %v1970 = vunpack.c.l.b16 %v1811
        %v1971 = vunpack.c.h.b16 %v1811
        %v1972 = vunpack.c.l.b16 %v1812
        %v1973 = vunpack.c.h.b16 %v1812
        %v1974 = vunpack.c.l.b16 %v1813
        %v1975 = vunpack.c.h.b16 %v1813
        %v1976 = vunpack.c.l.b16 %v1814
        %v1977 = vunpack.c.h.b16 %v1814
        %v1978 = vunpack.c.l.b16 %v1815
        %v1979 = vunpack.c.h.b16 %v1815
        %v1980 = vunpack.c.l.b16 %v1816
        %v1981 = vunpack.c.h.b16 %v1816
        %v1982 = vunpack.c.l.b16 %v1817
        %v1983 = vunpack.c.h.b16 %v1817
        %v1984 = vunpack.c.l.b16 %v1818
        %v1985 = vunpack.c.h.b16 %v1818
        %v1986 = vunpack.c.l.b16 %v1819
        %v1987 = vunpack.c.h.b16 %v1819
        %v1988 = vunpack.c.l.b16 %v1820
        %v1989 = vunpack.c.h.b16 %v1820
        %v1990 = vunpack.c.l.b16 %v1821
        %v1991 = vunpack.c.h.b16 %v1821
        %v1992 = vunpack.c.l.b16 %v1822
        %v1993 = vunpack.c.h.b16 %v1822
        %v1994 = vunpack.c.l.b16 %v1823
        %v1995 = vunpack.c.h.b16 %v1823
        %v1996 = vunpack.c.l.b16 %v1824
        %v1997 = vunpack.c.h.b16 %v1824
        %v1998 = vunpack.c.l.b16 %v1825
        %v1999 = vunpack.c.h.b16 %v1825
        %v2000 = vunpack.c.l.b16 %v1826
        %v2001 = vunpack.c.h.b16 %v1826
        %v2002 = vunpack.c.l.b16 %v1827
        %v2003 = vunpack.c.h.b16 %v1827
        %v2004 = vunpack.c.l.b16 %v1828
        %v2005 = vunpack.c.h.b16 %v1828
        %v2006 = vunpack.c.l.b16 %v1829
        %v2007 = vunpack.c.h.b16 %v1829
        %v2008 = vunpack.c.l.b16 %v1830
        %v2009 = vunpack.c.h.b16 %v1830
        %v2010 = vunpack.c.l.b16 %v1831
        %v2011 = vunpack.c.h.b16 %v1831
        %v2012 = vunpack.c.l.b16 %v1832
        %v2013 = vunpack.c.h.b16 %v1832
        %v2014 = vunpack.c.l.b16 %v1833
        %v2015 = vunpack.c.h.b16 %v1833
        %v2016 = vunpack.c.l.b16 %v1834
        %v2017 = vunpack.c.h.b16 %v1834
        %v2018 = vunpack.c.l.b16 %v1835
        %v2019 = vunpack.c.h.b16 %v1835
        %v2020 = vunpack.c.l.b16 %v1836
        %v2021 = vunpack.c.h.b16 %v1836
        %v2022 = vunpack.c.l.b16 %v1837
        %v2023 = vunpack.c.h.b16 %v1837
        %v2024 = vunpack.c.l.b16 %v1838
        %v2025 = vunpack.c.h.b16 %v1838
        %v2026 = vunpack.c.l.b16 %v1839
        %v2027 = vunpack.c.h.b16 %v1839
        %v2028 = vunpack.c.l.b16 %v1840
        %v2029 = vunpack.c.h.b16 %v1840
        %v2030 = vunpack.c.l.b16 %v1841
        %v2031 = vunpack.c.h.b16 %v1841
        %v2032 = vunpack.c.l.b16 %v1842
        %v2033 = vunpack.c.h.b16 %v1842
        %v2034 = vunpack.c.l.b16 %v1843
        %v2035 = vunpack.c.h.b16 %v1843
        %v2036 = vunpack.c.l.b16 %v1844
        %v2037 = vunpack.c.h.b16 %v1844
        %v2038 = vunpack.c.l.b16 %v1845
        %v2039 = vunpack.c.h.b16 %v1845
        %v2040 = vunpack.c.l.b16 %v1846
        %v2041 = vunpack.c.h.b16 %v1846
        %v2042 = vunpack.c.l.b16 %v1847
        %v2043 = vunpack.c.h.b16 %v1847
        %v2044 = vunpack.c.l.b16 %v1848
        %v2045 = vunpack.c.h.b16 %v1848
        %v2046 = vunpack.c.l.b16 %v1849
        %v2047 = vunpack.c.h.b16 %v1849
        %v2048 = vunpack.c.l.b16 %v1850
        %v2049 = vunpack.c.h.b16 %v1850
        %v2050 = vunpack.c.l.b16 %v1851
        %v2051 = vunpack.c.h.b16 %v1851
        %v2052 = vunpack.c.l.b16 %v1852
        %v2053 = vunpack.c.h.b16 %v1852
        %v2054 = vunpack.c.l.b16 %v1853
        %v2055 = vunpack.c.h.b16 %v1853
        %v2056 = vpack.c.b16 %v1932, %v1928
        %v2057 = vpack.c.b16 %v1933, %v1929
        %v2058 = vpack.c.b16 %v1934, %v1930
        %v2059 = vpack.c.b16 %v1935, %v1931
        %v2060 = vpack.c.b16 %v1940, %v1936
        %v2061 = vpack.c.b16 %v1941, %v1937
        %v2062 = vpack.c.b16 %v1942, %v1938
        %v2063 = vpack.c.b16 %v1943, %v1939
        %v2064 = vpack.c.b16 %v1948, %v1944
        %v2065 = vpack.c.b16 %v1949, %v1945
        %v2066 = vpack.c.b16 %v1950, %v1946
        %v2067 = vpack.c.b16 %v1951, %v1947
        %v2068 = vpack.c.b16 %v1956, %v1952
        %v2069 = vpack.c.b16 %v1957, %v1953
        %v2070 = vpack.c.b16 %v1958, %v1954
        %v2071 = vpack.c.b16 %v1959, %v1955
        %v2072 = vpack.c.b16 %v1964, %v1960
        %v2073 = vpack.c.b16 %v1965, %v1961
        %v2074 = vpack.c.b16 %v1966, %v1962
        %v2075 = vpack.c.b16 %v1967, %v1963
        %v2076 = vpack.c.b16 %v1972, %v1968
        %v2077 = vpack.c.b16 %v1973, %v1969
        %v2078 = vpack.c.b16 %v1974, %v1970
        %v2079 = vpack.c.b16 %v1975, %v1971
        %v2080 = vpack.c.b16 %v1980, %v1976
        %v2081 = vpack.c.b16 %v1981, %v1977
        %v2082 = vpack.c.b16 %v1982, %v1978
        %v2083 = vpack.c.b16 %v1983, %v1979
        %v2084 = vpack.c.b16 %v1988, %v1984
        %v2085 = vpack.c.b16 %v1989, %v1985
        %v2086 = vpack.c.b16 %v1990, %v1986
        %v2087 = vpack.c.b16 %v1991, %v1987
        %v2088 = vpack.c.b16 %v1996, %v1992
        %v2089 = vpack.c.b16 %v1997, %v1993
        %v2090 = vpack.c.b16 %v1998, %v1994
        %v2091 = vpack.c.b16 %v1999, %v1995
        %v2092 = vpack.c.b16 %v2004, %v2000
        %v2093 = vpack.c.b16 %v2005, %v2001
        %v2094 = vpack.c.b16 %v2006, %v2002
        %v2095 = vpack.c.b16 %v2007, %v2003
        %v2096 = vpack.c.b16 %v2012, %v2008
        %v2097 = vpack.c.b16 %v2013, %v2009
        %v2098 = vpack.c.b16 %v2014, %v2010
        %v2099 = vpack.c.b16 %v2015, %v2011
        %v2100 = vpack.c.b16 %v2020, %v2016
        %v2101 = vpack.c.b16 %v2021, %v2017
        %v2102 = vpack.c.b16 %v2022, %v2018
        %v2103 = vpack.c.b16 %v2023, %v2019
        %v2104 = vpack.c.b16 %v2028, %v2024
        %v2105 = vpack.c.b16 %v2029, %v2025
        %v2106 = vpack.c.b16 %v2030, %v2026
        %v2107 = vpack.c.b16 %v2031, %v2027
        %v2108 = vpack.c.b16 %v2036, %v2032
        %v2109 = vpack.c.b16 %v2037, %v2033
        %v2110 = vpack.c.b16 %v2038, %v2034
        %v2111 = vpack.c.b16 %v2039, %v2035
        %v2112 = vpack.c.b16 %v2044, %v2040
        %v2113 = vpack.c.b16 %v2045, %v2041
        %v2114 = vpack.c.b16 %v2046, %v2042
        %v2115 = vpack.c.b16 %v2047, %v2043
        %v2116 = vpack.c.b16 %v2052, %v2048
        %v2117 = vpack.c.b16 %v2053, %v2049
        %v2118 = vpack.c.b16 %v2054, %v2050
        %v2119 = vpack.c.b16 %v2055, %v2051
        %2184 = vmatpush.bf16.msra.mxu0 %v2084
        %2185 = vmatpush.bf16.msra.mxu0 %v2080
        %2186 = vmatpush.bf16.msra.mxu0 %v2076
        %2187 = vmatpush.bf16.msra.mxu0 %v2072
        %2188 = vmatpush.bf16.msra.mxu0 %v2068
        %2189 = vmatpush.bf16.msra.mxu0 %v2064
        %2190 = vmatpush.bf16.msra.mxu0 %v2060
        %2191 = vmatpush.bf16.msra.mxu0 %v2056
        %2192 = vmatmul.bf16.gmra.mxu0 %v904
        %v2193 = vpop.f32.mrf.mxu0
        %v2194 = vadd.f32 %v1856, %v2193
        %v2195 = vpop.f32.mrf.mxu0
        %v2196 = vadd.f32 %v1856, %v2195
        %2197 = vmatmul.bf16.gmra.mxu0 %v906
        %v2198 = vpop.f32.mrf.mxu0
        %v2199 = vadd.f32 %v1856, %v2198
        %v2200 = vpop.f32.mrf.mxu0
        %v2201 = vadd.f32 %v1856, %v2200
        %2202 = vdwg.mxu0
        %2203 = vmatpush.bf16.msra.mxu0 %v2116
        %2204 = vmatpush.bf16.msra.mxu0 %v2112
        %2205 = vmatpush.bf16.msra.mxu0 %v2108
        %2206 = vmatpush.bf16.msra.mxu0 %v2104
        %2207 = vmatpush.bf16.msra.mxu0 %v2100
        %2208 = vmatpush.bf16.msra.mxu0 %v2096
        %2209 = vmatpush.bf16.msra.mxu0 %v2092
        %2210 = vmatpush.bf16.msra.mxu0 %v2088
        %2211 = vmatmul.bf16.gmra.mxu0 %v905
        %v2212 = vpop.f32.mrf.mxu0
        %v2213 = vadd.f32 %v2194, %v2212
        %v2214 = vpop.f32.mrf.mxu0
        %v2215 = vadd.f32 %v2196, %v2214
        %2216 = vmatmul.bf16.gmra.mxu0 %v907
        %v2217 = vpop.f32.mrf.mxu0
        %v2218 = vadd.f32 %v2199, %v2217
        %v2219 = vpop.f32.mrf.mxu0
        %v2220 = vadd.f32 %v2201, %v2219
        %2221 = vdwg.mxu0
        %2222 = vmatpush.bf16.msra.mxu0 %v2085
        %2223 = vmatpush.bf16.msra.mxu0 %v2081
        %2224 = vmatpush.bf16.msra.mxu0 %v2077
        %2225 = vmatpush.bf16.msra.mxu0 %v2073
        %2226 = vmatpush.bf16.msra.mxu0 %v2069
        %2227 = vmatpush.bf16.msra.mxu0 %v2065
        %2228 = vmatpush.bf16.msra.mxu0 %v2061
        %2229 = vmatpush.bf16.msra.mxu0 %v2057
        %2230 = vmatmul.bf16.gmra.mxu0 %v904
        %v2231 = vpop.f32.mrf.mxu0
        %v2232 = vadd.f32 %v1857, %v2231
        %v2233 = vpop.f32.mrf.mxu0
        %v2234 = vadd.f32 %v1857, %v2233
        %2235 = vmatmul.bf16.gmra.mxu0 %v906
        %v2236 = vpop.f32.mrf.mxu0
        %v2237 = vadd.f32 %v1857, %v2236
        %v2238 = vpop.f32.mrf.mxu0
        %v2239 = vadd.f32 %v1857, %v2238
        %2240 = vdwg.mxu0
        %2241 = vmatpush.bf16.msra.mxu0 %v2117
        %2242 = vmatpush.bf16.msra.mxu0 %v2113
        %2243 = vmatpush.bf16.msra.mxu0 %v2109
        %2244 = vmatpush.bf16.msra.mxu0 %v2105
        %2245 = vmatpush.bf16.msra.mxu0 %v2101
        %2246 = vmatpush.bf16.msra.mxu0 %v2097
        %2247 = vmatpush.bf16.msra.mxu0 %v2093
        %2248 = vmatpush.bf16.msra.mxu0 %v2089
        %2249 = vmatmul.bf16.gmra.mxu0 %v905
        %v2250 = vpop.f32.mrf.mxu0
        %v2251 = vadd.f32 %v2232, %v2250
        %v2252 = vpop.f32.mrf.mxu0
        %v2253 = vadd.f32 %v2234, %v2252
        %2254 = vmatmul.bf16.gmra.mxu0 %v907
        %v2255 = vpop.f32.mrf.mxu0
        %v2256 = vadd.f32 %v2237, %v2255
        %v2257 = vpop.f32.mrf.mxu0
        %v2258 = vadd.f32 %v2239, %v2257
        %2259 = vdwg.mxu0
        %2260 = vmatpush.bf16.msra.mxu0 %v2086
        %2261 = vmatpush.bf16.msra.mxu0 %v2082
        %2262 = vmatpush.bf16.msra.mxu0 %v2078
        %2263 = vmatpush.bf16.msra.mxu0 %v2074
        %2264 = vmatpush.bf16.msra.mxu0 %v2070
        %2265 = vmatpush.bf16.msra.mxu0 %v2066
        %2266 = vmatpush.bf16.msra.mxu0 %v2062
        %2267 = vmatpush.bf16.msra.mxu0 %v2058
        %2268 = vmatmul.bf16.gmra.mxu0 %v904
        %v2269 = vpop.f32.mrf.mxu0
        %v2270 = vadd.f32 %v1858, %v2269
        %v2271 = vpop.f32.mrf.mxu0
        %v2272 = vadd.f32 %v1858, %v2271
        %2273 = vmatmul.bf16.gmra.mxu0 %v906
        %v2274 = vpop.f32.mrf.mxu0
        %v2275 = vadd.f32 %v1858, %v2274
        %v2276 = vpop.f32.mrf.mxu0
        %v2277 = vadd.f32 %v1858, %v2276
        %2278 = vdwg.mxu0
        %2279 = vmatpush.bf16.msra.mxu0 %v2118
        %2280 = vmatpush.bf16.msra.mxu0 %v2114
        %2281 = vmatpush.bf16.msra.mxu0 %v2110
        %2282 = vmatpush.bf16.msra.mxu0 %v2106
        %2283 = vmatpush.bf16.msra.mxu0 %v2102
        %2284 = vmatpush.bf16.msra.mxu0 %v2098
        %2285 = vmatpush.bf16.msra.mxu0 %v2094
        %2286 = vmatpush.bf16.msra.mxu0 %v2090
        %2287 = vmatmul.bf16.gmra.mxu0 %v905
        %v2288 = vpop.f32.mrf.mxu0
        %v2289 = vadd.f32 %v2270, %v2288
        %v2290 = vpop.f32.mrf.mxu0
        %v2291 = vadd.f32 %v2272, %v2290
        %2292 = vmatmul.bf16.gmra.mxu0 %v907
        %v2293 = vpop.f32.mrf.mxu0
        %v2294 = vadd.f32 %v2275, %v2293
        %v2295 = vpop.f32.mrf.mxu0
        %v2296 = vadd.f32 %v2277, %v2295
        %2297 = vdwg.mxu0
        %2298 = vmatpush.bf16.msra.mxu0 %v2087
        %2299 = vmatpush.bf16.msra.mxu0 %v2083
        %2300 = vmatpush.bf16.msra.mxu0 %v2079
        %2301 = vmatpush.bf16.msra.mxu0 %v2075
        %2302 = vmatpush.bf16.msra.mxu0 %v2071
        %2303 = vmatpush.bf16.msra.mxu0 %v2067
        %2304 = vmatpush.bf16.msra.mxu0 %v2063
        %2305 = vmatpush.bf16.msra.mxu0 %v2059
        %2306 = vmatmul.bf16.gmra.mxu0 %v904
        %v2307 = vpop.f32.mrf.mxu0
        %v2308 = vadd.f32 %v1859, %v2307
        %v2309 = vpop.f32.mrf.mxu0
        %v2310 = vadd.f32 %v1859, %v2309
        %2311 = vmatmul.bf16.gmra.mxu0 %v906
        %v2312 = vpop.f32.mrf.mxu0
        %v2313 = vadd.f32 %v1859, %v2312
        %v2314 = vpop.f32.mrf.mxu0
        %v2315 = vadd.f32 %v1859, %v2314
        %2316 = vdwg.mxu0
        %2317 = vmatpush.bf16.msra.mxu0 %v2119
        %2318 = vmatpush.bf16.msra.mxu0 %v2115
        %2319 = vmatpush.bf16.msra.mxu0 %v2111
        %2320 = vmatpush.bf16.msra.mxu0 %v2107
        %2321 = vmatpush.bf16.msra.mxu0 %v2103
        %2322 = vmatpush.bf16.msra.mxu0 %v2099
        %2323 = vmatpush.bf16.msra.mxu0 %v2095
        %2324 = vmatpush.bf16.msra.mxu0 %v2091
        %2325 = vmatmul.bf16.gmra.mxu0 %v905
        %v2326 = vpop.f32.mrf.mxu0
        %v2327 = vadd.f32 %v2308, %v2326
        %v2328 = vpop.f32.mrf.mxu0
        %v2329 = vadd.f32 %v2310, %v2328
        %2330 = vmatmul.bf16.gmra.mxu0 %v907
        %v2331 = vpop.f32.mrf.mxu0
        %v2332 = vadd.f32 %v2313, %v2331
        %v2333 = vpop.f32.mrf.mxu0
        %v2334 = vadd.f32 %v2315, %v2333
        %2335 = vdwg.mxu0
        %v2336 = vmax.f32 %v2213, 0.0
        %v2337 = vmax.f32 %v2251, 0.0
        %v2338 = vmax.f32 %v2289, 0.0
        %v2339 = vmax.f32 %v2327, 0.0
        %v2340 = vmax.f32 %v2215, 0.0
        %v2341 = vmax.f32 %v2253, 0.0
        %v2342 = vmax.f32 %v2291, 0.0
        %v2343 = vmax.f32 %v2329, 0.0
        %v2344 = vmax.f32 %v2218, 0.0
        %v2345 = vmax.f32 %v2256, 0.0
        %v2346 = vmax.f32 %v2294, 0.0
        %v2347 = vmax.f32 %v2332, 0.0
        %v2348 = vmax.f32 %v2220, 0.0
        %v2349 = vmax.f32 %v2258, 0.0
        %v2350 = vmax.f32 %v2296, 0.0
        %v2351 = vmax.f32 %v2334, 0.0
        %v2352 = vpack.c.bf16 %v2340, %v2336
        %v2353 = vpack.c.bf16 %v2341, %v2337
        %v2354 = vpack.c.bf16 %v2342, %v2338
        %v2355 = vpack.c.bf16 %v2343, %v2339
        %v2356 = vpack.c.bf16 %v2348, %v2344
        %v2357 = vpack.c.bf16 %v2349, %v2345
        %v2358 = vpack.c.bf16 %v2350, %v2346
        %v2359 = vpack.c.bf16 %v2351, %v2347
        %v2360 = vld [vmem:[#allocation13] sm:$0xff]
        %v2361 = vld [vmem:[#allocation13 + $0x8] sm:$0xff]
        %v2362 = vld [vmem:[#allocation13 + $0x10] sm:$0xff]
        %v2363 = vld [vmem:[#allocation13 + $0x18] sm:$0xff]
        %v2364 = vld [vmem:[#allocation13 + $0x20] sm:$0xff]
        %v2365 = vld [vmem:[#allocation13 + $0x28] sm:$0xff]
        %v2366 = vld [vmem:[#allocation13 + $0x30] sm:$0xff]
        %v2367 = vld [vmem:[#allocation13 + $0x38] sm:$0xff]
        %v2368 = vld [vmem:[#allocation13 + $0x40] sm:$0xff]
        %v2369 = vld [vmem:[#allocation13 + $0x48] sm:$0xff]
        %v2370 = vld [vmem:[#allocation13 + $0x50] sm:$0xff]
        %v2371 = vld [vmem:[#allocation13 + $0x58] sm:$0xff]
        %v2372 = vld [vmem:[#allocation13 + $0x60] sm:$0xff]
        %v2373 = vld [vmem:[#allocation13 + $0x68] sm:$0xff]
        %v2374 = vld [vmem:[#allocation13 + $0x70] sm:$0xff]
        %v2375 = vld [vmem:[#allocation13 + $0x78] sm:$0xff]
        %v2376 = vld [vmem:[#allocation13 + $0x80] sm:$0xff]
        %v2377 = vld [vmem:[#allocation13 + $0x88] sm:$0xff]
        %v2378 = vld [vmem:[#allocation13 + $0x90] sm:$0xff]
        %v2379 = vld [vmem:[#allocation13 + $0x98] sm:$0xff]
        %v2380 = vld [vmem:[#allocation13 + $0xa0] sm:$0xff]
        %v2381 = vld [vmem:[#allocation13 + $0xa8] sm:$0xff]
        %v2382 = vld [vmem:[#allocation13 + $0xb0] sm:$0xff]
        %v2383 = vld [vmem:[#allocation13 + $0xb8] sm:$0xff]
        %v2384 = vld [vmem:[#allocation13 + $0xc0] sm:$0xff]
        %v2385 = vld [vmem:[#allocation13 + $0xc8] sm:$0xff]
        %v2386 = vld [vmem:[#allocation13 + $0xd0] sm:$0xff]
        %v2387 = vld [vmem:[#allocation13 + $0xd8] sm:$0xff]
        %v2388 = vld [vmem:[#allocation13 + $0xe0] sm:$0xff]
        %v2389 = vld [vmem:[#allocation13 + $0xe8] sm:$0xff]
        %v2390 = vld [vmem:[#allocation13 + $0xf0] sm:$0xff]
        %v2391 = vld [vmem:[#allocation13 + $0xf8] sm:$0xff]
        %v2392 = vld [vmem:[#allocation13 + $0x100] sm:$0xff]
        %v2393 = vld [vmem:[#allocation13 + $0x108] sm:$0xff]
        %v2394 = vld [vmem:[#allocation13 + $0x110] sm:$0xff]
        %v2395 = vld [vmem:[#allocation13 + $0x118] sm:$0xff]
        %v2396 = vld [vmem:[#allocation13 + $0x120] sm:$0xff]
        %v2397 = vld [vmem:[#allocation13 + $0x128] sm:$0xff]
        %v2398 = vld [vmem:[#allocation13 + $0x130] sm:$0xff]
        %v2399 = vld [vmem:[#allocation13 + $0x138] sm:$0xff]
        %v2400 = vld [vmem:[#allocation13 + $0x140] sm:$0xff]
        %v2401 = vld [vmem:[#allocation13 + $0x148] sm:$0xff]
        %v2402 = vld [vmem:[#allocation13 + $0x150] sm:$0xff]
        %v2403 = vld [vmem:[#allocation13 + $0x158] sm:$0xff]
        %v2404 = vld [vmem:[#allocation13 + $0x160] sm:$0xff]
        %v2405 = vld [vmem:[#allocation13 + $0x168] sm:$0xff]
        %v2406 = vld [vmem:[#allocation13 + $0x170] sm:$0xff]
        %v2407 = vld [vmem:[#allocation13 + $0x178] sm:$0xff]
        %v2408 = vld [vmem:[#allocation13 + $0x180] sm:$0xff]
        %v2409 = vld [vmem:[#allocation13 + $0x188] sm:$0xff]
        %v2410 = vld [vmem:[#allocation13 + $0x190] sm:$0xff]
        %v2411 = vld [vmem:[#allocation13 + $0x198] sm:$0xff]
        %v2412 = vld [vmem:[#allocation13 + $0x1a0] sm:$0xff]
        %v2413 = vld [vmem:[#allocation13 + $0x1a8] sm:$0xff]
        %v2414 = vld [vmem:[#allocation13 + $0x1b0] sm:$0xff]
        %v2415 = vld [vmem:[#allocation13 + $0x1b8] sm:$0xff]
        %v2416 = vld [vmem:[#allocation13 + $0x1c0] sm:$0xff]
        %v2417 = vld [vmem:[#allocation13 + $0x1c8] sm:$0xff]
        %v2418 = vld [vmem:[#allocation13 + $0x1d0] sm:$0xff]
        %v2419 = vld [vmem:[#allocation13 + $0x1d8] sm:$0xff]
        %v2420 = vld [vmem:[#allocation13 + $0x1e0] sm:$0xff]
        %v2421 = vld [vmem:[#allocation13 + $0x1e8] sm:$0xff]
        %v2422 = vld [vmem:[#allocation13 + $0x1f0] sm:$0xff]
        %v2423 = vld [vmem:[#allocation13 + $0x1f8] sm:$0xff]
        %v2424 = vld [vmem:[%s8] sm:$0x3]
        %v2426 = vperm.slane %v2424, 0
        %v2427 = vperm.slane %v2424, 1
        %v2494 = vunpack.c.l.b16 %v2360
        %v2495 = vunpack.c.h.b16 %v2360
        %v2496 = vunpack.c.l.b16 %v2361
        %v2497 = vunpack.c.h.b16 %v2361
        %v2498 = vunpack.c.l.b16 %v2362
        %v2499 = vunpack.c.h.b16 %v2362
        %v2500 = vunpack.c.l.b16 %v2363
        %v2501 = vunpack.c.h.b16 %v2363
        %v2502 = vunpack.c.l.b16 %v2364
        %v2503 = vunpack.c.h.b16 %v2364
        %v2504 = vunpack.c.l.b16 %v2365
        %v2505 = vunpack.c.h.b16 %v2365
        %v2506 = vunpack.c.l.b16 %v2366
        %v2507 = vunpack.c.h.b16 %v2366
        %v2508 = vunpack.c.l.b16 %v2367
        %v2509 = vunpack.c.h.b16 %v2367
        %v2510 = vunpack.c.l.b16 %v2368
        %v2511 = vunpack.c.h.b16 %v2368
        %v2512 = vunpack.c.l.b16 %v2369
        %v2513 = vunpack.c.h.b16 %v2369
        %v2514 = vunpack.c.l.b16 %v2370
        %v2515 = vunpack.c.h.b16 %v2370
        %v2516 = vunpack.c.l.b16 %v2371
        %v2517 = vunpack.c.h.b16 %v2371
        %v2518 = vunpack.c.l.b16 %v2372
        %v2519 = vunpack.c.h.b16 %v2372
        %v2520 = vunpack.c.l.b16 %v2373
        %v2521 = vunpack.c.h.b16 %v2373
        %v2522 = vunpack.c.l.b16 %v2374
        %v2523 = vunpack.c.h.b16 %v2374
        %v2524 = vunpack.c.l.b16 %v2375
        %v2525 = vunpack.c.h.b16 %v2375
        %v2526 = vunpack.c.l.b16 %v2376
        %v2527 = vunpack.c.h.b16 %v2376
        %v2528 = vunpack.c.l.b16 %v2377
        %v2529 = vunpack.c.h.b16 %v2377
        %v2530 = vunpack.c.l.b16 %v2378
        %v2531 = vunpack.c.h.b16 %v2378
        %v2532 = vunpack.c.l.b16 %v2379
        %v2533 = vunpack.c.h.b16 %v2379
        %v2534 = vunpack.c.l.b16 %v2380
        %v2535 = vunpack.c.h.b16 %v2380
        %v2536 = vunpack.c.l.b16 %v2381
        %v2537 = vunpack.c.h.b16 %v2381
        %v2538 = vunpack.c.l.b16 %v2382
        %v2539 = vunpack.c.h.b16 %v2382
        %v2540 = vunpack.c.l.b16 %v2383
        %v2541 = vunpack.c.h.b16 %v2383
        %v2542 = vunpack.c.l.b16 %v2384
        %v2543 = vunpack.c.h.b16 %v2384
        %v2544 = vunpack.c.l.b16 %v2385
        %v2545 = vunpack.c.h.b16 %v2385
        %v2546 = vunpack.c.l.b16 %v2386
        %v2547 = vunpack.c.h.b16 %v2386
        %v2548 = vunpack.c.l.b16 %v2387
        %v2549 = vunpack.c.h.b16 %v2387
        %v2550 = vunpack.c.l.b16 %v2388
        %v2551 = vunpack.c.h.b16 %v2388
        %v2552 = vunpack.c.l.b16 %v2389
        %v2553 = vunpack.c.h.b16 %v2389
        %v2554 = vunpack.c.l.b16 %v2390
        %v2555 = vunpack.c.h.b16 %v2390
        %v2556 = vunpack.c.l.b16 %v2391
        %v2557 = vunpack.c.h.b16 %v2391
        %v2558 = vunpack.c.l.b16 %v2392
        %v2559 = vunpack.c.h.b16 %v2392
        %v2560 = vunpack.c.l.b16 %v2393
        %v2561 = vunpack.c.h.b16 %v2393
        %v2562 = vunpack.c.l.b16 %v2394
        %v2563 = vunpack.c.h.b16 %v2394
        %v2564 = vunpack.c.l.b16 %v2395
        %v2565 = vunpack.c.h.b16 %v2395
        %v2566 = vunpack.c.l.b16 %v2396
        %v2567 = vunpack.c.h.b16 %v2396
        %v2568 = vunpack.c.l.b16 %v2397
        %v2569 = vunpack.c.h.b16 %v2397
        %v2570 = vunpack.c.l.b16 %v2398
        %v2571 = vunpack.c.h.b16 %v2398
        %v2572 = vunpack.c.l.b16 %v2399
        %v2573 = vunpack.c.h.b16 %v2399
        %v2574 = vunpack.c.l.b16 %v2400
        %v2575 = vunpack.c.h.b16 %v2400
        %v2576 = vunpack.c.l.b16 %v2401
        %v2577 = vunpack.c.h.b16 %v2401
        %v2578 = vunpack.c.l.b16 %v2402
        %v2579 = vunpack.c.h.b16 %v2402
        %v2580 = vunpack.c.l.b16 %v2403
        %v2581 = vunpack.c.h.b16 %v2403
        %v2582 = vunpack.c.l.b16 %v2404
        %v2583 = vunpack.c.h.b16 %v2404
        %v2584 = vunpack.c.l.b16 %v2405
        %v2585 = vunpack.c.h.b16 %v2405
        %v2586 = vunpack.c.l.b16 %v2406
        %v2587 = vunpack.c.h.b16 %v2406
        %v2588 = vunpack.c.l.b16 %v2407
        %v2589 = vunpack.c.h.b16 %v2407
        %v2590 = vunpack.c.l.b16 %v2408
        %v2591 = vunpack.c.h.b16 %v2408
        %v2592 = vunpack.c.l.b16 %v2409
        %v2593 = vunpack.c.h.b16 %v2409
        %v2594 = vunpack.c.l.b16 %v2410
        %v2595 = vunpack.c.h.b16 %v2410
        %v2596 = vunpack.c.l.b16 %v2411
        %v2597 = vunpack.c.h.b16 %v2411
        %v2598 = vunpack.c.l.b16 %v2412
        %v2599 = vunpack.c.h.b16 %v2412
        %v2600 = vunpack.c.l.b16 %v2413
        %v2601 = vunpack.c.h.b16 %v2413
        %v2602 = vunpack.c.l.b16 %v2414
        %v2603 = vunpack.c.h.b16 %v2414
        %v2604 = vunpack.c.l.b16 %v2415
        %v2605 = vunpack.c.h.b16 %v2415
        %v2606 = vunpack.c.l.b16 %v2416
        %v2607 = vunpack.c.h.b16 %v2416
        %v2608 = vunpack.c.l.b16 %v2417
        %v2609 = vunpack.c.h.b16 %v2417
        %v2610 = vunpack.c.l.b16 %v2418
        %v2611 = vunpack.c.h.b16 %v2418
        %v2612 = vunpack.c.l.b16 %v2419
        %v2613 = vunpack.c.h.b16 %v2419
        %v2614 = vunpack.c.l.b16 %v2420
        %v2615 = vunpack.c.h.b16 %v2420
        %v2616 = vunpack.c.l.b16 %v2421
        %v2617 = vunpack.c.h.b16 %v2421
        %v2618 = vunpack.c.l.b16 %v2422
        %v2619 = vunpack.c.h.b16 %v2422
        %v2620 = vunpack.c.l.b16 %v2423
        %v2621 = vunpack.c.h.b16 %v2423
        %v2622 = vpack.c.b16 %v2496, %v2494
        %v2623 = vpack.c.b16 %v2497, %v2495
        %v2624 = vpack.c.b16 %v2500, %v2498
        %v2625 = vpack.c.b16 %v2501, %v2499
        %v2626 = vpack.c.b16 %v2504, %v2502
        %v2627 = vpack.c.b16 %v2505, %v2503
        %v2628 = vpack.c.b16 %v2508, %v2506
        %v2629 = vpack.c.b16 %v2509, %v2507
        %v2630 = vpack.c.b16 %v2512, %v2510
        %v2631 = vpack.c.b16 %v2513, %v2511
        %v2632 = vpack.c.b16 %v2516, %v2514
        %v2633 = vpack.c.b16 %v2517, %v2515
        %v2634 = vpack.c.b16 %v2520, %v2518
        %v2635 = vpack.c.b16 %v2521, %v2519
        %v2636 = vpack.c.b16 %v2524, %v2522
        %v2637 = vpack.c.b16 %v2525, %v2523
        %v2638 = vpack.c.b16 %v2528, %v2526
        %v2639 = vpack.c.b16 %v2529, %v2527
        %v2640 = vpack.c.b16 %v2532, %v2530
        %v2641 = vpack.c.b16 %v2533, %v2531
        %v2642 = vpack.c.b16 %v2536, %v2534
        %v2643 = vpack.c.b16 %v2537, %v2535
        %v2644 = vpack.c.b16 %v2540, %v2538
        %v2645 = vpack.c.b16 %v2541, %v2539
        %v2646 = vpack.c.b16 %v2544, %v2542
        %v2647 = vpack.c.b16 %v2545, %v2543
        %v2648 = vpack.c.b16 %v2548, %v2546
        %v2649 = vpack.c.b16 %v2549, %v2547
        %v2650 = vpack.c.b16 %v2552, %v2550
        %v2651 = vpack.c.b16 %v2553, %v2551
        %v2652 = vpack.c.b16 %v2556, %v2554
        %v2653 = vpack.c.b16 %v2557, %v2555
        %v2654 = vpack.c.b16 %v2560, %v2558
        %v2655 = vpack.c.b16 %v2561, %v2559
        %v2656 = vpack.c.b16 %v2564, %v2562
        %v2657 = vpack.c.b16 %v2565, %v2563
        %v2658 = vpack.c.b16 %v2568, %v2566
        %v2659 = vpack.c.b16 %v2569, %v2567
        %v2660 = vpack.c.b16 %v2572, %v2570
        %v2661 = vpack.c.b16 %v2573, %v2571
        %v2662 = vpack.c.b16 %v2576, %v2574
        %v2663 = vpack.c.b16 %v2577, %v2575
        %v2664 = vpack.c.b16 %v2580, %v2578
        %v2665 = vpack.c.b16 %v2581, %v2579
        %v2666 = vpack.c.b16 %v2584, %v2582
        %v2667 = vpack.c.b16 %v2585, %v2583
        %v2668 = vpack.c.b16 %v2588, %v2586
        %v2669 = vpack.c.b16 %v2589, %v2587
        %v2670 = vpack.c.b16 %v2592, %v2590
        %v2671 = vpack.c.b16 %v2593, %v2591
        %v2672 = vpack.c.b16 %v2596, %v2594
        %v2673 = vpack.c.b16 %v2597, %v2595
        %v2674 = vpack.c.b16 %v2600, %v2598
        %v2675 = vpack.c.b16 %v2601, %v2599
        %v2676 = vpack.c.b16 %v2604, %v2602
        %v2677 = vpack.c.b16 %v2605, %v2603
        %v2678 = vpack.c.b16 %v2608, %v2606
        %v2679 = vpack.c.b16 %v2609, %v2607
        %v2680 = vpack.c.b16 %v2612, %v2610
        %v2681 = vpack.c.b16 %v2613, %v2611
        %v2682 = vpack.c.b16 %v2616, %v2614
        %v2683 = vpack.c.b16 %v2617, %v2615
        %v2684 = vpack.c.b16 %v2620, %v2618
        %v2685 = vpack.c.b16 %v2621, %v2619
        %2750 = vmatpush.bf16.msra.mxu0 %v2636
        %2751 = vmatpush.bf16.msra.mxu0 %v2634
        %2752 = vmatpush.bf16.msra.mxu0 %v2632
        %2753 = vmatpush.bf16.msra.mxu0 %v2630
        %2754 = vmatpush.bf16.msra.mxu0 %v2628
        %2755 = vmatpush.bf16.msra.mxu0 %v2626
        %2756 = vmatpush.bf16.msra.mxu0 %v2624
        %2757 = vmatpush.bf16.msra.mxu0 %v2622
        %2758 = vmatmul.bf16.gmra.mxu0 %v2352
        %v2759 = vpop.f32.mrf.mxu0
        %v2760 = vadd.f32 %v2426, %v2759
        %v2761 = vpop.f32.mrf.mxu0
        %v2762 = vadd.f32 %v2426, %v2761
        %2763 = vmatmul.bf16.gmra.mxu0 %v2356
        %v2764 = vpop.f32.mrf.mxu0
        %v2765 = vadd.f32 %v2426, %v2764
        %v2766 = vpop.f32.mrf.mxu0
        %v2767 = vadd.f32 %v2426, %v2766
        %2768 = vdwg.mxu0
        %2769 = vmatpush.bf16.msra.mxu0 %v2652
        %2770 = vmatpush.bf16.msra.mxu0 %v2650
        %2771 = vmatpush.bf16.msra.mxu0 %v2648
        %2772 = vmatpush.bf16.msra.mxu0 %v2646
        %2773 = vmatpush.bf16.msra.mxu0 %v2644
        %2774 = vmatpush.bf16.msra.mxu0 %v2642
        %2775 = vmatpush.bf16.msra.mxu0 %v2640
        %2776 = vmatpush.bf16.msra.mxu0 %v2638
        %2777 = vmatmul.bf16.gmra.mxu0 %v2353
        %v2778 = vpop.f32.mrf.mxu0
        %v2779 = vadd.f32 %v2760, %v2778
        %v2780 = vpop.f32.mrf.mxu0
        %v2781 = vadd.f32 %v2762, %v2780
        %2782 = vmatmul.bf16.gmra.mxu0 %v2357
        %v2783 = vpop.f32.mrf.mxu0
        %v2784 = vadd.f32 %v2765, %v2783
        %v2785 = vpop.f32.mrf.mxu0
        %v2786 = vadd.f32 %v2767, %v2785
        %2787 = vdwg.mxu0
        %2788 = vmatpush.bf16.msra.mxu0 %v2668
        %2789 = vmatpush.bf16.msra.mxu0 %v2666
        %2790 = vmatpush.bf16.msra.mxu0 %v2664
        %2791 = vmatpush.bf16.msra.mxu0 %v2662
        %2792 = vmatpush.bf16.msra.mxu0 %v2660
        %2793 = vmatpush.bf16.msra.mxu0 %v2658
        %2794 = vmatpush.bf16.msra.mxu0 %v2656
        %2795 = vmatpush.bf16.msra.mxu0 %v2654
        %2796 = vmatmul.bf16.gmra.mxu0 %v2354
        %v2797 = vpop.f32.mrf.mxu0
        %v2798 = vadd.f32 %v2779, %v2797
        %v2799 = vpop.f32.mrf.mxu0
        %v2800 = vadd.f32 %v2781, %v2799
        %2801 = vmatmul.bf16.gmra.mxu0 %v2358
        %v2802 = vpop.f32.mrf.mxu0
        %v2803 = vadd.f32 %v2784, %v2802
        %v2804 = vpop.f32.mrf.mxu0
        %v2805 = vadd.f32 %v2786, %v2804
        %2806 = vdwg.mxu0
        %2807 = vmatpush.bf16.msra.mxu0 %v2684
        %2808 = vmatpush.bf16.msra.mxu0 %v2682
        %2809 = vmatpush.bf16.msra.mxu0 %v2680
        %2810 = vmatpush.bf16.msra.mxu0 %v2678
        %2811 = vmatpush.bf16.msra.mxu0 %v2676
        %2812 = vmatpush.bf16.msra.mxu0 %v2674
        %2813 = vmatpush.bf16.msra.mxu0 %v2672
        %2814 = vmatpush.bf16.msra.mxu0 %v2670
        %2815 = vmatmul.bf16.gmra.mxu0 %v2355
        %v2816 = vpop.f32.mrf.mxu0
        %v2817 = vadd.f32 %v2798, %v2816
        %v2818 = vpop.f32.mrf.mxu0
        %v2819 = vadd.f32 %v2800, %v2818
        %2820 = vmatmul.bf16.gmra.mxu0 %v2359
        %v2821 = vpop.f32.mrf.mxu0
        %v2822 = vadd.f32 %v2803, %v2821
        %v2823 = vpop.f32.mrf.mxu0
        %v2824 = vadd.f32 %v2805, %v2823
        %2825 = vdwg.mxu0
        %2826 = vmatpush.bf16.msra.mxu0 %v2637
        %2827 = vmatpush.bf16.msra.mxu0 %v2635
        %2828 = vmatpush.bf16.msra.mxu0 %v2633
        %2829 = vmatpush.bf16.msra.mxu0 %v2631
        %2830 = vmatpush.bf16.msra.mxu0 %v2629
        %2831 = vmatpush.bf16.msra.mxu0 %v2627
        %2832 = vmatpush.bf16.msra.mxu0 %v2625
        %2833 = vmatpush.bf16.msra.mxu0 %v2623
        %2834 = vmatmul.bf16.gmra.mxu0 %v2352
        %v2835 = vpop.f32.mrf.mxu0
        %v2836 = vadd.f32 %v2427, %v2835
        %v2837 = vpop.f32.mrf.mxu0
        %v2838 = vadd.f32 %v2427, %v2837
        %2839 = vmatmul.bf16.gmra.mxu0 %v2356
        %v2840 = vpop.f32.mrf.mxu0
        %v2841 = vadd.f32 %v2427, %v2840
        %v2842 = vpop.f32.mrf.mxu0
        %v2843 = vadd.f32 %v2427, %v2842
        %2844 = vdwg.mxu0
        %2845 = vmatpush.bf16.msra.mxu0 %v2653
        %2846 = vmatpush.bf16.msra.mxu0 %v2651
        %2847 = vmatpush.bf16.msra.mxu0 %v2649
        %2848 = vmatpush.bf16.msra.mxu0 %v2647
        %2849 = vmatpush.bf16.msra.mxu0 %v2645
        %2850 = vmatpush.bf16.msra.mxu0 %v2643
        %2851 = vmatpush.bf16.msra.mxu0 %v2641
        %2852 = vmatpush.bf16.msra.mxu0 %v2639
        %2853 = vmatmul.bf16.gmra.mxu0 %v2353
        %v2854 = vpop.f32.mrf.mxu0
        %v2855 = vadd.f32 %v2836, %v2854
        %v2856 = vpop.f32.mrf.mxu0
        %v2857 = vadd.f32 %v2838, %v2856
        %2858 = vmatmul.bf16.gmra.mxu0 %v2357
        %v2859 = vpop.f32.mrf.mxu0
        %v2860 = vadd.f32 %v2841, %v2859
        %v2861 = vpop.f32.mrf.mxu0
        %v2862 = vadd.f32 %v2843, %v2861
        %2863 = vdwg.mxu0
        %2864 = vmatpush.bf16.msra.mxu0 %v2669
        %2865 = vmatpush.bf16.msra.mxu0 %v2667
        %2866 = vmatpush.bf16.msra.mxu0 %v2665
        %2867 = vmatpush.bf16.msra.mxu0 %v2663
        %2868 = vmatpush.bf16.msra.mxu0 %v2661
        %2869 = vmatpush.bf16.msra.mxu0 %v2659
        %2870 = vmatpush.bf16.msra.mxu0 %v2657
        %2871 = vmatpush.bf16.msra.mxu0 %v2655
        %2872 = vmatmul.bf16.gmra.mxu0 %v2354
        %v2873 = vpop.f32.mrf.mxu0
        %v2874 = vadd.f32 %v2855, %v2873
        %v2875 = vpop.f32.mrf.mxu0
        %v2876 = vadd.f32 %v2857, %v2875
        %2877 = vmatmul.bf16.gmra.mxu0 %v2358
        %v2878 = vpop.f32.mrf.mxu0
        %v2879 = vadd.f32 %v2860, %v2878
        %v2880 = vpop.f32.mrf.mxu0
        %v2881 = vadd.f32 %v2862, %v2880
        %2882 = vdwg.mxu0
        %2883 = vmatpush.bf16.msra.mxu0 %v2685
        %2884 = vmatpush.bf16.msra.mxu0 %v2683
        %2885 = vmatpush.bf16.msra.mxu0 %v2681
        %2886 = vmatpush.bf16.msra.mxu0 %v2679
        %2887 = vmatpush.bf16.msra.mxu0 %v2677
        %2888 = vmatpush.bf16.msra.mxu0 %v2675
        %2889 = vmatpush.bf16.msra.mxu0 %v2673
        %2890 = vmatpush.bf16.msra.mxu0 %v2671
        %2891 = vmatmul.bf16.gmra.mxu0 %v2355
        %v2892 = vpop.f32.mrf.mxu0
        %v2893 = vadd.f32 %v2874, %v2892
        %v2894 = vpop.f32.mrf.mxu0
        %v2895 = vadd.f32 %v2876, %v2894
        %2896 = vmatmul.bf16.gmra.mxu0 %v2359
        %v2897 = vpop.f32.mrf.mxu0
        %v2898 = vadd.f32 %v2879, %v2897
        %v2899 = vpop.f32.mrf.mxu0
        %v2900 = vadd.f32 %v2881, %v2899
        %2901 = vdwg.mxu0
        %v2902 = vmax.f32 %v2817, 0.0
        %v2903 = vmax.f32 %v2893, 0.0
        %v2904 = vmax.f32 %v2819, 0.0
        %v2905 = vmax.f32 %v2895, 0.0
        %v2906 = vmax.f32 %v2822, 0.0
        %v2907 = vmax.f32 %v2898, 0.0
        %v2908 = vmax.f32 %v2824, 0.0
        %v2909 = vmax.f32 %v2900, 0.0
        %v2910 = vpack.c.bf16 %v1784, %v1782
        %v2911 = vpack.c.bf16 %v1785, %v1783
        %v2912 = vpack.c.bf16 %v1788, %v1786
        %v2913 = vpack.c.bf16 %v1789, %v1787
        %v2914 = vld [vmem:[#allocation14] sm:$0xf]
        %v2915 = vld [vmem:[#allocation14 + $0x4] sm:$0xf]
        %v2916 = vld [vmem:[#allocation14 + $0x8] sm:$0xf]
        %v2917 = vld [vmem:[#allocation14 + $0xc] sm:$0xf]
        %v2918 = vld [vmem:[#allocation14 + $0x10] sm:$0xf]
        %v2919 = vld [vmem:[#allocation14 + $0x14] sm:$0xf]
        %v2920 = vld [vmem:[#allocation14 + $0x18] sm:$0xf]
        %v2921 = vld [vmem:[#allocation14 + $0x1c] sm:$0xf]
        %v2922 = vld [vmem:[#allocation14 + $0x20] sm:$0xf]
        %v2923 = vld [vmem:[#allocation14 + $0x24] sm:$0xf]
        %v2924 = vld [vmem:[#allocation14 + $0x28] sm:$0xf]
        %v2925 = vld [vmem:[#allocation14 + $0x2c] sm:$0xf]
        %v2926 = vld [vmem:[#allocation14 + $0x30] sm:$0xf]
        %v2927 = vld [vmem:[#allocation14 + $0x34] sm:$0xf]
        %v2928 = vld [vmem:[#allocation14 + $0x38] sm:$0xf]
        %v2929 = vld [vmem:[#allocation14 + $0x3c] sm:$0xf]
        %v2930 = vld [vmem:[#allocation14 + $0x40] sm:$0xf]
        %v2931 = vld [vmem:[#allocation14 + $0x44] sm:$0xf]
        %v2932 = vld [vmem:[#allocation14 + $0x48] sm:$0xf]
        %v2933 = vld [vmem:[#allocation14 + $0x4c] sm:$0xf]
        %v2934 = vld [vmem:[#allocation14 + $0x50] sm:$0xf]
        %v2935 = vld [vmem:[#allocation14 + $0x54] sm:$0xf]
        %v2936 = vld [vmem:[#allocation14 + $0x58] sm:$0xf]
        %v2937 = vld [vmem:[#allocation14 + $0x5c] sm:$0xf]
        %v2938 = vld [vmem:[#allocation14 + $0x60] sm:$0xf]
        %v2939 = vld [vmem:[#allocation14 + $0x64] sm:$0xf]
        %v2940 = vld [vmem:[#allocation14 + $0x68] sm:$0xf]
        %v2941 = vld [vmem:[#allocation14 + $0x6c] sm:$0xf]
        %v2942 = vld [vmem:[#allocation14 + $0x70] sm:$0xf]
        %v2943 = vld [vmem:[#allocation14 + $0x74] sm:$0xf]
        %v2944 = vld [vmem:[#allocation14 + $0x78] sm:$0xf]
        %v2945 = vld [vmem:[#allocation14 + $0x7c] sm:$0xf]
        %v2946 = vpack.c.bf16 %v2904, %v2902
        %v2947 = vpack.c.bf16 %v2905, %v2903
        %v2948 = vpack.c.bf16 %v2908, %v2906
        %v2949 = vpack.c.bf16 %v2909, %v2907
        %v2950 = vld [vmem:[#allocation16] sm:$0xf]
        %v2951 = vld [vmem:[#allocation16 + $0x4] sm:$0xf]
        %v2952 = vld [vmem:[#allocation16 + $0x8] sm:$0xf]
        %v2953 = vld [vmem:[#allocation16 + $0xc] sm:$0xf]
        %v2954 = vld [vmem:[#allocation16 + $0x10] sm:$0xf]
        %v2955 = vld [vmem:[#allocation16 + $0x14] sm:$0xf]
        %v2956 = vld [vmem:[#allocation16 + $0x18] sm:$0xf]
        %v2957 = vld [vmem:[#allocation16 + $0x1c] sm:$0xf]
        %v2958 = vld [vmem:[#allocation16 + $0x20] sm:$0xf]
        %v2959 = vld [vmem:[#allocation16 + $0x24] sm:$0xf]
        %v2960 = vld [vmem:[#allocation16 + $0x28] sm:$0xf]
        %v2961 = vld [vmem:[#allocation16 + $0x2c] sm:$0xf]
        %v2962 = vld [vmem:[#allocation16 + $0x30] sm:$0xf]
        %v2963 = vld [vmem:[#allocation16 + $0x34] sm:$0xf]
        %v2964 = vld [vmem:[#allocation16 + $0x38] sm:$0xf]
        %v2965 = vld [vmem:[#allocation16 + $0x3c] sm:$0xf]
        %v2966 = vld [vmem:[#allocation16 + $0x40] sm:$0xf]
        %v2967 = vld [vmem:[#allocation16 + $0x44] sm:$0xf]
        %v2968 = vld [vmem:[#allocation16 + $0x48] sm:$0xf]
        %v2969 = vld [vmem:[#allocation16 + $0x4c] sm:$0xf]
        %v2970 = vld [vmem:[#allocation16 + $0x50] sm:$0xf]
        %v2971 = vld [vmem:[#allocation16 + $0x54] sm:$0xf]
        %v2972 = vld [vmem:[#allocation16 + $0x58] sm:$0xf]
        %v2973 = vld [vmem:[#allocation16 + $0x5c] sm:$0xf]
        %v2974 = vld [vmem:[#allocation16 + $0x60] sm:$0xf]
        %v2975 = vld [vmem:[#allocation16 + $0x64] sm:$0xf]
        %v2976 = vld [vmem:[#allocation16 + $0x68] sm:$0xf]
        %v2977 = vld [vmem:[#allocation16 + $0x6c] sm:$0xf]
        %v2978 = vld [vmem:[#allocation16 + $0x70] sm:$0xf]
        %v2979 = vld [vmem:[#allocation16 + $0x74] sm:$0xf]
        %v2980 = vld [vmem:[#allocation16 + $0x78] sm:$0xf]
        %v2981 = vld [vmem:[#allocation16 + $0x7c] sm:$0xf]
        %v3014 = vunpack.c.l.b16 %v2950
        %v3015 = vunpack.c.l.b16 %v2951
        %v3016 = vunpack.c.l.b16 %v2952
        %v3017 = vunpack.c.l.b16 %v2953
        %v3018 = vunpack.c.l.b16 %v2954
        %v3019 = vunpack.c.l.b16 %v2955
        %v3020 = vunpack.c.l.b16 %v2956
        %v3021 = vunpack.c.l.b16 %v2957
        %v3022 = vunpack.c.l.b16 %v2958
        %v3023 = vunpack.c.l.b16 %v2959
        %v3024 = vunpack.c.l.b16 %v2960
        %v3025 = vunpack.c.l.b16 %v2961
        %v3026 = vunpack.c.l.b16 %v2962
        %v3027 = vunpack.c.l.b16 %v2963
        %v3028 = vunpack.c.l.b16 %v2964
        %v3029 = vunpack.c.l.b16 %v2965
        %v3030 = vunpack.c.l.b16 %v2966
        %v3031 = vunpack.c.l.b16 %v2967
        %v3032 = vunpack.c.l.b16 %v2968
        %v3033 = vunpack.c.l.b16 %v2969
        %v3034 = vunpack.c.l.b16 %v2970
        %v3035 = vunpack.c.l.b16 %v2971
        %v3036 = vunpack.c.l.b16 %v2972
        %v3037 = vunpack.c.l.b16 %v2973
        %v3038 = vunpack.c.l.b16 %v2974
        %v3039 = vunpack.c.l.b16 %v2975
        %v3040 = vunpack.c.l.b16 %v2976
        %v3041 = vunpack.c.l.b16 %v2977
        %v3042 = vunpack.c.l.b16 %v2978
        %v3043 = vunpack.c.l.b16 %v2979
        %v3044 = vunpack.c.l.b16 %v2980
        %v3045 = vunpack.c.l.b16 %v2981
        %v3046 = vpack.c.b16 %v3015, %v3014
        %v3047 = vpack.c.b16 %v3017, %v3016
        %v3048 = vpack.c.b16 %v3019, %v3018
        %v3049 = vpack.c.b16 %v3021, %v3020
        %v3050 = vpack.c.b16 %v3023, %v3022
        %v3051 = vpack.c.b16 %v3025, %v3024
        %v3052 = vpack.c.b16 %v3027, %v3026
        %v3053 = vpack.c.b16 %v3029, %v3028
        %v3054 = vpack.c.b16 %v3031, %v3030
        %v3055 = vpack.c.b16 %v3033, %v3032
        %v3056 = vpack.c.b16 %v3035, %v3034
        %v3057 = vpack.c.b16 %v3037, %v3036
        %v3058 = vpack.c.b16 %v3039, %v3038
        %v3059 = vpack.c.b16 %v3041, %v3040
        %v3060 = vpack.c.b16 %v3043, %v3042
        %v3061 = vpack.c.b16 %v3045, %v3044
        %3078 = vmatpush.bf16.msra.mxu0 %v3053
        %3079 = vmatpush.bf16.msra.mxu0 %v3052
        %3080 = vmatpush.bf16.msra.mxu0 %v3051
        %3081 = vmatpush.bf16.msra.mxu0 %v3050
        %3082 = vmatpush.bf16.msra.mxu0 %v3049
        %3083 = vmatpush.bf16.msra.mxu0 %v3048
        %3084 = vmatpush.bf16.msra.mxu0 %v3047
        %3085 = vmatpush.bf16.msra.mxu0 %v3046
        %3086 = vmatmul.bf16.gmra.mxu0 %v2946
        %v3087 = vpop.f32.mrf.mxu0
        %v3088 = vadd.f32 0.0, %v3087
        %v3089 = vpop.f32.mrf.mxu0
        %v3090 = vadd.f32 0.0, %v3089
        %3091 = vmatmul.bf16.gmra.mxu0 %v2948
        %v3092 = vpop.f32.mrf.mxu0
        %v3093 = vadd.f32 0.0, %v3092
        %v3094 = vpop.f32.mrf.mxu0
        %v3095 = vadd.f32 0.0, %v3094
        %3096 = vdwg.mxu0
        %3097 = vmatpush.bf16.msra.mxu0 %v3061
        %3098 = vmatpush.bf16.msra.mxu0 %v3060
        %3099 = vmatpush.bf16.msra.mxu0 %v3059
        %3100 = vmatpush.bf16.msra.mxu0 %v3058
        %3101 = vmatpush.bf16.msra.mxu0 %v3057
        %3102 = vmatpush.bf16.msra.mxu0 %v3056
        %3103 = vmatpush.bf16.msra.mxu0 %v3055
        %3104 = vmatpush.bf16.msra.mxu0 %v3054
        %3105 = vmatmul.bf16.gmra.mxu0 %v2947
        %v3106 = vpop.f32.mrf.mxu0
        %v3107 = vadd.f32 %v3088, %v3106
        %v3108 = vpop.f32.mrf.mxu0
        %v3109 = vadd.f32 %v3090, %v3108
        %3110 = vmatmul.bf16.gmra.mxu0 %v2949
        %v3111 = vpop.f32.mrf.mxu0
        %v3112 = vadd.f32 %v3093, %v3111
        %v3113 = vpop.f32.mrf.mxu0
        %v3114 = vadd.f32 %v3095, %v3113
        %3115 = vdwg.mxu0
        %v3148 = vunpack.c.l.b16 %v2914
        %v3149 = vunpack.c.l.b16 %v2915
        %v3150 = vunpack.c.l.b16 %v2916
        %v3151 = vunpack.c.l.b16 %v2917
        %v3152 = vunpack.c.l.b16 %v2918
        %v3153 = vunpack.c.l.b16 %v2919
        %v3154 = vunpack.c.l.b16 %v2920
        %v3155 = vunpack.c.l.b16 %v2921
        %v3156 = vunpack.c.l.b16 %v2922
        %v3157 = vunpack.c.l.b16 %v2923
        %v3158 = vunpack.c.l.b16 %v2924
        %v3159 = vunpack.c.l.b16 %v2925
        %v3160 = vunpack.c.l.b16 %v2926
        %v3161 = vunpack.c.l.b16 %v2927
        %v3162 = vunpack.c.l.b16 %v2928
        %v3163 = vunpack.c.l.b16 %v2929
        %v3164 = vunpack.c.l.b16 %v2930
        %v3165 = vunpack.c.l.b16 %v2931
        %v3166 = vunpack.c.l.b16 %v2932
        %v3167 = vunpack.c.l.b16 %v2933
        %v3168 = vunpack.c.l.b16 %v2934
        %v3169 = vunpack.c.l.b16 %v2935
        %v3170 = vunpack.c.l.b16 %v2936
        %v3171 = vunpack.c.l.b16 %v2937
        %v3172 = vunpack.c.l.b16 %v2938
        %v3173 = vunpack.c.l.b16 %v2939
        %v3174 = vunpack.c.l.b16 %v2940
        %v3175 = vunpack.c.l.b16 %v2941
        %v3176 = vunpack.c.l.b16 %v2942
        %v3177 = vunpack.c.l.b16 %v2943
        %v3178 = vunpack.c.l.b16 %v2944
        %v3179 = vunpack.c.l.b16 %v2945
        %v3180 = vpack.c.b16 %v3149, %v3148
        %v3181 = vpack.c.b16 %v3151, %v3150
        %v3182 = vpack.c.b16 %v3153, %v3152
        %v3183 = vpack.c.b16 %v3155, %v3154
        %v3184 = vpack.c.b16 %v3157, %v3156
        %v3185 = vpack.c.b16 %v3159, %v3158
        %v3186 = vpack.c.b16 %v3161, %v3160
        %v3187 = vpack.c.b16 %v3163, %v3162
        %v3188 = vpack.c.b16 %v3165, %v3164
        %v3189 = vpack.c.b16 %v3167, %v3166
        %v3190 = vpack.c.b16 %v3169, %v3168
        %v3191 = vpack.c.b16 %v3171, %v3170
        %v3192 = vpack.c.b16 %v3173, %v3172
        %v3193 = vpack.c.b16 %v3175, %v3174
        %v3194 = vpack.c.b16 %v3177, %v3176
        %v3195 = vpack.c.b16 %v3179, %v3178
        %3212 = vmatpush.bf16.msra.mxu0 %v3187
        %3213 = vmatpush.bf16.msra.mxu0 %v3186
        %3214 = vmatpush.bf16.msra.mxu0 %v3185
        %3215 = vmatpush.bf16.msra.mxu0 %v3184
        %3216 = vmatpush.bf16.msra.mxu0 %v3183
        %3217 = vmatpush.bf16.msra.mxu0 %v3182
        %3218 = vmatpush.bf16.msra.mxu0 %v3181
        %3219 = vmatpush.bf16.msra.mxu0 %v3180
        %3220 = vmatmul.bf16.gmra.mxu0 %v2910
        %v3221 = vpop.f32.mrf.mxu0
        %v3222 = vadd.f32 %v3107, %v3221
        %v3223 = vpop.f32.mrf.mxu0
        %v3224 = vadd.f32 %v3109, %v3223
        %3225 = vmatmul.bf16.gmra.mxu0 %v2912
        %v3226 = vpop.f32.mrf.mxu0
        %v3227 = vadd.f32 %v3112, %v3226
        %v3228 = vpop.f32.mrf.mxu0
        %v3229 = vadd.f32 %v3114, %v3228
        %3230 = vdwg.mxu0
        %3231 = vmatpush.bf16.msra.mxu0 %v3195
        %3232 = vmatpush.bf16.msra.mxu0 %v3194
        %3233 = vmatpush.bf16.msra.mxu0 %v3193
        %3234 = vmatpush.bf16.msra.mxu0 %v3192
        %3235 = vmatpush.bf16.msra.mxu0 %v3191
        %3236 = vmatpush.bf16.msra.mxu0 %v3190
        %3237 = vmatpush.bf16.msra.mxu0 %v3189
        %3238 = vmatpush.bf16.msra.mxu0 %v3188
        %3239 = vmatmul.bf16.gmra.mxu0 %v2911
        %v3240 = vpop.f32.mrf.mxu0
        %v3241 = vadd.f32 %v3222, %v3240
        %v3242 = vpop.f32.mrf.mxu0
        %v3243 = vadd.f32 %v3224, %v3242
        %3244 = vmatmul.bf16.gmra.mxu0 %v2913
        %v3245 = vpop.f32.mrf.mxu0
        %v3246 = vadd.f32 %v3227, %v3245
        %v3247 = vpop.f32.mrf.mxu0
        %v3248 = vadd.f32 %v3229, %v3247
        %3249 = vdwg.mxu0
        %v3250 = vld [vmem:[%s11] sm:$0x1]
        %v3252 = vperm.slane %v3250, 0
        %v3254 = vadd.f32 %v3241, %v3252
        %v3255 = vadd.f32 %v3243, %v3252
        %v3256 = vadd.f32 %v3246, %v3252
        %v3257 = vadd.f32 %v3248, %v3252
        %v3258 = vxor.u32 %v3254, 2147483648
        %v3259 = vxor.u32 %v3255, 2147483648
        %v3260 = vxor.u32 %v3256, 2147483648
        %v3261 = vxor.u32 %v3257, 2147483648
        %v3262 = vmul.f32 %v3258, 1.442695
        %v3263 = vpow.pop %v3262
        %v3264 = vmul.f32 %v3259, 1.442695
        %v3265 = vpow.pop %v3264
        %v3266 = vmul.f32 %v3260, 1.442695
        %v3267 = vpow.pop %v3266
        %v3268 = vmul.f32 %v3261, 1.442695
        %v3269 = vpow.pop %v3268
        %v3270 = vadd.f32 %v3263, 1.0
        %v3271 = vadd.f32 %v3265, 1.0
        %v3272 = vadd.f32 %v3267, 1.0
        %v3273 = vadd.f32 %v3269, 1.0
        %v3274 = vrcp.pop %v3270
        %v3275 = vmul.f32 %v3270, %v3274
        %v3276 = vsub.f32 1.0, %v3275
        %v3277 = vmul.f32 %v3274, %v3276
        %v3278 = vadd.f32 %v3274, %v3277
        %vm3279 = vweird.f32 %v3270
        %vm3280 = vweird.f32 %v3274
        %vm3281 = vmor %vm3279, %vm3280
        %v3282 = vsel %vm3281, %v3274, %v3278
        %v3283 = vand.u32 2147483647, %v3270
        %vm3284 = vcmp.eq.f32.partialorder %v3283, 8.507059e+37
        %v3285 = vand.u32 %v3270, 2147483648
        %v3286 = vor.u32 1.1754944e-38, %v3285
        %v3287 = vsel %vm3284, %v3286, %v3282
        %v3288 = vmul.f32 1.0, %v3287
        %v3289 = vrcp.pop %v3271
        %v3290 = vmul.f32 %v3271, %v3289
        %v3291 = vsub.f32 1.0, %v3290
        %v3292 = vmul.f32 %v3289, %v3291
        %v3293 = vadd.f32 %v3289, %v3292
        %vm3294 = vweird.f32 %v3271
        %vm3295 = vweird.f32 %v3289
        %vm3296 = vmor %vm3294, %vm3295
        %v3297 = vsel %vm3296, %v3289, %v3293
        %v3298 = vand.u32 2147483647, %v3271
        %vm3299 = vcmp.eq.f32.partialorder %v3298, 8.507059e+37
        %v3300 = vand.u32 %v3271, 2147483648
        %v3301 = vor.u32 1.1754944e-38, %v3300
        %v3302 = vsel %vm3299, %v3301, %v3297
        %v3303 = vmul.f32 1.0, %v3302
        %v3304 = vrcp.pop %v3272
        %v3305 = vmul.f32 %v3272, %v3304
        %v3306 = vsub.f32 1.0, %v3305
        %v3307 = vmul.f32 %v3304, %v3306
        %v3308 = vadd.f32 %v3304, %v3307
        %vm3309 = vweird.f32 %v3272
        %vm3310 = vweird.f32 %v3304
        %vm3311 = vmor %vm3309, %vm3310
        %v3312 = vsel %vm3311, %v3304, %v3308
        %v3313 = vand.u32 2147483647, %v3272
        %vm3314 = vcmp.eq.f32.partialorder %v3313, 8.507059e+37
        %v3315 = vand.u32 %v3272, 2147483648
        %v3316 = vor.u32 1.1754944e-38, %v3315
        %v3317 = vsel %vm3314, %v3316, %v3312
        %v3318 = vmul.f32 1.0, %v3317
        %v3319 = vrcp.pop %v3273
        %v3320 = vmul.f32 %v3273, %v3319
        %v3321 = vsub.f32 1.0, %v3320
        %v3322 = vmul.f32 %v3319, %v3321
        %v3323 = vadd.f32 %v3319, %v3322
        %vm3324 = vweird.f32 %v3273
        %vm3325 = vweird.f32 %v3319
        %vm3326 = vmor %vm3324, %vm3325
        %v3327 = vsel %vm3326, %v3319, %v3323
        %v3328 = vand.u32 2147483647, %v3273
        %vm3329 = vcmp.eq.f32.partialorder %v3328, 8.507059e+37
        %v3330 = vand.u32 %v3273, 2147483648
        %v3331 = vor.u32 1.1754944e-38, %v3330
        %v3332 = vsel %vm3329, %v3331, %v3327
        %v3333 = vmul.f32 1.0, %v3332
        %3334 = vst [vmem:[%s592] sm:$0xff] %v3288
        %3335 = vst [vmem:[%s592 + $0x8] sm:$0xff] %v3303
        %3336 = vst [vmem:[%s592 + $0x10] sm:$0xff] %v3318
        %3337 = vst [vmem:[%s592 + $0x18] sm:$0xff] %v3333
        %s3338 = sand.u32 %s305, 1
        %s3339 = scalar_lea.sflag [#allocation4], %s3338
        %s3340 = sand.u32 %s305, 1
        %s3341 = smul.addr %s3340, 32
        %s3342 = scalar_lea.vmem [#allocation17], %s3341
        // Predicated region
        $region105: #{tpu_custom_call.1} parent=67 // pred_check
          %p3343 = pneg %p315
        $region106: #{tpu_custom_call.1} parent=67 // pred_check_branch
          %3345 = sbr.rel (%p3343) target = $region108
        $region107: #{tpu_custom_call.1} parent=67 // pred_region
          %s3346 = smul.u32 4, %s35
          %3348 = vsyncadd %s3339, 0
          %s3349 = smul.addr %s3346, 8
          %s3350 = scalar_lea.hbm %s12, %s3349
          %s3351 = sshll.u32 %s3342, 4
          %s3352 = int_to_ptr.vmem [resolvable:$true] %s3351
          %s3353 = sshll.u32 %s3350, 4
          %s3354 = int_to_ptr.hbm [resolvable:$true] %s3353
          %3359 = dma.vmem_to_hbm [thread:$0]  %s3352, 512, %s3354, %s3339, 128, 128, 8
        $region108: #{tpu_custom_call.1} parent=67 // pred_fallthru
          _
      $region68: #{tpu_custom_call.1} parent=5 // pred_fallthru
        _
      %p3360 = scmp.le.s32.totalorder 2, %s30
      // Predicated region
      $region109: #{tpu_custom_call.1} parent=5 // pred_check
        %p3361 = pneg %p3360
      $region110: #{tpu_custom_call.1} parent=5 // pred_check_branch
        %3363 = sbr.rel (%p3361) target = $region112
      $region111: #{tpu_custom_call.1} parent=5 // pred_region
        %s3364 = ssub.s32 %s30, 2
        // Predicated region
        $region113: #{tpu_custom_call.1} parent=111 // pred_check
          %p3365 = pneg %p321
        $region114: #{tpu_custom_call.1} parent=111 // pred_check_branch
          %3367 = sbr.rel (%p3365) target = $region116
        $region115: #{tpu_custom_call.1} parent=111 // pred_region
          %s3368 = sand.u32 %s306, 1
          %s3369 = scalar_lea.sflag [#allocation4], %s3368
          %s3370 = sand.u32 %s306, 1
          %s3371 = smul.addr %s3370, 32
          %s3372 = scalar_lea.vmem [#allocation17], %s3371
          %3374 = dma.done %s3369, 512
        $region116: #{tpu_custom_call.1} parent=111 // pred_fallthru
          _
      $region112: #{tpu_custom_call.1} parent=5 // pred_fallthru
        _
    $region6: #{tpu_custom_call.1} parent=1 // loop_footer
      %s34 = sadd.s32 1, %s30
    $region7: #{tpu_custom_call.1} parent=1 // loop_footer_branch
      %29 = sbr.rel target = $region3
    $region8: #{tpu_custom_call.1} parent=1 // loop_exit
      _
    %3375 = vsyncpa [#allocation3], 1
    %s3376 = scalar_lea.sflag [#allocation3], 1
    %3377 = vsyncpa %s3376, 1
    %3378 = vsyncpa [#allocation6], 1
    %s3379 = scalar_lea.sflag [#allocation6], 1
    %3380 = vsyncpa %s3379, 1
    %3381 = vsyncpa [#allocation9], 1
    %3382 = vsyncpa [#allocation12], 1
    %3383 = vsyncpa [#allocation15], 1
    %3384 = vsyncpa [#allocation4], 1
    %s3385 = scalar_lea.sflag [#allocation4], 1
    %3386 = vsyncpa %s3385, 1

</llo_original>
